<compile_context>
chip_gen: v7x
topology: tpu7x:2x2x1
jax: 0.10.0
libtpu: 0.0.40
codegen_flags: <defaults>
</compile_context>

<pallas_src>
import functools

import jax
import jax.numpy as jnp
from jax import lax
from jax.experimental import pallas as pl
from jax.experimental.pallas import tpu as pltpu

EPS = 1e-5          # nn.GroupNorm default eps
NUM_GROUPS = 32


def _bottleneck_kernel(x_ref, w1_ref, w2_ref, w3_ref,
                       g1_ref, b1_ref, g2_ref, b2_ref, g3_ref, b3_ref,
                       rP_ref, bP_ref, r4_ref, b4_ref,
                       o_ref,
                       pad_ref,
                       *, H, W, Wp, P):
    """One batch element per grid step. All tensors fit in VMEM."""
    Cin = x_ref.shape[-1]
    Cout = 4 * P
    HW = H * W

    x = x_ref[0]                          # (H, W, Cin) f32
    x2d = x.reshape(HW, Cin)              # residual path (Cin == 4*P), f32

    def group_norm(h, g_ref, b_ref, red_ref, bc_ref):
        # h: (HW, C) f32.  red_ref: (C, G) 0/1 channel->group matrix,
        # bc_ref: (G, C) its transpose.  Group statistics via two tiny matmuls:
        # [sum; sum_sq] (2,C) @ (C,G) -> (2,G), then [inv_std; mean] (2,G) @
        # (G,C) -> (2,C).  Stats stay f32; the GN affine is folded into one
        # per-channel scale/shift so normalization is h*a + b (2 VPU ops/elem).
        m, c = h.shape
        inv_cnt = 1.0 / float(m * (c // NUM_GROUPS))
        s1 = jnp.sum(h, axis=0, keepdims=True)                  # (1, C)
        s2 = jnp.sum(h * h, axis=0, keepdims=True)              # (1, C)
        stats = jnp.concatenate([s1, s2], axis=0)               # (2, C)
        grp = jnp.dot(stats, red_ref[...],
                      preferred_element_type=jnp.float32)       # (2, G)
        gmean = grp[0:1] * inv_cnt                              # (1, G)
        gvar = grp[1:2] * inv_cnt - gmean * gmean               # biased var (PyTorch GN)
        ginv = lax.rsqrt(gvar + EPS)                            # (1, G)
        back = jnp.dot(jnp.concatenate([ginv, gmean], axis=0), bc_ref[...],
                       preferred_element_type=jnp.float32)      # (2, C)
        a = back[0:1] * g_ref[...]                              # per-channel scale
        b = b_ref[...] - back[1:2] * a                          # per-channel shift
        return h * a + b

    # ---- conv1: 1x1 (bf16 MXU, f32 accumulate) + GN1 + ReLU ----
    h = jnp.dot(x2d.astype(jnp.bfloat16), w1_ref[...],
                preferred_element_type=jnp.float32)             # (HW, P) f32
    h = jnp.maximum(group_norm(h, g1_ref, b1_ref, rP_ref, bP_ref), 0.0)

    # ---- conv2: 3x3, stride 1, pad 1 ----
    # Flat zero-padded scratch: row r = hp*Wp + wp of the (H+2, Wp) padded
    # image (Wp = W+2 rounded up to a sublane multiple).  Each tap (kh, kw) is
    # then a *contiguous* row window starting at kh*Wp + kw, so there are no
    # 2-D strided slice + reshape copies.  The three kw taps of one kh are
    # folded into a single K=3P matmul; seam/alignment columns are cropped
    # once at the end (their garbage contributions never reach kept outputs
    # because each output row depends only on its own lhs row).
    pad_ref[...] = jnp.zeros(pad_ref.shape, pad_ref.dtype)
    for i in range(H):                                          # interior rows
        pad_ref[pl.ds((i + 1) * Wp + 1, W), :] = h[i * W:(i + 1) * W, :]

    HWp = H * Wp
    acc = None
    for kh in range(3):
        lhs = jnp.concatenate(
            [pad_ref[pl.ds(kh * Wp + kw, HWp), :].astype(jnp.bfloat16)
             for kw in range(3)], axis=1)                       # (H*Wp, 3P) bf16
        part = jnp.dot(lhs, w2_ref[kh], preferred_element_type=jnp.float32)
        acc = part if acc is None else acc + part               # (H*Wp, P) f32
    # crop the seam / alignment columns once
    h = acc.reshape(H, Wp, P)[:, :W, :].reshape(HW, P)
    h = jnp.maximum(group_norm(h, g2_ref, b2_ref, rP_ref, bP_ref), 0.0)

    # ---- conv3: 1x1 + GN3 + residual + ReLU ----
    h = jnp.dot(h.astype(jnp.bfloat16), w3_ref[...],
                preferred_element_type=jnp.float32)             # (HW, 4P) f32
    h = group_norm(h, g3_ref, b3_ref, r4_ref, b4_ref)
    out = jnp.maximum(h + x2d, 0.0)
    o_ref[0] = out.reshape(H, W, Cout)


def group_matrices(C, G=NUM_GROUPS):
    """(C,G) 0/1 channel->group reduce matrix and its (G,C) transpose."""
    cpg = C // G
    gid = jnp.arange(C, dtype=jnp.int32) // cpg
    red = (gid[:, None] == jnp.arange(G, dtype=jnp.int32)[None, :]).astype(jnp.float32)
    return red, red.T


def bottleneck_forward(x_nhwc, w1, w2, w3, g1, b1, g2, b2, g3, b3):
    N, H, W, Cin = x_nhwc.shape
    P = w1.shape[1]
    Cout = 4 * P
    assert Cin == Cout, "downsample=None path requires inplanes == planes*4"
    assert P % NUM_GROUPS == 0 and Cout % NUM_GROUPS == 0

    # padded-row width, rounded up to a sublane multiple; extra rows guard the
    # (bounded) over-read of the last folded tap.
    Wp = ((W + 2 + 7) // 8) * 8
    pad_rows = (H + 2) * Wp + 8

    # conv weights in bf16 (MXU-native); w2 pre-folded to (3, 3P, P) so each
    # kh row is a single K=3P matmul operand.
    w1b = w1.astype(jnp.bfloat16)
    w2b = w2.astype(jnp.bfloat16).reshape(3, 3 * P, P)
    w3b = w3.astype(jnp.bfloat16)

    rP, bP = group_matrices(P)
    r4, b4 = group_matrices(Cout)

    kern = functools.partial(_bottleneck_kernel, H=H, W=W, Wp=Wp, P=P)
    full = lambda shape: pl.BlockSpec(shape, lambda n: (0,) * len(shape))

    return pl.pallas_call(
        kern,
        out_shape=jax.ShapeDtypeStruct((N, H, W, Cout), jnp.float32),
        grid=(N,),
        in_specs=[
            pl.BlockSpec((1, H, W, Cin), lambda n: (n, 0, 0, 0)),   # x
            full((Cin, P)),                                         # w1 (bf16)
            full((3, 3 * P, P)),                                    # w2 folded (bf16)
            full((P, Cout)),                                        # w3 (bf16)
            full((1, P)), full((1, P)),                             # g1, b1
            full((1, P)), full((1, P)),                             # g2, b2
            full((1, Cout)), full((1, Cout)),                       # g3, b3
            full((P, NUM_GROUPS)), full((NUM_GROUPS, P)),           # group reduce / bcast (P)
            full((Cout, NUM_GROUPS)), full((NUM_GROUPS, Cout)),     # group reduce / bcast (4P)
        ],
        out_specs=pl.BlockSpec((1, H, W, Cout), lambda n: (n, 0, 0, 0)),
        scratch_shapes=[pltpu.VMEM((pad_rows, P), jnp.float32)],    # flat padded conv2 input
        compiler_params=pltpu.CompilerParams(
            dimension_semantics=("parallel",),          # batch images are independent
            vmem_limit_bytes=64 * 1024 * 1024),         # explicit scoped-VMEM budget
    )(x_nhwc, w1b, w2b, w3b, g1, b1, g2, b2, g3, b3, rP, bP, r4, b4)


def bottleneck_reference(x_nhwc, w1, w2, w3, g1, b1, g2, b2, g3, b3):
    """Plain-JAX reference matching the PyTorch forward semantics (mirrors the
    kernel's bf16-operand / f32-accumulate matmul numerics)."""
    def gn(h, g, bt, G=NUM_GROUPS):
        N, H, W, C = h.shape
        hr = h.reshape(N, H, W, G, C // G)
        mean = hr.mean(axis=(1, 2, 4), keepdims=True)
        var = ((hr - mean) ** 2).mean(axis=(1, 2, 4), keepdims=True)
        hn = ((hr - mean) / jnp.sqrt(var + EPS)).reshape(N, H, W, C)
        return hn * g + bt

    bf = jnp.bfloat16
    h = jnp.einsum('nhwc,cp->nhwp', x_nhwc.astype(bf), w1.astype(bf),
                   preferred_element_type=jnp.float32)
    h = jax.nn.relu(gn(h, g1, b1))
    h = lax.conv_general_dilated(h.astype(bf), w2.astype(bf), (1, 1), 'SAME',
                                 dimension_numbers=('NHWC', 'HWIO', 'NHWC'),
                                 preferred_element_type=jnp.float32)
    h = jax.nn.relu(gn(h, g2, b2))
    h = jnp.einsum('nhwc,cp->nhwp', h.astype(bf), w3.astype(bf),
                   preferred_element_type=jnp.float32)
    h = gn(h, g3, b3)
    return jax.nn.relu(h + x_nhwc)


if __name__ == "__main__":
    # Small shapes consistent with the module: planes must be a multiple of 32
    # (GroupNorm(32, planes)); inplanes = planes * expansion so the identity
    # residual is valid.
    N, H, W = 2, 8, 8
    planes = 32
    inplanes = planes * 4        # 128

    key = jax.random.PRNGKey(0)
    keys = jax.random.split(key, 10)

    # PyTorch-style NCHW input, then convert to kernel layout (NHWC).
    x_nchw = jax.random.normal(keys[0], (N, inplanes, H, W), jnp.float32)
    x_nhwc = jnp.transpose(x_nchw, (0, 2, 3, 1))

    # Conv weights (PyTorch conv1 weight is (planes, inplanes, 1, 1) -> stored
    # directly in matmul layout (Cin, Cout); conv2 is (3,3,Cin,Cout) HWIO).
    w1 = jax.random.normal(keys[1], (inplanes, planes), jnp.float32) * 0.05
    w2 = jax.random.normal(keys[2], (3, 3, planes, planes), jnp.float32) * 0.05
    w3 = jax.random.normal(keys[3], (planes, planes * 4), jnp.float32) * 0.05

    # GroupNorm affine params.  gn_init gives gamma=1 (0 for bn3) and beta=0;
    # since they are learnable, perturb them slightly so the conv3/bn3 branch
    # is not trivially zero and the numerical check is meaningful.
    g1 = 1.0 + 0.1 * jax.random.normal(keys[4], (1, planes), jnp.float32)
    b1 = 0.05 * jax.random.normal(keys[5], (1, planes), jnp.float32)
    g2 = 1.0 + 0.1 * jax.random.normal(keys[6], (1, planes), jnp.float32)
    b2 = 0.05 * jax.random.normal(keys[7], (1, planes), jnp.float32)
    g3 = 0.1 * jax.random.normal(keys[8], (1, planes * 4), jnp.float32)   # zero_init + small perturbation
    b3 = 0.05 * jax.random.normal(keys[9], (1, planes * 4), jnp.float32)

    out = bottleneck_forward(x_nhwc, w1, w2, w3, g1, b1, g2, b2, g3, b3)
    out = jax.block_until_ready(out)

    ref = bottleneck_reference(x_nhwc, w1, w2, w3, g1, b1, g2, b2, g3, b3)
    assert out.shape == (N, H, W, planes * 4)
    max_err = float(jnp.max(jnp.abs(out - ref)))
    assert jnp.allclose(out, ref, atol=5e-3, rtol=5e-3), max_err

    # back to NCHW (PyTorch layout) just to confirm the shape round-trip
    _ = jnp.transpose(out, (0, 3, 1, 2))

    print("KERNEL_OK")
</pallas_src>

<mosaic_0001>
module attributes {stable_mosaic.version = 11 : i64} {
  func.func @_bottleneck_kernel(%arg0: i32, %arg1: memref<1x8x8x128xf32, #tpu.memory_space<vmem>>, %arg2: memref<128x32xbf16, #tpu.memory_space<vmem>>, %arg3: memref<3x96x32xbf16, #tpu.memory_space<vmem>>, %arg4: memref<32x128xbf16, #tpu.memory_space<vmem>>, %arg5: memref<1x32xf32, #tpu.memory_space<vmem>>, %arg6: memref<1x32xf32, #tpu.memory_space<vmem>>, %arg7: memref<1x32xf32, #tpu.memory_space<vmem>>, %arg8: memref<1x32xf32, #tpu.memory_space<vmem>>, %arg9: memref<1x128xf32, #tpu.memory_space<vmem>>, %arg10: memref<1x128xf32, #tpu.memory_space<vmem>>, %arg11: memref<32x32xf32, #tpu.memory_space<vmem>>, %arg12: memref<32x32xf32, #tpu.memory_space<vmem>>, %arg13: memref<128x32xf32, #tpu.memory_space<vmem>>, %arg14: memref<32x128xf32, #tpu.memory_space<vmem>>, %arg15: memref<1x8x8x128xf32, #tpu.memory_space<vmem>>, %arg16: memref<168x32xf32, #tpu.memory_space<vmem>>) attributes {dimension_semantics = [#tpu.dimension_semantics<parallel>], iteration_bounds = array<i64: 2>, scalar_prefetch = 0 : i64, scratch_operands = 1 : i64, tpu.core_type = #tpu.core_type<tc>, window_params = [{transform_indices = @transform_0, window_bounds = array<i64: 1, 8, 8, 128>}, {pipeline_mode = #tpu.pipeline_mode<synchronous>, transform_indices = @transform_1, window_bounds = array<i64: 128, 32>}, {pipeline_mode = #tpu.pipeline_mode<synchronous>, transform_indices = @transform_2, window_bounds = array<i64: 3, 96, 32>}, {pipeline_mode = #tpu.pipeline_mode<synchronous>, transform_indices = @transform_3, window_bounds = array<i64: 32, 128>}, {pipeline_mode = #tpu.pipeline_mode<synchronous>, transform_indices = @transform_4, window_bounds = array<i64: 1, 32>}, {pipeline_mode = #tpu.pipeline_mode<synchronous>, transform_indices = @transform_5, window_bounds = array<i64: 1, 32>}, {pipeline_mode = #tpu.pipeline_mode<synchronous>, transform_indices = @transform_6, window_bounds = array<i64: 1, 32>}, {pipeline_mode = #tpu.pipeline_mode<synchronous>, transform_indices = @transform_7, window_bounds = array<i64: 1, 32>}, {pipeline_mode = #tpu.pipeline_mode<synchronous>, transform_indices = @transform_8, window_bounds = array<i64: 1, 128>}, {pipeline_mode = #tpu.pipeline_mode<synchronous>, transform_indices = @transform_9, window_bounds = array<i64: 1, 128>}, {pipeline_mode = #tpu.pipeline_mode<synchronous>, transform_indices = @transform_10, window_bounds = array<i64: 32, 32>}, {pipeline_mode = #tpu.pipeline_mode<synchronous>, transform_indices = @transform_11, window_bounds = array<i64: 32, 32>}, {pipeline_mode = #tpu.pipeline_mode<synchronous>, transform_indices = @transform_12, window_bounds = array<i64: 128, 32>}, {pipeline_mode = #tpu.pipeline_mode<synchronous>, transform_indices = @transform_13, window_bounds = array<i64: 32, 128>}, {transform_indices = @transform_14, window_bounds = array<i64: 1, 8, 8, 128>}]} {
    %c0 = arith.constant 0 : index
    %c0_0 = arith.constant 0 : index
    %c0_1 = arith.constant 0 : index
    %c0_2 = arith.constant 0 : index
    %0 = vector.load %arg1[%c0, %c0_0, %c0_1, %c0_2] : memref<1x8x8x128xf32, #tpu.memory_space<vmem>>, vector<1x8x8x128xf32>
    %1 = vector.shape_cast %0 : vector<1x8x8x128xf32> to vector<8x8x128xf32>
    %2 = vector.shape_cast %1 : vector<8x8x128xf32> to vector<64x128xf32>
    %3 = arith.truncf %2 : vector<64x128xf32> to vector<64x128xbf16>
    %c0_3 = arith.constant 0 : index
    %c0_4 = arith.constant 0 : index
    %4 = vector.load %arg2[%c0_3, %c0_4] : memref<128x32xbf16, #tpu.memory_space<vmem>>, vector<128x32xbf16>
    %cst = arith.constant dense<0.000000e+00> : vector<64x32xf32>
    %5 = tpu.matmul %3, %4, %cst {dimension_numbers = #tpu.dot_dimension_numbers<[1], [0], [0], [1], [0, 0, 1, 1], [], []>} : vector<64x128xbf16>, vector<128x32xbf16>, vector<64x32xf32> -> vector<64x32xf32>
    %cst_5 = arith.constant dense<0.000000e+00> : vector<32xf32>
    %6 = vector.multi_reduction <add>, %5, %cst_5 [0] : vector<64x32xf32> to vector<32xf32>
    %7 = vector.shape_cast %6 : vector<32xf32> to vector<1x32xf32>
    %8 = arith.mulf %5, %5 : vector<64x32xf32>
    %cst_6 = arith.constant dense<0.000000e+00> : vector<32xf32>
    %9 = vector.multi_reduction <add>, %8, %cst_6 [0] : vector<64x32xf32> to vector<32xf32>
    %10 = vector.shape_cast %9 : vector<32xf32> to vector<1x32xf32>
    %11 = tpu.concatenate %7, %10 in 0 : vector<1x32xf32>, vector<1x32xf32> -> vector<2x32xf32>
    %c0_7 = arith.constant 0 : index
    %c0_8 = arith.constant 0 : index
    %12 = vector.load %arg11[%c0_7, %c0_8] : memref<32x32xf32, #tpu.memory_space<vmem>>, vector<32x32xf32>
    %cst_9 = arith.constant dense<0.000000e+00> : vector<2x32xf32>
    %13 = tpu.matmul %11, %12, %cst_9 {dimension_numbers = #tpu.dot_dimension_numbers<[1], [0], [0], [1], [0, 0, 1, 1], [], []>} : vector<2x32xf32>, vector<32x32xf32>, vector<2x32xf32> -> vector<2x32xf32>
    %14 = vector.extract_strided_slice %13 {offsets = [0, 0], sizes = [1, 32], strides = [1, 1]} : vector<2x32xf32> to vector<1x32xf32>
    %cst_10 = arith.constant 1.562500e-02 : f32
    %15 = vector.broadcast %cst_10 : f32 to vector<1x32xf32>
    %16 = arith.mulf %14, %15 : vector<1x32xf32>
    %17 = vector.extract_strided_slice %13 {offsets = [1, 0], sizes = [1, 32], strides = [1, 1]} : vector<2x32xf32> to vector<1x32xf32>
    %cst_11 = arith.constant 1.562500e-02 : f32
    %18 = vector.broadcast %cst_11 : f32 to vector<1x32xf32>
    %19 = arith.mulf %17, %18 : vector<1x32xf32>
    %20 = arith.mulf %16, %16 : vector<1x32xf32>
    %21 = arith.subf %19, %20 : vector<1x32xf32>
    %cst_12 = arith.constant 9.99999974E-6 : f32
    %22 = vector.broadcast %cst_12 : f32 to vector<1x32xf32>
    %23 = arith.addf %21, %22 : vector<1x32xf32>
    %24 = math.rsqrt %23 : vector<1x32xf32>
    %25 = tpu.concatenate %24, %16 in 0 : vector<1x32xf32>, vector<1x32xf32> -> vector<2x32xf32>
    %c0_13 = arith.constant 0 : index
    %c0_14 = arith.constant 0 : index
    %26 = vector.load %arg12[%c0_13, %c0_14] : memref<32x32xf32, #tpu.memory_space<vmem>>, vector<32x32xf32>
    %cst_15 = arith.constant dense<0.000000e+00> : vector<2x32xf32>
    %27 = tpu.matmul %25, %26, %cst_15 {dimension_numbers = #tpu.dot_dimension_numbers<[1], [0], [0], [1], [0, 0, 1, 1], [], []>} : vector<2x32xf32>, vector<32x32xf32>, vector<2x32xf32> -> vector<2x32xf32>
    %28 = vector.extract_strided_slice %27 {offsets = [0, 0], sizes = [1, 32], strides = [1, 1]} : vector<2x32xf32> to vector<1x32xf32>
    %c0_16 = arith.constant 0 : index
    %c0_17 = arith.constant 0 : index
    %29 = vector.load %arg5[%c0_16, %c0_17] : memref<1x32xf32, #tpu.memory_space<vmem>>, vector<1x32xf32>
    %30 = arith.mulf %28, %29 : vector<1x32xf32>
    %c0_18 = arith.constant 0 : index
    %c0_19 = arith.constant 0 : index
    %31 = vector.load %arg6[%c0_18, %c0_19] : memref<1x32xf32, #tpu.memory_space<vmem>>, vector<1x32xf32>
    %32 = vector.extract_strided_slice %27 {offsets = [1, 0], sizes = [1, 32], strides = [1, 1]} : vector<2x32xf32> to vector<1x32xf32>
    %33 = arith.mulf %32, %30 : vector<1x32xf32>
    %34 = arith.subf %31, %33 : vector<1x32xf32>
    %35 = vector.broadcast %30 : vector<1x32xf32> to vector<64x32xf32>
    %36 = arith.mulf %5, %35 : vector<64x32xf32>
    %37 = vector.broadcast %34 : vector<1x32xf32> to vector<64x32xf32>
    %38 = arith.addf %36, %37 : vector<64x32xf32>
    %cst_20 = arith.constant 0.000000e+00 : f32
    %39 = vector.broadcast %cst_20 : f32 to vector<64x32xf32>
    %40 = arith.maximumf %38, %39 : vector<64x32xf32>
    %cst_21 = arith.constant 0.000000e+00 : f32
    %41 = vector.broadcast %cst_21 : f32 to vector<168x32xf32>
    %c0_22 = arith.constant 0 : index
    %c0_23 = arith.constant 0 : index
    %42 = vector.load %arg16[%c0_22, %c0_23] : memref<168x32xf32, #tpu.memory_space<vmem>>, vector<168x32xf32>
    tpu.vector_store %arg16[%c0_22, %c0_23], %41 {strides = array<i32>} : memref<168x32xf32, #tpu.memory_space<vmem>>, vector<168x32xf32>,
    %43 = vector.extract_strided_slice %40 {offsets = [0, 0], sizes = [8, 32], strides = [1, 1]} : vector<64x32xf32> to vector<8x32xf32>
    %c17 = arith.constant 17 : index
    %c0_24 = arith.constant 0 : index
    %44 = vector.load %arg16[%c17, %c0_24] : memref<168x32xf32, #tpu.memory_space<vmem>>, vector<8x32xf32>
    tpu.vector_store %arg16[%c17, %c0_24], %43 {strides = array<i32>} : memref<168x32xf32, #tpu.memory_space<vmem>>, vector<8x32xf32>,
    %45 = vector.extract_strided_slice %40 {offsets = [8, 0], sizes = [8, 32], strides = [1, 1]} : vector<64x32xf32> to vector<8x32xf32>
    %c33 = arith.constant 33 : index
    %c0_25 = arith.constant 0 : index
    %46 = vector.load %arg16[%c33, %c0_25] : memref<168x32xf32, #tpu.memory_space<vmem>>, vector<8x32xf32>
    tpu.vector_store %arg16[%c33, %c0_25], %45 {strides = array<i32>} : memref<168x32xf32, #tpu.memory_space<vmem>>, vector<8x32xf32>,
    %47 = vector.extract_strided_slice %40 {offsets = [16, 0], sizes = [8, 32], strides = [1, 1]} : vector<64x32xf32> to vector<8x32xf32>
    %c49 = arith.constant 49 : index
    %c0_26 = arith.constant 0 : index
    %48 = vector.load %arg16[%c49, %c0_26] : memref<168x32xf32, #tpu.memory_space<vmem>>, vector<8x32xf32>
    tpu.vector_store %arg16[%c49, %c0_26], %47 {strides = array<i32>} : memref<168x32xf32, #tpu.memory_space<vmem>>, vector<8x32xf32>,
    %49 = vector.extract_strided_slice %40 {offsets = [24, 0], sizes = [8, 32], strides = [1, 1]} : vector<64x32xf32> to vector<8x32xf32>
    %c65 = arith.constant 65 : index
    %c0_27 = arith.constant 0 : index
    %50 = vector.load %arg16[%c65, %c0_27] : memref<168x32xf32, #tpu.memory_space<vmem>>, vector<8x32xf32>
    tpu.vector_store %arg16[%c65, %c0_27], %49 {strides = array<i32>} : memref<168x32xf32, #tpu.memory_space<vmem>>, vector<8x32xf32>,
    %51 = vector.extract_strided_slice %40 {offsets = [32, 0], sizes = [8, 32], strides = [1, 1]} : vector<64x32xf32> to vector<8x32xf32>
    %c81 = arith.constant 81 : index
    %c0_28 = arith.constant 0 : index
    %52 = vector.load %arg16[%c81, %c0_28] : memref<168x32xf32, #tpu.memory_space<vmem>>, vector<8x32xf32>
    tpu.vector_store %arg16[%c81, %c0_28], %51 {strides = array<i32>} : memref<168x32xf32, #tpu.memory_space<vmem>>, vector<8x32xf32>,
    %53 = vector.extract_strided_slice %40 {offsets = [40, 0], sizes = [8, 32], strides = [1, 1]} : vector<64x32xf32> to vector<8x32xf32>
    %c97 = arith.constant 97 : index
    %c0_29 = arith.constant 0 : index
    %54 = vector.load %arg16[%c97, %c0_29] : memref<168x32xf32, #tpu.memory_space<vmem>>, vector<8x32xf32>
    tpu.vector_store %arg16[%c97, %c0_29], %53 {strides = array<i32>} : memref<168x32xf32, #tpu.memory_space<vmem>>, vector<8x32xf32>,
    %55 = vector.extract_strided_slice %40 {offsets = [48, 0], sizes = [8, 32], strides = [1, 1]} : vector<64x32xf32> to vector<8x32xf32>
    %c113 = arith.constant 113 : index
    %c0_30 = arith.constant 0 : index
    %56 = vector.load %arg16[%c113, %c0_30] : memref<168x32xf32, #tpu.memory_space<vmem>>, vector<8x32xf32>
    tpu.vector_store %arg16[%c113, %c0_30], %55 {strides = array<i32>} : memref<168x32xf32, #tpu.memory_space<vmem>>, vector<8x32xf32>,
    %57 = vector.extract_strided_slice %40 {offsets = [56, 0], sizes = [8, 32], strides = [1, 1]} : vector<64x32xf32> to vector<8x32xf32>
    %c129 = arith.constant 129 : index
    %c0_31 = arith.constant 0 : index
    %58 = vector.load %arg16[%c129, %c0_31] : memref<168x32xf32, #tpu.memory_space<vmem>>, vector<8x32xf32>
    tpu.vector_store %arg16[%c129, %c0_31], %57 {strides = array<i32>} : memref<168x32xf32, #tpu.memory_space<vmem>>, vector<8x32xf32>,
    %c0_32 = arith.constant 0 : index
    %c0_33 = arith.constant 0 : index
    %59 = vector.load %arg16[%c0_32, %c0_33] : memref<168x32xf32, #tpu.memory_space<vmem>>, vector<128x32xf32>
    %60 = arith.truncf %59 : vector<128x32xf32> to vector<128x32xbf16>
    %c1 = arith.constant 1 : index
    %c0_34 = arith.constant 0 : index
    %61 = vector.load %arg16[%c1, %c0_34] : memref<168x32xf32, #tpu.memory_space<vmem>>, vector<128x32xf32>
    %62 = arith.truncf %61 : vector<128x32xf32> to vector<128x32xbf16>
    %c2 = arith.constant 2 : index
    %c0_35 = arith.constant 0 : index
    %63 = vector.load %arg16[%c2, %c0_35] : memref<168x32xf32, #tpu.memory_space<vmem>>, vector<128x32xf32>
    %64 = arith.truncf %63 : vector<128x32xf32> to vector<128x32xbf16>
    %65 = tpu.concatenate %60, %62, %64 in 1 : vector<128x32xbf16>, vector<128x32xbf16>, vector<128x32xbf16> -> vector<128x96xbf16>
    %c0_36 = arith.constant 0 : index
    %c0_37 = arith.constant 0 : index
    %c0_38 = arith.constant 0 : index
    %66 = vector.load %arg3[%c0_36, %c0_37, %c0_38] : memref<3x96x32xbf16, #tpu.memory_space<vmem>>, vector<1x96x32xbf16>
    %67 = vector.shape_cast %66 : vector<1x96x32xbf16> to vector<96x32xbf16>
    %cst_39 = arith.constant dense<0.000000e+00> : vector<128x32xf32>
    %68 = tpu.matmul %65, %67, %cst_39 {dimension_numbers = #tpu.dot_dimension_numbers<[1], [0], [0], [1], [0, 0, 1, 1], [], []>} : vector<128x96xbf16>, vector<96x32xbf16>, vector<128x32xf32> -> vector<128x32xf32>
    %c16 = arith.constant 16 : index
    %c0_40 = arith.constant 0 : index
    %69 = vector.load %arg16[%c16, %c0_40] : memref<168x32xf32, #tpu.memory_space<vmem>>, vector<128x32xf32>
    %70 = arith.truncf %69 : vector<128x32xf32> to vector<128x32xbf16>
    %c17_41 = arith.constant 17 : index
    %c0_42 = arith.constant 0 : index
    %71 = vector.load %arg16[%c17_41, %c0_42] : memref<168x32xf32, #tpu.memory_space<vmem>>, vector<128x32xf32>
    %72 = arith.truncf %71 : vector<128x32xf32> to vector<128x32xbf16>
    %c18 = arith.constant 18 : index
    %c0_43 = arith.constant 0 : index
    %73 = vector.load %arg16[%c18, %c0_43] : memref<168x32xf32, #tpu.memory_space<vmem>>, vector<128x32xf32>
    %74 = arith.truncf %73 : vector<128x32xf32> to vector<128x32xbf16>
    %75 = tpu.concatenate %70, %72, %74 in 1 : vector<128x32xbf16>, vector<128x32xbf16>, vector<128x32xbf16> -> vector<128x96xbf16>
    %c1_44 = arith.constant 1 : index
    %c0_45 = arith.constant 0 : index
    %c0_46 = arith.constant 0 : index
    %76 = vector.load %arg3[%c1_44, %c0_45, %c0_46] : memref<3x96x32xbf16, #tpu.memory_space<vmem>>, vector<1x96x32xbf16>
    %77 = vector.shape_cast %76 : vector<1x96x32xbf16> to vector<96x32xbf16>
    %cst_47 = arith.constant dense<0.000000e+00> : vector<128x32xf32>
    %78 = tpu.matmul %75, %77, %cst_47 {dimension_numbers = #tpu.dot_dimension_numbers<[1], [0], [0], [1], [0, 0, 1, 1], [], []>} : vector<128x96xbf16>, vector<96x32xbf16>, vector<128x32xf32> -> vector<128x32xf32>
    %79 = arith.addf %68, %78 : vector<128x32xf32>
    %c32 = arith.constant 32 : index
    %c0_48 = arith.constant 0 : index
    %80 = vector.load %arg16[%c32, %c0_48] : memref<168x32xf32, #tpu.memory_space<vmem>>, vector<128x32xf32>
    %81 = arith.truncf %80 : vector<128x32xf32> to vector<128x32xbf16>
    %c33_49 = arith.constant 33 : index
    %c0_50 = arith.constant 0 : index
    %82 = vector.load %arg16[%c33_49, %c0_50] : memref<168x32xf32, #tpu.memory_space<vmem>>, vector<128x32xf32>
    %83 = arith.truncf %82 : vector<128x32xf32> to vector<128x32xbf16>
    %c34 = arith.constant 34 : index
    %c0_51 = arith.constant 0 : index
    %84 = vector.load %arg16[%c34, %c0_51] : memref<168x32xf32, #tpu.memory_space<vmem>>, vector<128x32xf32>
    %85 = arith.truncf %84 : vector<128x32xf32> to vector<128x32xbf16>
    %86 = tpu.concatenate %81, %83, %85 in 1 : vector<128x32xbf16>, vector<128x32xbf16>, vector<128x32xbf16> -> vector<128x96xbf16>
    %c2_52 = arith.constant 2 : index
    %c0_53 = arith.constant 0 : index
    %c0_54 = arith.constant 0 : index
    %87 = vector.load %arg3[%c2_52, %c0_53, %c0_54] : memref<3x96x32xbf16, #tpu.memory_space<vmem>>, vector<1x96x32xbf16>
    %88 = vector.shape_cast %87 : vector<1x96x32xbf16> to vector<96x32xbf16>
    %cst_55 = arith.constant dense<0.000000e+00> : vector<128x32xf32>
    %89 = tpu.matmul %86, %88, %cst_55 {dimension_numbers = #tpu.dot_dimension_numbers<[1], [0], [0], [1], [0, 0, 1, 1], [], []>} : vector<128x96xbf16>, vector<96x32xbf16>, vector<128x32xf32> -> vector<128x32xf32>
    %90 = arith.addf %79, %89 : vector<128x32xf32>
    %91 = vector.shape_cast %90 : vector<128x32xf32> to vector<8x16x32xf32>
    %92 = vector.extract_strided_slice %91 {offsets = [0, 0, 0], sizes = [8, 8, 32], strides = [1, 1, 1]} : vector<8x16x32xf32> to vector<8x8x32xf32>
    %93 = vector.shape_cast %92 : vector<8x8x32xf32> to vector<64x32xf32>
    %cst_56 = arith.constant dense<0.000000e+00> : vector<32xf32>
    %94 = vector.multi_reduction <add>, %93, %cst_56 [0] : vector<64x32xf32> to vector<32xf32>
    %95 = vector.shape_cast %94 : vector<32xf32> to vector<1x32xf32>
    %96 = arith.mulf %93, %93 : vector<64x32xf32>
    %cst_57 = arith.constant dense<0.000000e+00> : vector<32xf32>
    %97 = vector.multi_reduction <add>, %96, %cst_57 [0] : vector<64x32xf32> to vector<32xf32>
    %98 = vector.shape_cast %97 : vector<32xf32> to vector<1x32xf32>
    %99 = tpu.concatenate %95, %98 in 0 : vector<1x32xf32>, vector<1x32xf32> -> vector<2x32xf32>
    %c0_58 = arith.constant 0 : index
    %c0_59 = arith.constant 0 : index
    %100 = vector.load %arg11[%c0_58, %c0_59] : memref<32x32xf32, #tpu.memory_space<vmem>>, vector<32x32xf32>
    %cst_60 = arith.constant dense<0.000000e+00> : vector<2x32xf32>
    %101 = tpu.matmul %99, %100, %cst_60 {dimension_numbers = #tpu.dot_dimension_numbers<[1], [0], [0], [1], [0, 0, 1, 1], [], []>} : vector<2x32xf32>, vector<32x32xf32>, vector<2x32xf32> -> vector<2x32xf32>
    %102 = vector.extract_strided_slice %101 {offsets = [0, 0], sizes = [1, 32], strides = [1, 1]} : vector<2x32xf32> to vector<1x32xf32>
    %cst_61 = arith.constant 1.562500e-02 : f32
    %103 = vector.broadcast %cst_61 : f32 to vector<1x32xf32>
    %104 = arith.mulf %102, %103 : vector<1x32xf32>
    %105 = vector.extract_strided_slice %101 {offsets = [1, 0], sizes = [1, 32], strides = [1, 1]} : vector<2x32xf32> to vector<1x32xf32>
    %cst_62 = arith.constant 1.562500e-02 : f32
    %106 = vector.broadcast %cst_62 : f32 to vector<1x32xf32>
    %107 = arith.mulf %105, %106 : vector<1x32xf32>
    %108 = arith.mulf %104, %104 : vector<1x32xf32>
    %109 = arith.subf %107, %108 : vector<1x32xf32>
    %cst_63 = arith.constant 9.99999974E-6 : f32
    %110 = vector.broadcast %cst_63 : f32 to vector<1x32xf32>
    %111 = arith.addf %109, %110 : vector<1x32xf32>
    %112 = math.rsqrt %111 : vector<1x32xf32>
    %113 = tpu.concatenate %112, %104 in 0 : vector<1x32xf32>, vector<1x32xf32> -> vector<2x32xf32>
    %c0_64 = arith.constant 0 : index
    %c0_65 = arith.constant 0 : index
    %114 = vector.load %arg12[%c0_64, %c0_65] : memref<32x32xf32, #tpu.memory_space<vmem>>, vector<32x32xf32>
    %cst_66 = arith.constant dense<0.000000e+00> : vector<2x32xf32>
    %115 = tpu.matmul %113, %114, %cst_66 {dimension_numbers = #tpu.dot_dimension_numbers<[1], [0], [0], [1], [0, 0, 1, 1], [], []>} : vector<2x32xf32>, vector<32x32xf32>, vector<2x32xf32> -> vector<2x32xf32>
    %116 = vector.extract_strided_slice %115 {offsets = [0, 0], sizes = [1, 32], strides = [1, 1]} : vector<2x32xf32> to vector<1x32xf32>
    %c0_67 = arith.constant 0 : index
    %c0_68 = arith.constant 0 : index
    %117 = vector.load %arg7[%c0_67, %c0_68] : memref<1x32xf32, #tpu.memory_space<vmem>>, vector<1x32xf32>
    %118 = arith.mulf %116, %117 : vector<1x32xf32>
    %c0_69 = arith.constant 0 : index
    %c0_70 = arith.constant 0 : index
    %119 = vector.load %arg8[%c0_69, %c0_70] : memref<1x32xf32, #tpu.memory_space<vmem>>, vector<1x32xf32>
    %120 = vector.extract_strided_slice %115 {offsets = [1, 0], sizes = [1, 32], strides = [1, 1]} : vector<2x32xf32> to vector<1x32xf32>
    %121 = arith.mulf %120, %118 : vector<1x32xf32>
    %122 = arith.subf %119, %121 : vector<1x32xf32>
    %123 = vector.broadcast %118 : vector<1x32xf32> to vector<64x32xf32>
    %124 = arith.mulf %93, %123 : vector<64x32xf32>
    %125 = vector.broadcast %122 : vector<1x32xf32> to vector<64x32xf32>
    %126 = arith.addf %124, %125 : vector<64x32xf32>
    %cst_71 = arith.constant 0.000000e+00 : f32
    %127 = vector.broadcast %cst_71 : f32 to vector<64x32xf32>
    %128 = arith.maximumf %126, %127 : vector<64x32xf32>
    %129 = arith.truncf %128 : vector<64x32xf32> to vector<64x32xbf16>
    %c0_72 = arith.constant 0 : index
    %c0_73 = arith.constant 0 : index
    %130 = vector.load %arg4[%c0_72, %c0_73] : memref<32x128xbf16, #tpu.memory_space<vmem>>, vector<32x128xbf16>
    %cst_74 = arith.constant dense<0.000000e+00> : vector<64x128xf32>
    %131 = tpu.matmul %129, %130, %cst_74 {dimension_numbers = #tpu.dot_dimension_numbers<[1], [0], [0], [1], [0, 0, 1, 1], [], []>} : vector<64x32xbf16>, vector<32x128xbf16>, vector<64x128xf32> -> vector<64x128xf32>
    %cst_75 = arith.constant dense<0.000000e+00> : vector<128xf32>
    %132 = vector.multi_reduction <add>, %131, %cst_75 [0] : vector<64x128xf32> to vector<128xf32>
    %133 = vector.shape_cast %132 : vector<128xf32> to vector<1x128xf32>
    %134 = arith.mulf %131, %131 : vector<64x128xf32>
    %cst_76 = arith.constant dense<0.000000e+00> : vector<128xf32>
    %135 = vector.multi_reduction <add>, %134, %cst_76 [0] : vector<64x128xf32> to vector<128xf32>
    %136 = vector.shape_cast %135 : vector<128xf32> to vector<1x128xf32>
    %137 = tpu.concatenate %133, %136 in 0 : vector<1x128xf32>, vector<1x128xf32> -> vector<2x128xf32>
    %c0_77 = arith.constant 0 : index
    %c0_78 = arith.constant 0 : index
    %138 = vector.load %arg13[%c0_77, %c0_78] : memref<128x32xf32, #tpu.memory_space<vmem>>, vector<128x32xf32>
    %cst_79 = arith.constant dense<0.000000e+00> : vector<2x32xf32>
    %139 = tpu.matmul %137, %138, %cst_79 {dimension_numbers = #tpu.dot_dimension_numbers<[1], [0], [0], [1], [0, 0, 1, 1], [], []>} : vector<2x128xf32>, vector<128x32xf32>, vector<2x32xf32> -> vector<2x32xf32>
    %140 = vector.extract_strided_slice %139 {offsets = [0, 0], sizes = [1, 32], strides = [1, 1]} : vector<2x32xf32> to vector<1x32xf32>
    %cst_80 = arith.constant 3.906250e-03 : f32
    %141 = vector.broadcast %cst_80 : f32 to vector<1x32xf32>
    %142 = arith.mulf %140, %141 : vector<1x32xf32>
    %143 = vector.extract_strided_slice %139 {offsets = [1, 0], sizes = [1, 32], strides = [1, 1]} : vector<2x32xf32> to vector<1x32xf32>
    %cst_81 = arith.constant 3.906250e-03 : f32
    %144 = vector.broadcast %cst_81 : f32 to vector<1x32xf32>
    %145 = arith.mulf %143, %144 : vector<1x32xf32>
    %146 = arith.mulf %142, %142 : vector<1x32xf32>
    %147 = arith.subf %145, %146 : vector<1x32xf32>
    %cst_82 = arith.constant 9.99999974E-6 : f32
    %148 = vector.broadcast %cst_82 : f32 to vector<1x32xf32>
    %149 = arith.addf %147, %148 : vector<1x32xf32>
    %150 = math.rsqrt %149 : vector<1x32xf32>
    %151 = tpu.concatenate %150, %142 in 0 : vector<1x32xf32>, vector<1x32xf32> -> vector<2x32xf32>
    %c0_83 = arith.constant 0 : index
    %c0_84 = arith.constant 0 : index
    %152 = vector.load %arg14[%c0_83, %c0_84] : memref<32x128xf32, #tpu.memory_space<vmem>>, vector<32x128xf32>
    %cst_85 = arith.constant dense<0.000000e+00> : vector<2x128xf32>
    %153 = tpu.matmul %151, %152, %cst_85 {dimension_numbers = #tpu.dot_dimension_numbers<[1], [0], [0], [1], [0, 0, 1, 1], [], []>} : vector<2x32xf32>, vector<32x128xf32>, vector<2x128xf32> -> vector<2x128xf32>
    %154 = vector.extract_strided_slice %153 {offsets = [0, 0], sizes = [1, 128], strides = [1, 1]} : vector<2x128xf32> to vector<1x128xf32>
    %c0_86 = arith.constant 0 : index
    %c0_87 = arith.constant 0 : index
    %155 = vector.load %arg9[%c0_86, %c0_87] : memref<1x128xf32, #tpu.memory_space<vmem>>, vector<1x128xf32>
    %156 = arith.mulf %154, %155 : vector<1x128xf32>
    %c0_88 = arith.constant 0 : index
    %c0_89 = arith.constant 0 : index
    %157 = vector.load %arg10[%c0_88, %c0_89] : memref<1x128xf32, #tpu.memory_space<vmem>>, vector<1x128xf32>
    %158 = vector.extract_strided_slice %153 {offsets = [1, 0], sizes = [1, 128], strides = [1, 1]} : vector<2x128xf32> to vector<1x128xf32>
    %159 = arith.mulf %158, %156 : vector<1x128xf32>
    %160 = arith.subf %157, %159 : vector<1x128xf32>
    %161 = vector.broadcast %156 : vector<1x128xf32> to vector<64x128xf32>
    %162 = arith.mulf %131, %161 : vector<64x128xf32>
    %163 = vector.broadcast %160 : vector<1x128xf32> to vector<64x128xf32>
    %164 = arith.addf %162, %163 : vector<64x128xf32>
    %165 = arith.addf %164, %2 : vector<64x128xf32>
    %cst_90 = arith.constant 0.000000e+00 : f32
    %166 = vector.broadcast %cst_90 : f32 to vector<64x128xf32>
    %167 = arith.maximumf %165, %166 : vector<64x128xf32>
    %168 = vector.shape_cast %167 : vector<64x128xf32> to vector<8x8x128xf32>
    %c0_91 = arith.constant 0 : index
    %c0_92 = arith.constant 0 : index
    %c0_93 = arith.constant 0 : index
    %c0_94 = arith.constant 0 : index
    %169 = vector.load %arg15[%c0_91, %c0_92, %c0_93, %c0_94] : memref<1x8x8x128xf32, #tpu.memory_space<vmem>>, vector<1x8x8x128xf32>
    %170 = vector.shape_cast %169 : vector<1x8x8x128xf32> to vector<8x8x128xf32>
    %171 = vector.shape_cast %168 : vector<8x8x128xf32> to vector<1x8x8x128xf32>
    tpu.vector_store %arg15[%c0_91, %c0_92, %c0_93, %c0_94], %171 {strides = array<i32>} : memref<1x8x8x128xf32, #tpu.memory_space<vmem>>, vector<1x8x8x128xf32>,
    return
  }
  func.func @transform_0(%arg0: i32) -> (i32, i32, i32, i32) {
    %c0_i32 = arith.constant 0 : i32
    %c0_i32_0 = arith.constant 0 : i32
    %c0_i32_1 = arith.constant 0 : i32
    %c0_i32_2 = arith.constant 0 : i32
    return %arg0, %c0_i32, %c0_i32_0, %c0_i32_1 : i32, i32, i32, i32
  }
  func.func @transform_1(%arg0: i32) -> (i32, i32) {
    %c0_i32 = arith.constant 0 : i32
    %c0_i32_0 = arith.constant 0 : i32
    %c0_i32_1 = arith.constant 0 : i32
    return %c0_i32, %c0_i32_0 : i32, i32
  }
  func.func @transform_2(%arg0: i32) -> (i32, i32, i32) {
    %c0_i32 = arith.constant 0 : i32
    %c0_i32_0 = arith.constant 0 : i32
    %c0_i32_1 = arith.constant 0 : i32
    %c0_i32_2 = arith.constant 0 : i32
    return %c0_i32, %c0_i32_0, %c0_i32_1 : i32, i32, i32
  }
  func.func @transform_3(%arg0: i32) -> (i32, i32) {
    %c0_i32 = arith.constant 0 : i32
    %c0_i32_0 = arith.constant 0 : i32
    %c0_i32_1 = arith.constant 0 : i32
    return %c0_i32, %c0_i32_0 : i32, i32
  }
  func.func @transform_4(%arg0: i32) -> (i32, i32) {
    %c0_i32 = arith.constant 0 : i32
    %c0_i32_0 = arith.constant 0 : i32
    %c0_i32_1 = arith.constant 0 : i32
    return %c0_i32, %c0_i32_0 : i32, i32
  }
  func.func @transform_5(%arg0: i32) -> (i32, i32) {
    %c0_i32 = arith.constant 0 : i32
    %c0_i32_0 = arith.constant 0 : i32
    %c0_i32_1 = arith.constant 0 : i32
    return %c0_i32, %c0_i32_0 : i32, i32
  }
  func.func @transform_6(%arg0: i32) -> (i32, i32) {
    %c0_i32 = arith.constant 0 : i32
    %c0_i32_0 = arith.constant 0 : i32
    %c0_i32_1 = arith.constant 0 : i32
    return %c0_i32, %c0_i32_0 : i32, i32
  }
  func.func @transform_7(%arg0: i32) -> (i32, i32) {
    %c0_i32 = arith.constant 0 : i32
    %c0_i32_0 = arith.constant 0 : i32
    %c0_i32_1 = arith.constant 0 : i32
    return %c0_i32, %c0_i32_0 : i32, i32
  }
  func.func @transform_8(%arg0: i32) -> (i32, i32) {
    %c0_i32 = arith.constant 0 : i32
    %c0_i32_0 = arith.constant 0 : i32
    %c0_i32_1 = arith.constant 0 : i32
    return %c0_i32, %c0_i32_0 : i32, i32
  }
  func.func @transform_9(%arg0: i32) -> (i32, i32) {
    %c0_i32 = arith.constant 0 : i32
    %c0_i32_0 = arith.constant 0 : i32
    %c0_i32_1 = arith.constant 0 : i32
    return %c0_i32, %c0_i32_0 : i32, i32
  }
  func.func @transform_10(%arg0: i32) -> (i32, i32) {
    %c0_i32 = arith.constant 0 : i32
    %c0_i32_0 = arith.constant 0 : i32
    %c0_i32_1 = arith.constant 0 : i32
    return %c0_i32, %c0_i32_0 : i32, i32
  }
  func.func @transform_11(%arg0: i32) -> (i32, i32) {
    %c0_i32 = arith.constant 0 : i32
    %c0_i32_0 = arith.constant 0 : i32
    %c0_i32_1 = arith.constant 0 : i32
    return %c0_i32, %c0_i32_0 : i32, i32
  }
  func.func @transform_12(%arg0: i32) -> (i32, i32) {
    %c0_i32 = arith.constant 0 : i32
    %c0_i32_0 = arith.constant 0 : i32
    %c0_i32_1 = arith.constant 0 : i32
    return %c0_i32, %c0_i32_0 : i32, i32
  }
  func.func @transform_13(%arg0: i32) -> (i32, i32) {
    %c0_i32 = arith.constant 0 : i32
    %c0_i32_0 = arith.constant 0 : i32
    %c0_i32_1 = arith.constant 0 : i32
    return %c0_i32, %c0_i32_0 : i32, i32
  }
  func.func @transform_14(%arg0: i32) -> (i32, i32, i32, i32) {
    %c0_i32 = arith.constant 0 : i32
    %c0_i32_0 = arith.constant 0 : i32
    %c0_i32_1 = arith.constant 0 : i32
    %c0_i32_2 = arith.constant 0 : i32
    return %arg0, %c0_i32, %c0_i32_0, %c0_i32_1 : i32, i32, i32, i32
  }
}

</mosaic_0001>

<llo_original>
// kernel: tpu_custom_call.1
$region0: #{tpu_custom_call.1}
  #allocation0 [shape = 'u32[]', space=smem, size = 0x4, offset = 0x4, fixed_abs, tag = 'smem constant byte address 0x4 - core index']
  #allocation1 [shape = 'u32[144,128]{1,0:T(1,128)}', space=vmem, size = 0x12000, scoped, tag = 'internal scratch']
  #allocation2 [shape = 'f32[168,32]{1,0:T(8,128)}', space=vmem, size = 0x15000, scoped, tag = 'scratch operand']
  %s0 = inlined_call_operand.hbm [shape: f32[2,8,8,128], index: 0, kind: input, shape index: {}]
  %s1 = inlined_call_operand.hbm [shape: bf16[128,32], index: 1, kind: input, shape index: {}]
  %s2 = inlined_call_operand.hbm [shape: bf16[3,96,32], index: 2, kind: input, shape index: {}]
  %s3 = inlined_call_operand.hbm [shape: bf16[32,128], index: 3, kind: input, shape index: {}]
  %s4 = inlined_call_operand.hbm [shape: f32[1,32], index: 4, kind: input, shape index: {}]
  %s5 = inlined_call_operand.hbm [shape: f32[1,32], index: 5, kind: input, shape index: {}]
  %s6 = inlined_call_operand.hbm [shape: f32[1,32], index: 6, kind: input, shape index: {}]
  %s7 = inlined_call_operand.hbm [shape: f32[1,32], index: 7, kind: input, shape index: {}]
  %s8 = inlined_call_operand.hbm [shape: f32[1,128], index: 8, kind: input, shape index: {}]
  %s9 = inlined_call_operand.hbm [shape: f32[1,128], index: 9, kind: input, shape index: {}]
  %s10 = inlined_call_operand.hbm [shape: f32[32,32], index: 10, kind: input, shape index: {}]
  %s11 = inlined_call_operand.hbm [shape: f32[32,32], index: 11, kind: input, shape index: {}]
  %s12 = inlined_call_operand.hbm [shape: f32[128,32], index: 12, kind: input, shape index: {}]
  %s13 = inlined_call_operand.hbm [shape: f32[32,128], index: 13, kind: input, shape index: {}]
  %s14 = inlined_call_operand.hbm [shape: f32[2,8,8,128], index: 14, kind: output, shape index: {}]
  %s15 = sld [smem:[#allocation0]]
  $region145: #{tpu_custom_call.1} parent=0
    _
  %s17 = ssub.s32 1, %s15
  %s18 = scalar_select 0, %s17, %s15
  $region1: #{tpu_custom_call.1} parent=0
    #allocation3 [shape = 'u8[65536]{0}', space=vmem, size = 0x10000, scoped, tag = 'input window, operand 0']
    #allocation4 [shape = 's32[2]{0}', space=sflag, size = 0x8, scoped, tag = 'scoped memory for tpu_custom_call.1']
    #allocation5 [shape = 's32[2]{0}', space=sflag, size = 0x8, scoped, tag = 'scoped memory for tpu_custom_call.1']
    #allocation6 [shape = 'u8[32768]{0}', space=vmem, size = 0x8000, scoped, tag = 'input window, operand 1, single buffered']
    #allocation7 [shape = 's32[1]{0}', space=sflag, size = 0x4, scoped, tag = 'scoped memory for tpu_custom_call.1']
    #allocation8 [shape = 'u8[73728]{0}', space=vmem, size = 0x12000, scoped, tag = 'input window, operand 2, single buffered']
    #allocation9 [shape = 'u8[8192]{0}', space=vmem, size = 0x2000, scoped, tag = 'input window, operand 3, single buffered']
    #allocation10 [shape = 's32[1]{0}', space=sflag, size = 0x4, scoped, tag = 'scoped memory for tpu_custom_call.1']
    #allocation11 [shape = 'u8[512]{0}', space=vmem, size = 0x400, scoped, tag = 'input window, operand 4, single buffered']
    #allocation12 [shape = 'u8[512]{0}', space=vmem, size = 0x400, scoped, tag = 'input window, operand 5, single buffered']
    #allocation13 [shape = 's32[1]{0}', space=sflag, size = 0x4, scoped, tag = 'scoped memory for tpu_custom_call.1']
    #allocation14 [shape = 'u8[512]{0}', space=vmem, size = 0x400, scoped, tag = 'input window, operand 6, single buffered']
    #allocation15 [shape = 'u8[512]{0}', space=vmem, size = 0x400, scoped, tag = 'input window, operand 7, single buffered']
    #allocation16 [shape = 's32[1]{0}', space=sflag, size = 0x4, scoped, tag = 'scoped memory for tpu_custom_call.1']
    #allocation17 [shape = 'u8[512]{0}', space=vmem, size = 0x400, scoped, tag = 'input window, operand 8, single buffered']
    #allocation18 [shape = 'u8[512]{0}', space=vmem, size = 0x400, scoped, tag = 'input window, operand 9, single buffered']
    #allocation19 [shape = 's32[1]{0}', space=sflag, size = 0x4, scoped, tag = 'scoped memory for tpu_custom_call.1']
    #allocation20 [shape = 'u8[16384]{0}', space=vmem, size = 0x4000, scoped, tag = 'input window, operand 10, single buffered']
    #allocation21 [shape = 'u8[16384]{0}', space=vmem, size = 0x4000, scoped, tag = 'input window, operand 11, single buffered']
    #allocation22 [shape = 's32[1]{0}', space=sflag, size = 0x4, scoped, tag = 'scoped memory for tpu_custom_call.1']
    #allocation23 [shape = 'u8[65536]{0}', space=vmem, size = 0x10000, scoped, tag = 'input window, operand 12, single buffered']
    #allocation24 [shape = 'u8[16384]{0}', space=vmem, size = 0x4000, scoped, tag = 'input window, operand 13, single buffered']
    #allocation25 [shape = 's32[1]{0}', space=sflag, size = 0x4, scoped, tag = 'scoped memory for tpu_custom_call.1']
    #allocation26 [shape = 'u8[65536]{0}', space=vmem, size = 0x10000, scoped, tag = 'output window, operand 0']
    %19 = vsyncpa [#allocation4], 0
    %s20 = scalar_lea.sflag [#allocation4], 1
    %21 = vsyncpa %s20, 0
    %22 = vsyncpa [#allocation7], 0
    %23 = vsyncpa [#allocation10], 0
    %24 = vsyncpa [#allocation13], 0
    %25 = vsyncpa [#allocation16], 0
    %26 = vsyncpa [#allocation19], 0
    %27 = vsyncpa [#allocation22], 0
    %28 = vsyncpa [#allocation25], 0
    %29 = vsyncpa [#allocation5], 0
    %s30 = scalar_lea.sflag [#allocation5], 1
    %31 = vsyncpa %s30, 0
    loop: start=0, step=1, limit=4
    $region2: #{tpu_custom_call.1} parent=1 // loop_pre_header
      _
    $region3: #{tpu_custom_call.1} parent=1 // loop_header
      %s33 = sphi 0, %s37
      %p34 = scmp.ge.s32.totalorder %s33, 4
      %s43 = sphi 0, %s45
      %s46 = sphi 0, %s43
      %s47 = sphi 0, %s46
      %s63 = sphi 0, %s47
      %s67 = sphi 0, %s67
      %s69 = sphi 0, %s67
      %s70 = sphi 0, %s69
      %s84 = sphi 0, %s70
      %s88 = sphi 0, %s88
      %s90 = sphi 0, %s88
      %s91 = sphi 0, %s90
      %s105 = sphi 0, %s91
      %s109 = sphi 0, %s109
      %s111 = sphi 0, %s109
      %s112 = sphi 0, %s111
      %s126 = sphi 0, %s112
      %s130 = sphi 0, %s130
      %s132 = sphi 0, %s130
      %s133 = sphi 0, %s132
      %s147 = sphi 0, %s133
      %s151 = sphi 0, %s151
      %s153 = sphi 0, %s151
      %s154 = sphi 0, %s153
      %s168 = sphi 0, %s154
      %s172 = sphi 0, %s172
      %s174 = sphi 0, %s172
      %s175 = sphi 0, %s174
      %s189 = sphi 0, %s175
      %s193 = sphi 0, %s193
      %s195 = sphi 0, %s193
      %s196 = sphi 0, %s195
      %s210 = sphi 0, %s196
      %s214 = sphi 0, %s214
      %s216 = sphi 0, %s214
      %s217 = sphi 0, %s216
      %s231 = sphi 0, %s217
      %s235 = sphi 0, %s235
      %s237 = sphi 0, %s235
      %s238 = sphi 0, %s237
      %s252 = sphi 0, %s238
      %s256 = sphi 0, %s256
      %s258 = sphi 0, %s256
      %s259 = sphi 0, %s258
      %s273 = sphi 0, %s259
      %s277 = sphi 0, %s277
      %s279 = sphi 0, %s277
      %s280 = sphi 0, %s279
      %s294 = sphi 0, %s280
      %s298 = sphi 0, %s298
      %s300 = sphi 0, %s298
      %s301 = sphi 0, %s300
      %s315 = sphi 0, %s301
      %s319 = sphi 0, %s319
      %s321 = sphi 0, %s319
      %s322 = sphi 0, %s321
      %s336 = sphi 0, %s322
      %s342 = sphi 0, %s344
      %s345 = sphi 0, %s342
      %s346 = sphi 0, %s345
      %s362 = sphi 0, %s346
    $region4: #{tpu_custom_call.1} parent=1 // loop_header_branch
      %36 = sbr.rel (%p34) target = $region8
    $region5: #{tpu_custom_call.1} parent=1 // loop_body
      %s38 = ssub.s32 %s33, 1
      %s39 = ssub.s32 %s33, 2
      %s40 = sadd.s32 %s33, 1
      %s41 = ssub.s32 %s33, %s40
      %p42 = scmp.eq.s32.totalorder %s41, 0
      %s44 = sadd.s32 %s43, 1
      %s45 = scalar_select %p42, %s43, %s44
      %p48 = pneg %p42
      %p49 = scmp.eq.s32.totalorder %s33, 1
      %p50 = por %p48, %p49
      %p51 = scmp.ne.s32.totalorder %s43, %s46
      %p52 = scmp.eq.s32.totalorder %s33, 0
      %p53 = por %p51, %p52
      %p54 = scmp.ne.s32.totalorder %s43, %s46
      %p55 = scmp.eq.s32.totalorder %s38, 1
      %p56 = por %p54, %p55
      %p57 = scmp.ne.s32.totalorder %s46, %s47
      %p58 = scmp.eq.s32.totalorder %s38, 0
      %p59 = por %p57, %p58
      %p60 = scmp.ne.s32.totalorder %s46, %s47
      %p61 = scmp.eq.s32.totalorder %s39, 1
      %p62 = por %p60, %p61
      %p64 = scmp.ne.s32.totalorder %s47, %s63
      %p65 = scmp.eq.s32.totalorder %s39, 0
      %p66 = por %p64, %p65
      %s68 = sadd.s32 %s67, 1
      %p71 = scmp.eq.s32.totalorder %s33, 1
      %p72 = scmp.ne.s32.totalorder %s67, %s69
      %p73 = scmp.eq.s32.totalorder %s33, 0
      %p74 = por %p72, %p73
      %p75 = scmp.ne.s32.totalorder %s67, %s69
      %p76 = scmp.eq.s32.totalorder %s38, 1
      %p77 = por %p75, %p76
      %p78 = scmp.ne.s32.totalorder %s69, %s70
      %p79 = scmp.eq.s32.totalorder %s38, 0
      %p80 = por %p78, %p79
      %p81 = scmp.ne.s32.totalorder %s69, %s70
      %p82 = scmp.eq.s32.totalorder %s39, 1
      %p83 = por %p81, %p82
      %p85 = scmp.ne.s32.totalorder %s70, %s84
      %p86 = scmp.eq.s32.totalorder %s39, 0
      %p87 = por %p85, %p86
      %s89 = sadd.s32 %s88, 1
      %p92 = scmp.eq.s32.totalorder %s33, 1
      %p93 = scmp.ne.s32.totalorder %s88, %s90
      %p94 = scmp.eq.s32.totalorder %s33, 0
      %p95 = por %p93, %p94
      %p96 = scmp.ne.s32.totalorder %s88, %s90
      %p97 = scmp.eq.s32.totalorder %s38, 1
      %p98 = por %p96, %p97
      %p99 = scmp.ne.s32.totalorder %s90, %s91
      %p100 = scmp.eq.s32.totalorder %s38, 0
      %p101 = por %p99, %p100
      %p102 = scmp.ne.s32.totalorder %s90, %s91
      %p103 = scmp.eq.s32.totalorder %s39, 1
      %p104 = por %p102, %p103
      %p106 = scmp.ne.s32.totalorder %s91, %s105
      %p107 = scmp.eq.s32.totalorder %s39, 0
      %p108 = por %p106, %p107
      %s110 = sadd.s32 %s109, 1
      %p113 = scmp.eq.s32.totalorder %s33, 1
      %p114 = scmp.ne.s32.totalorder %s109, %s111
      %p115 = scmp.eq.s32.totalorder %s33, 0
      %p116 = por %p114, %p115
      %p117 = scmp.ne.s32.totalorder %s109, %s111
      %p118 = scmp.eq.s32.totalorder %s38, 1
      %p119 = por %p117, %p118
      %p120 = scmp.ne.s32.totalorder %s111, %s112
      %p121 = scmp.eq.s32.totalorder %s38, 0
      %p122 = por %p120, %p121
      %p123 = scmp.ne.s32.totalorder %s111, %s112
      %p124 = scmp.eq.s32.totalorder %s39, 1
      %p125 = por %p123, %p124
      %p127 = scmp.ne.s32.totalorder %s112, %s126
      %p128 = scmp.eq.s32.totalorder %s39, 0
      %p129 = por %p127, %p128
      %s131 = sadd.s32 %s130, 1
      %p134 = scmp.eq.s32.totalorder %s33, 1
      %p135 = scmp.ne.s32.totalorder %s130, %s132
      %p136 = scmp.eq.s32.totalorder %s33, 0
      %p137 = por %p135, %p136
      %p138 = scmp.ne.s32.totalorder %s130, %s132
      %p139 = scmp.eq.s32.totalorder %s38, 1
      %p140 = por %p138, %p139
      %p141 = scmp.ne.s32.totalorder %s132, %s133
      %p142 = scmp.eq.s32.totalorder %s38, 0
      %p143 = por %p141, %p142
      %p144 = scmp.ne.s32.totalorder %s132, %s133
      %p145 = scmp.eq.s32.totalorder %s39, 1
      %p146 = por %p144, %p145
      %p148 = scmp.ne.s32.totalorder %s133, %s147
      %p149 = scmp.eq.s32.totalorder %s39, 0
      %p150 = por %p148, %p149
      %s152 = sadd.s32 %s151, 1
      %p155 = scmp.eq.s32.totalorder %s33, 1
      %p156 = scmp.ne.s32.totalorder %s151, %s153
      %p157 = scmp.eq.s32.totalorder %s33, 0
      %p158 = por %p156, %p157
      %p159 = scmp.ne.s32.totalorder %s151, %s153
      %p160 = scmp.eq.s32.totalorder %s38, 1
      %p161 = por %p159, %p160
      %p162 = scmp.ne.s32.totalorder %s153, %s154
      %p163 = scmp.eq.s32.totalorder %s38, 0
      %p164 = por %p162, %p163
      %p165 = scmp.ne.s32.totalorder %s153, %s154
      %p166 = scmp.eq.s32.totalorder %s39, 1
      %p167 = por %p165, %p166
      %p169 = scmp.ne.s32.totalorder %s154, %s168
      %p170 = scmp.eq.s32.totalorder %s39, 0
      %p171 = por %p169, %p170
      %s173 = sadd.s32 %s172, 1
      %p176 = scmp.eq.s32.totalorder %s33, 1
      %p177 = scmp.ne.s32.totalorder %s172, %s174
      %p178 = scmp.eq.s32.totalorder %s33, 0
      %p179 = por %p177, %p178
      %p180 = scmp.ne.s32.totalorder %s172, %s174
      %p181 = scmp.eq.s32.totalorder %s38, 1
      %p182 = por %p180, %p181
      %p183 = scmp.ne.s32.totalorder %s174, %s175
      %p184 = scmp.eq.s32.totalorder %s38, 0
      %p185 = por %p183, %p184
      %p186 = scmp.ne.s32.totalorder %s174, %s175
      %p187 = scmp.eq.s32.totalorder %s39, 1
      %p188 = por %p186, %p187
      %p190 = scmp.ne.s32.totalorder %s175, %s189
      %p191 = scmp.eq.s32.totalorder %s39, 0
      %p192 = por %p190, %p191
      %s194 = sadd.s32 %s193, 1
      %p197 = scmp.eq.s32.totalorder %s33, 1
      %p198 = scmp.ne.s32.totalorder %s193, %s195
      %p199 = scmp.eq.s32.totalorder %s33, 0
      %p200 = por %p198, %p199
      %p201 = scmp.ne.s32.totalorder %s193, %s195
      %p202 = scmp.eq.s32.totalorder %s38, 1
      %p203 = por %p201, %p202
      %p204 = scmp.ne.s32.totalorder %s195, %s196
      %p205 = scmp.eq.s32.totalorder %s38, 0
      %p206 = por %p204, %p205
      %p207 = scmp.ne.s32.totalorder %s195, %s196
      %p208 = scmp.eq.s32.totalorder %s39, 1
      %p209 = por %p207, %p208
      %p211 = scmp.ne.s32.totalorder %s196, %s210
      %p212 = scmp.eq.s32.totalorder %s39, 0
      %p213 = por %p211, %p212
      %s215 = sadd.s32 %s214, 1
      %p218 = scmp.eq.s32.totalorder %s33, 1
      %p219 = scmp.ne.s32.totalorder %s214, %s216
      %p220 = scmp.eq.s32.totalorder %s33, 0
      %p221 = por %p219, %p220
      %p222 = scmp.ne.s32.totalorder %s214, %s216
      %p223 = scmp.eq.s32.totalorder %s38, 1
      %p224 = por %p222, %p223
      %p225 = scmp.ne.s32.totalorder %s216, %s217
      %p226 = scmp.eq.s32.totalorder %s38, 0
      %p227 = por %p225, %p226
      %p228 = scmp.ne.s32.totalorder %s216, %s217
      %p229 = scmp.eq.s32.totalorder %s39, 1
      %p230 = por %p228, %p229
      %p232 = scmp.ne.s32.totalorder %s217, %s231
      %p233 = scmp.eq.s32.totalorder %s39, 0
      %p234 = por %p232, %p233
      %s236 = sadd.s32 %s235, 1
      %p239 = scmp.eq.s32.totalorder %s33, 1
      %p240 = scmp.ne.s32.totalorder %s235, %s237
      %p241 = scmp.eq.s32.totalorder %s33, 0
      %p242 = por %p240, %p241
      %p243 = scmp.ne.s32.totalorder %s235, %s237
      %p244 = scmp.eq.s32.totalorder %s38, 1
      %p245 = por %p243, %p244
      %p246 = scmp.ne.s32.totalorder %s237, %s238
      %p247 = scmp.eq.s32.totalorder %s38, 0
      %p248 = por %p246, %p247
      %p249 = scmp.ne.s32.totalorder %s237, %s238
      %p250 = scmp.eq.s32.totalorder %s39, 1
      %p251 = por %p249, %p250
      %p253 = scmp.ne.s32.totalorder %s238, %s252
      %p254 = scmp.eq.s32.totalorder %s39, 0
      %p255 = por %p253, %p254
      %s257 = sadd.s32 %s256, 1
      %p260 = scmp.eq.s32.totalorder %s33, 1
      %p261 = scmp.ne.s32.totalorder %s256, %s258
      %p262 = scmp.eq.s32.totalorder %s33, 0
      %p263 = por %p261, %p262
      %p264 = scmp.ne.s32.totalorder %s256, %s258
      %p265 = scmp.eq.s32.totalorder %s38, 1
      %p266 = por %p264, %p265
      %p267 = scmp.ne.s32.totalorder %s258, %s259
      %p268 = scmp.eq.s32.totalorder %s38, 0
      %p269 = por %p267, %p268
      %p270 = scmp.ne.s32.totalorder %s258, %s259
      %p271 = scmp.eq.s32.totalorder %s39, 1
      %p272 = por %p270, %p271
      %p274 = scmp.ne.s32.totalorder %s259, %s273
      %p275 = scmp.eq.s32.totalorder %s39, 0
      %p276 = por %p274, %p275
      %s278 = sadd.s32 %s277, 1
      %p281 = scmp.eq.s32.totalorder %s33, 1
      %p282 = scmp.ne.s32.totalorder %s277, %s279
      %p283 = scmp.eq.s32.totalorder %s33, 0
      %p284 = por %p282, %p283
      %p285 = scmp.ne.s32.totalorder %s277, %s279
      %p286 = scmp.eq.s32.totalorder %s38, 1
      %p287 = por %p285, %p286
      %p288 = scmp.ne.s32.totalorder %s279, %s280
      %p289 = scmp.eq.s32.totalorder %s38, 0
      %p290 = por %p288, %p289
      %p291 = scmp.ne.s32.totalorder %s279, %s280
      %p292 = scmp.eq.s32.totalorder %s39, 1
      %p293 = por %p291, %p292
      %p295 = scmp.ne.s32.totalorder %s280, %s294
      %p296 = scmp.eq.s32.totalorder %s39, 0
      %p297 = por %p295, %p296
      %s299 = sadd.s32 %s298, 1
      %p302 = scmp.eq.s32.totalorder %s33, 1
      %p303 = scmp.ne.s32.totalorder %s298, %s300
      %p304 = scmp.eq.s32.totalorder %s33, 0
      %p305 = por %p303, %p304
      %p306 = scmp.ne.s32.totalorder %s298, %s300
      %p307 = scmp.eq.s32.totalorder %s38, 1
      %p308 = por %p306, %p307
      %p309 = scmp.ne.s32.totalorder %s300, %s301
      %p310 = scmp.eq.s32.totalorder %s38, 0
      %p311 = por %p309, %p310
      %p312 = scmp.ne.s32.totalorder %s300, %s301
      %p313 = scmp.eq.s32.totalorder %s39, 1
      %p314 = por %p312, %p313
      %p316 = scmp.ne.s32.totalorder %s301, %s315
      %p317 = scmp.eq.s32.totalorder %s39, 0
      %p318 = por %p316, %p317
      %s320 = sadd.s32 %s319, 1
      %p323 = scmp.eq.s32.totalorder %s33, 1
      %p324 = scmp.ne.s32.totalorder %s319, %s321
      %p325 = scmp.eq.s32.totalorder %s33, 0
      %p326 = por %p324, %p325
      %p327 = scmp.ne.s32.totalorder %s319, %s321
      %p328 = scmp.eq.s32.totalorder %s38, 1
      %p329 = por %p327, %p328
      %p330 = scmp.ne.s32.totalorder %s321, %s322
      %p331 = scmp.eq.s32.totalorder %s38, 0
      %p332 = por %p330, %p331
      %p333 = scmp.ne.s32.totalorder %s321, %s322
      %p334 = scmp.eq.s32.totalorder %s39, 1
      %p335 = por %p333, %p334
      %p337 = scmp.ne.s32.totalorder %s322, %s336
      %p338 = scmp.eq.s32.totalorder %s39, 0
      %p339 = por %p337, %p338
      %s340 = ssub.s32 %s33, %s40
      %p341 = scmp.eq.s32.totalorder %s340, 0
      %s343 = sadd.s32 %s342, 1
      %s344 = scalar_select %p341, %s342, %s343
      %p347 = pneg %p341
      %p348 = scmp.eq.s32.totalorder %s33, 1
      %p349 = por %p347, %p348
      %p350 = scmp.ne.s32.totalorder %s342, %s345
      %p351 = scmp.eq.s32.totalorder %s33, 0
      %p352 = por %p350, %p351
      %p353 = scmp.ne.s32.totalorder %s342, %s345
      %p354 = scmp.eq.s32.totalorder %s38, 1
      %p355 = por %p353, %p354
      %p356 = scmp.ne.s32.totalorder %s345, %s346
      %p357 = scmp.eq.s32.totalorder %s38, 0
      %p358 = por %p356, %p357
      %p359 = scmp.ne.s32.totalorder %s345, %s346
      %p360 = scmp.eq.s32.totalorder %s39, 1
      %p361 = por %p359, %p360
      %p363 = scmp.ne.s32.totalorder %s346, %s362
      %p364 = scmp.eq.s32.totalorder %s39, 0
      %p365 = por %p363, %p364
      %p366 = scmp.le.s32.totalorder 1, %s33
      %p367 = scmp.lt.s32.totalorder %s33, 3
      %p368 = pnand %p366, %p367
      %p369 = pneg %p368
      // Predicated region
      $region9: #{tpu_custom_call.1} parent=5 // pred_check
        _
      $region10: #{tpu_custom_call.1} parent=5 // pred_check_branch
        %371 = sbr.rel (%p368) target = $region12
      $region11: #{tpu_custom_call.1} parent=5 // pred_region
        %s372 = ssub.s32 %s33, 1
        // Predicated region
        $region13: #{tpu_custom_call.1} parent=11 // pred_check
          %p373 = pneg %p80
        $region14: #{tpu_custom_call.1} parent=11 // pred_check_branch
          %375 = sbr.rel (%p373) target = $region16
        $region15: #{tpu_custom_call.1} parent=11 // pred_region
          %s377 = ssub.s32 1024, 1024
          %378 = vsyncadd [#allocation7], %s377
          %s379 = sshll.u32 [#allocation6], 4
          %s380 = int_to_ptr.vmem [resolvable:$true] %s379
          %385 = dma.hbm_to_vmem [thread:$0]  %s1, 1024, %s380, [#allocation7], 64, 64, 4
        $region16: #{tpu_custom_call.1} parent=11 // pred_fallthru
          _
        // Predicated region
        $region17: #{tpu_custom_call.1} parent=11 // pred_check
          %p386 = pneg %p101
        $region18: #{tpu_custom_call.1} parent=11 // pred_check_branch
          %388 = sbr.rel (%p386) target = $region20
        $region19: #{tpu_custom_call.1} parent=11 // pred_region
          %s390 = ssub.s32 2304, 2304
          %391 = vsyncadd [#allocation7], %s390
          %s392 = sshll.u32 [#allocation8], 4
          %s393 = int_to_ptr.vmem [resolvable:$true] %s392
          %398 = dma.hbm_to_vmem [thread:$0]  %s2, 2304, %s393, [#allocation7], 64, 64, 4
        $region20: #{tpu_custom_call.1} parent=11 // pred_fallthru
          _
        // Predicated region
        $region21: #{tpu_custom_call.1} parent=11 // pred_check
          %p399 = pneg %p122
        $region22: #{tpu_custom_call.1} parent=11 // pred_check_branch
          %401 = sbr.rel (%p399) target = $region24
        $region23: #{tpu_custom_call.1} parent=11 // pred_region
          %s403 = ssub.s32 256, 256
          %404 = vsyncadd [#allocation10], %s403
          %s405 = sshll.u32 [#allocation9], 4
          %s406 = int_to_ptr.vmem [resolvable:$true] %s405
          %411 = dma.hbm_to_vmem [thread:$0]  %s3, 256, %s406, [#allocation10], 64, 64, 4
        $region24: #{tpu_custom_call.1} parent=11 // pred_fallthru
          _
        // Predicated region
        $region25: #{tpu_custom_call.1} parent=11 // pred_check
          %p412 = pneg %p143
        $region26: #{tpu_custom_call.1} parent=11 // pred_check_branch
          %414 = sbr.rel (%p412) target = $region28
        $region27: #{tpu_custom_call.1} parent=11 // pred_region
          %s416 = ssub.s32 16, 16
          %417 = vsyncadd [#allocation10], %s416
          %s419 = sshll.u32 [#allocation11], 4
          %s420 = int_to_ptr.vmem [resolvable:$true] %s419
          %422 = dma.hbm_to_vmem [thread:$0]  %s4, 16, %s420, [#allocation10]
        $region28: #{tpu_custom_call.1} parent=11 // pred_fallthru
          _
        // Predicated region
        $region29: #{tpu_custom_call.1} parent=11 // pred_check
          %p423 = pneg %p164
        $region30: #{tpu_custom_call.1} parent=11 // pred_check_branch
          %425 = sbr.rel (%p423) target = $region32
        $region31: #{tpu_custom_call.1} parent=11 // pred_region
          %s427 = ssub.s32 16, 16
          %428 = vsyncadd [#allocation13], %s427
          %s430 = sshll.u32 [#allocation12], 4
          %s431 = int_to_ptr.vmem [resolvable:$true] %s430
          %433 = dma.hbm_to_vmem [thread:$0]  %s5, 16, %s431, [#allocation13]
        $region32: #{tpu_custom_call.1} parent=11 // pred_fallthru
          _
        // Predicated region
        $region33: #{tpu_custom_call.1} parent=11 // pred_check
          %p434 = pneg %p185
        $region34: #{tpu_custom_call.1} parent=11 // pred_check_branch
          %436 = sbr.rel (%p434) target = $region36
        $region35: #{tpu_custom_call.1} parent=11 // pred_region
          %s438 = ssub.s32 16, 16
          %439 = vsyncadd [#allocation13], %s438
          %s441 = sshll.u32 [#allocation14], 4
          %s442 = int_to_ptr.vmem [resolvable:$true] %s441
          %444 = dma.hbm_to_vmem [thread:$0]  %s6, 16, %s442, [#allocation13]
        $region36: #{tpu_custom_call.1} parent=11 // pred_fallthru
          _
        // Predicated region
        $region37: #{tpu_custom_call.1} parent=11 // pred_check
          %p445 = pneg %p206
        $region38: #{tpu_custom_call.1} parent=11 // pred_check_branch
          %447 = sbr.rel (%p445) target = $region40
        $region39: #{tpu_custom_call.1} parent=11 // pred_region
          %s449 = ssub.s32 16, 16
          %450 = vsyncadd [#allocation16], %s449
          %s452 = sshll.u32 [#allocation15], 4
          %s453 = int_to_ptr.vmem [resolvable:$true] %s452
          %455 = dma.hbm_to_vmem [thread:$0]  %s7, 16, %s453, [#allocation16]
        $region40: #{tpu_custom_call.1} parent=11 // pred_fallthru
          _
        // Predicated region
        $region41: #{tpu_custom_call.1} parent=11 // pred_check
          %p456 = pneg %p227
        $region42: #{tpu_custom_call.1} parent=11 // pred_check_branch
          %458 = sbr.rel (%p456) target = $region44
        $region43: #{tpu_custom_call.1} parent=11 // pred_region
          %s460 = ssub.s32 16, 16
          %461 = vsyncadd [#allocation16], %s460
          %s463 = sshll.u32 [#allocation17], 4
          %s464 = int_to_ptr.vmem [resolvable:$true] %s463
          %466 = dma.hbm_to_vmem [thread:$0]  %s8, 16, %s464, [#allocation16]
        $region44: #{tpu_custom_call.1} parent=11 // pred_fallthru
          _
        // Predicated region
        $region45: #{tpu_custom_call.1} parent=11 // pred_check
          %p467 = pneg %p248
        $region46: #{tpu_custom_call.1} parent=11 // pred_check_branch
          %469 = sbr.rel (%p467) target = $region48
        $region47: #{tpu_custom_call.1} parent=11 // pred_region
          %s471 = ssub.s32 16, 16
          %472 = vsyncadd [#allocation19], %s471
          %s474 = sshll.u32 [#allocation18], 4
          %s475 = int_to_ptr.vmem [resolvable:$true] %s474
          %477 = dma.hbm_to_vmem [thread:$0]  %s9, 16, %s475, [#allocation19]
        $region48: #{tpu_custom_call.1} parent=11 // pred_fallthru
          _
        // Predicated region
        $region49: #{tpu_custom_call.1} parent=11 // pred_check
          %p478 = pneg %p269
        $region50: #{tpu_custom_call.1} parent=11 // pred_check_branch
          %480 = sbr.rel (%p478) target = $region52
        $region51: #{tpu_custom_call.1} parent=11 // pred_region
          %s482 = ssub.s32 512, 512
          %483 = vsyncadd [#allocation19], %s482
          %s484 = sshll.u32 [#allocation20], 4
          %s485 = int_to_ptr.vmem [resolvable:$true] %s484
          %490 = dma.hbm_to_vmem [thread:$0]  %s10, 512, %s485, [#allocation19], 128, 128, 8
        $region52: #{tpu_custom_call.1} parent=11 // pred_fallthru
          _
        // Predicated region
        $region53: #{tpu_custom_call.1} parent=11 // pred_check
          %p491 = pneg %p290
        $region54: #{tpu_custom_call.1} parent=11 // pred_check_branch
          %493 = sbr.rel (%p491) target = $region56
        $region55: #{tpu_custom_call.1} parent=11 // pred_region
          %s495 = ssub.s32 512, 512
          %496 = vsyncadd [#allocation22], %s495
          %s497 = sshll.u32 [#allocation21], 4
          %s498 = int_to_ptr.vmem [resolvable:$true] %s497
          %503 = dma.hbm_to_vmem [thread:$0]  %s11, 512, %s498, [#allocation22], 128, 128, 8
        $region56: #{tpu_custom_call.1} parent=11 // pred_fallthru
          _
        // Predicated region
        $region57: #{tpu_custom_call.1} parent=11 // pred_check
          %p504 = pneg %p311
        $region58: #{tpu_custom_call.1} parent=11 // pred_check_branch
          %506 = sbr.rel (%p504) target = $region60
        $region59: #{tpu_custom_call.1} parent=11 // pred_region
          %s508 = ssub.s32 2048, 2048
          %509 = vsyncadd [#allocation22], %s508
          %s510 = sshll.u32 [#allocation23], 4
          %s511 = int_to_ptr.vmem [resolvable:$true] %s510
          %516 = dma.hbm_to_vmem [thread:$0]  %s12, 2048, %s511, [#allocation22], 128, 128, 8
        $region60: #{tpu_custom_call.1} parent=11 // pred_fallthru
          _
        // Predicated region
        $region61: #{tpu_custom_call.1} parent=11 // pred_check
          %p517 = pneg %p332
        $region62: #{tpu_custom_call.1} parent=11 // pred_check_branch
          %519 = sbr.rel (%p517) target = $region64
        $region63: #{tpu_custom_call.1} parent=11 // pred_region
          %s521 = ssub.s32 512, 512
          %522 = vsyncadd [#allocation25], %s521
          %s523 = sshll.u32 [#allocation24], 4
          %s524 = int_to_ptr.vmem [resolvable:$true] %s523
          %529 = dma.hbm_to_vmem [thread:$0]  %s13, 512, %s524, [#allocation25], 128, 128, 8
        $region64: #{tpu_custom_call.1} parent=11 // pred_fallthru
          _
      $region12: #{tpu_custom_call.1} parent=5 // pred_fallthru
        _
      %p530 = scmp.lt.s32.totalorder %s33, 2
      // Predicated region
      $region65: #{tpu_custom_call.1} parent=5 // pred_check
        %p531 = pneg %p530
      $region66: #{tpu_custom_call.1} parent=5 // pred_check_branch
        %533 = sbr.rel (%p531) target = $region68
      $region67: #{tpu_custom_call.1} parent=5 // pred_region
        // Predicated region
        $region69: #{tpu_custom_call.1} parent=67 // pred_check
          %p534 = pneg %p53
        $region70: #{tpu_custom_call.1} parent=67 // pred_check_branch
          %536 = sbr.rel (%p534) target = $region72
        $region71: #{tpu_custom_call.1} parent=67 // pred_region
          %s537 = sand.u32 %s43, 1
          %s538 = scalar_lea.sflag [#allocation4], %s537
          %s539 = sand.u32 %s43, 1
          %s540 = smul.addr %s539, 64
          %s541 = scalar_lea.vmem [#allocation3], %s540
          %s543 = ssub.s32 1024, 1024
          %544 = vsyncadd %s538, %s543
          %s545 = smul.addr %s33, 8
          %s546 = smul.addr %s545, 128
          %s547 = scalar_lea.hbm %s0, %s546
          %s548 = sshll.u32 %s541, 4
          %s549 = int_to_ptr.vmem [resolvable:$true] %s548
          %554 = dma.hbm_to_vmem [thread:$0]  %s547, 1024, %s549, %s538, 128, 128, 8
        $region72: #{tpu_custom_call.1} parent=67 // pred_fallthru
          _
      $region68: #{tpu_custom_call.1} parent=5 // pred_fallthru
        _
      %p555 = scmp.le.s32.totalorder 1, %s33
      %p556 = scmp.lt.s32.totalorder %s33, 3
      %p557 = pnand %p555, %p556
      %p558 = pneg %p557
      // Predicated region
      $region73: #{tpu_custom_call.1} parent=5 // pred_check
        _
      $region74: #{tpu_custom_call.1} parent=5 // pred_check_branch
        %560 = sbr.rel (%p557) target = $region76
      $region75: #{tpu_custom_call.1} parent=5 // pred_region
        %s561 = ssub.s32 %s33, 1
        %s562 = sand.u32 %s46, 1
        %s563 = scalar_lea.sflag [#allocation4], %s562
        %s564 = sand.u32 %s46, 1
        %s565 = smul.addr %s564, 64
        %s566 = scalar_lea.vmem [#allocation3], %s565
        // Predicated region
        $region77: #{tpu_custom_call.1} parent=75 // pred_check
          %p567 = pneg %p59
        $region78: #{tpu_custom_call.1} parent=75 // pred_check_branch
          %569 = sbr.rel (%p567) target = $region80
        $region79: #{tpu_custom_call.1} parent=75 // pred_region
          %570 = dma.done %s563, 1024
        $region80: #{tpu_custom_call.1} parent=75 // pred_fallthru
          _
        // Predicated region
        $region81: #{tpu_custom_call.1} parent=75 // pred_check
          %p571 = pneg %p80
        $region82: #{tpu_custom_call.1} parent=75 // pred_check_branch
          %573 = sbr.rel (%p571) target = $region84
        $region83: #{tpu_custom_call.1} parent=75 // pred_region
          %574 = dma.done [#allocation7], 1024
        $region84: #{tpu_custom_call.1} parent=75 // pred_fallthru
          _
        // Predicated region
        $region85: #{tpu_custom_call.1} parent=75 // pred_check
          %p575 = pneg %p101
        $region86: #{tpu_custom_call.1} parent=75 // pred_check_branch
          %577 = sbr.rel (%p575) target = $region88
        $region87: #{tpu_custom_call.1} parent=75 // pred_region
          %578 = dma.done [#allocation7], 2304
        $region88: #{tpu_custom_call.1} parent=75 // pred_fallthru
          _
        // Predicated region
        $region89: #{tpu_custom_call.1} parent=75 // pred_check
          %p579 = pneg %p122
        $region90: #{tpu_custom_call.1} parent=75 // pred_check_branch
          %581 = sbr.rel (%p579) target = $region92
        $region91: #{tpu_custom_call.1} parent=75 // pred_region
          %582 = dma.done [#allocation10], 256
        $region92: #{tpu_custom_call.1} parent=75 // pred_fallthru
          _
        // Predicated region
        $region93: #{tpu_custom_call.1} parent=75 // pred_check
          %p583 = pneg %p143
        $region94: #{tpu_custom_call.1} parent=75 // pred_check_branch
          %585 = sbr.rel (%p583) target = $region96
        $region95: #{tpu_custom_call.1} parent=75 // pred_region
          %586 = dma.done [#allocation10], 16
        $region96: #{tpu_custom_call.1} parent=75 // pred_fallthru
          _
        // Predicated region
        $region97: #{tpu_custom_call.1} parent=75 // pred_check
          %p587 = pneg %p164
        $region98: #{tpu_custom_call.1} parent=75 // pred_check_branch
          %589 = sbr.rel (%p587) target = $region100
        $region99: #{tpu_custom_call.1} parent=75 // pred_region
          %590 = dma.done [#allocation13], 16
        $region100: #{tpu_custom_call.1} parent=75 // pred_fallthru
          _
        // Predicated region
        $region101: #{tpu_custom_call.1} parent=75 // pred_check
          %p591 = pneg %p185
        $region102: #{tpu_custom_call.1} parent=75 // pred_check_branch
          %593 = sbr.rel (%p591) target = $region104
        $region103: #{tpu_custom_call.1} parent=75 // pred_region
          %594 = dma.done [#allocation13], 16
        $region104: #{tpu_custom_call.1} parent=75 // pred_fallthru
          _
        // Predicated region
        $region105: #{tpu_custom_call.1} parent=75 // pred_check
          %p595 = pneg %p206
        $region106: #{tpu_custom_call.1} parent=75 // pred_check_branch
          %597 = sbr.rel (%p595) target = $region108
        $region107: #{tpu_custom_call.1} parent=75 // pred_region
          %598 = dma.done [#allocation16], 16
        $region108: #{tpu_custom_call.1} parent=75 // pred_fallthru
          _
        // Predicated region
        $region109: #{tpu_custom_call.1} parent=75 // pred_check
          %p599 = pneg %p227
        $region110: #{tpu_custom_call.1} parent=75 // pred_check_branch
          %601 = sbr.rel (%p599) target = $region112
        $region111: #{tpu_custom_call.1} parent=75 // pred_region
          %602 = dma.done [#allocation16], 16
        $region112: #{tpu_custom_call.1} parent=75 // pred_fallthru
          _
        // Predicated region
        $region113: #{tpu_custom_call.1} parent=75 // pred_check
          %p603 = pneg %p248
        $region114: #{tpu_custom_call.1} parent=75 // pred_check_branch
          %605 = sbr.rel (%p603) target = $region116
        $region115: #{tpu_custom_call.1} parent=75 // pred_region
          %606 = dma.done [#allocation19], 16
        $region116: #{tpu_custom_call.1} parent=75 // pred_fallthru
          _
        // Predicated region
        $region117: #{tpu_custom_call.1} parent=75 // pred_check
          %p607 = pneg %p269
        $region118: #{tpu_custom_call.1} parent=75 // pred_check_branch
          %609 = sbr.rel (%p607) target = $region120
        $region119: #{tpu_custom_call.1} parent=75 // pred_region
          %610 = dma.done [#allocation19], 512
        $region120: #{tpu_custom_call.1} parent=75 // pred_fallthru
          _
        // Predicated region
        $region121: #{tpu_custom_call.1} parent=75 // pred_check
          %p611 = pneg %p290
        $region122: #{tpu_custom_call.1} parent=75 // pred_check_branch
          %613 = sbr.rel (%p611) target = $region124
        $region123: #{tpu_custom_call.1} parent=75 // pred_region
          %614 = dma.done [#allocation22], 512
        $region124: #{tpu_custom_call.1} parent=75 // pred_fallthru
          _
        // Predicated region
        $region125: #{tpu_custom_call.1} parent=75 // pred_check
          %p615 = pneg %p311
        $region126: #{tpu_custom_call.1} parent=75 // pred_check_branch
          %617 = sbr.rel (%p615) target = $region128
        $region127: #{tpu_custom_call.1} parent=75 // pred_region
          %618 = dma.done [#allocation22], 2048
        $region128: #{tpu_custom_call.1} parent=75 // pred_fallthru
          _
        // Predicated region
        $region129: #{tpu_custom_call.1} parent=75 // pred_check
          %p619 = pneg %p332
        $region130: #{tpu_custom_call.1} parent=75 // pred_check_branch
          %621 = sbr.rel (%p619) target = $region132
        $region131: #{tpu_custom_call.1} parent=75 // pred_region
          %622 = dma.done [#allocation25], 512
        $region132: #{tpu_custom_call.1} parent=75 // pred_fallthru
          _
        %s623 = sand.u32 %s46, 1
        %s624 = scalar_lea.sflag [#allocation4], %s623
        %s625 = sand.u32 %s46, 1
        %s626 = smul.addr %s625, 64
        %s627 = scalar_lea.vmem [#allocation3], %s626
        %p628 = pneg %p59
        %p629 = pneg %p56
        %p630 = pneg %p80
        %p631 = pneg %p77
        %p632 = pneg %p101
        %p633 = pneg %p98
        %p634 = pneg %p122
        %p635 = pneg %p119
        %p636 = pneg %p143
        %p637 = pneg %p140
        %p638 = pneg %p164
        %p639 = pneg %p161
        %p640 = pneg %p185
        %p641 = pneg %p182
        %p642 = pneg %p206
        %p643 = pneg %p203
        %p644 = pneg %p227
        %p645 = pneg %p224
        %p646 = pneg %p248
        %p647 = pneg %p245
        %p648 = pneg %p269
        %p649 = pneg %p266
        %p650 = pneg %p290
        %p651 = pneg %p287
        %p652 = pneg %p311
        %p653 = pneg %p308
        %p654 = pneg %p332
        %p655 = pneg %p329
        %p656 = pneg %p358
        %p657 = pneg %p355
        %s658 = sand.u32 %s345, 1
        %s659 = scalar_lea.sflag [#allocation5], %s658
        %s660 = sand.u32 %s345, 1
        %s661 = smul.addr %s660, 64
        %s662 = scalar_lea.vmem [#allocation26], %s661
        %v664 = vld [vmem:[%s566] sm:$0xff]
        %v665 = vld [vmem:[%s566 + $0x8] sm:$0xff]
        %v666 = vld [vmem:[%s566 + $0x10] sm:$0xff]
        %v667 = vld [vmem:[%s566 + $0x18] sm:$0xff]
        %v668 = vld [vmem:[%s566 + $0x20] sm:$0xff]
        %v669 = vld [vmem:[%s566 + $0x28] sm:$0xff]
        %v670 = vld [vmem:[%s566 + $0x30] sm:$0xff]
        %v671 = vld [vmem:[%s566 + $0x38] sm:$0xff]
        %v672 = vpack.c.bf16 %v665, %v664
        %v673 = vpack.c.bf16 %v667, %v666
        %v674 = vpack.c.bf16 %v669, %v668
        %v675 = vpack.c.bf16 %v671, %v670
        %v676 = vld [vmem:[#allocation6] sm:$0xf]
        %v677 = vld [vmem:[#allocation6 + $0x4] sm:$0xf]
        %v678 = vld [vmem:[#allocation6 + $0x8] sm:$0xf]
        %v679 = vld [vmem:[#allocation6 + $0xc] sm:$0xf]
        %v680 = vld [vmem:[#allocation6 + $0x10] sm:$0xf]
        %v681 = vld [vmem:[#allocation6 + $0x14] sm:$0xf]
        %v682 = vld [vmem:[#allocation6 + $0x18] sm:$0xf]
        %v683 = vld [vmem:[#allocation6 + $0x1c] sm:$0xf]
        %v684 = vld [vmem:[#allocation6 + $0x20] sm:$0xf]
        %v685 = vld [vmem:[#allocation6 + $0x24] sm:$0xf]
        %v686 = vld [vmem:[#allocation6 + $0x28] sm:$0xf]
        %v687 = vld [vmem:[#allocation6 + $0x2c] sm:$0xf]
        %v688 = vld [vmem:[#allocation6 + $0x30] sm:$0xf]
        %v689 = vld [vmem:[#allocation6 + $0x34] sm:$0xf]
        %v690 = vld [vmem:[#allocation6 + $0x38] sm:$0xf]
        %v691 = vld [vmem:[#allocation6 + $0x3c] sm:$0xf]
        %v708 = vunpack.c.l.b16 %v676
        %v709 = vunpack.c.l.b16 %v677
        %v710 = vunpack.c.l.b16 %v678
        %v711 = vunpack.c.l.b16 %v679
        %v712 = vunpack.c.l.b16 %v680
        %v713 = vunpack.c.l.b16 %v681
        %v714 = vunpack.c.l.b16 %v682
        %v715 = vunpack.c.l.b16 %v683
        %v716 = vunpack.c.l.b16 %v684
        %v717 = vunpack.c.l.b16 %v685
        %v718 = vunpack.c.l.b16 %v686
        %v719 = vunpack.c.l.b16 %v687
        %v720 = vunpack.c.l.b16 %v688
        %v721 = vunpack.c.l.b16 %v689
        %v722 = vunpack.c.l.b16 %v690
        %v723 = vunpack.c.l.b16 %v691
        %v724 = vpack.c.b16 %v709, %v708
        %v725 = vpack.c.b16 %v711, %v710
        %v726 = vpack.c.b16 %v713, %v712
        %v727 = vpack.c.b16 %v715, %v714
        %v728 = vpack.c.b16 %v717, %v716
        %v729 = vpack.c.b16 %v719, %v718
        %v730 = vpack.c.b16 %v721, %v720
        %v731 = vpack.c.b16 %v723, %v722
        %740 = vmatprep.subr.bf16.mxu0 0
        %741 = vmatpush1.bf16.msra.mxu0 %v724
        %742 = vmatprep.subr.bf16.mxu0 0
        %743 = vmatpush1.bf16.msra.mxu0 %v725
        %744 = vmatprep.subr.bf16.mxu0 0
        %745 = vmatpush1.bf16.msra.mxu0 %v726
        %746 = vmatprep.subr.bf16.mxu0 0
        %747 = vmatpush1.bf16.msra.mxu0 %v727
        %748 = vmatprep.subr.bf16.mxu0 0
        %749 = vmatpush1.bf16.msra.mxu0 %v728
        %750 = vmatprep.subr.bf16.mxu0 0
        %751 = vmatpush1.bf16.msra.mxu0 %v729
        %752 = vmatprep.subr.bf16.mxu0 0
        %753 = vmatpush1.bf16.msra.mxu0 %v730
        %754 = vmatprep.subr.bf16.mxu0 0
        %755 = vmatpush1.bf16.msra.mxu0 %v731
        %756 = vmatprep.subr.bf16.mxu0 0
        %757 = vmatpush1.bf16.msra.mxu0 0
        %758 = vmatprep.subr.bf16.mxu0 0
        %759 = vmatpush1.bf16.msra.mxu0 0
        %760 = vmatprep.subr.bf16.mxu0 0
        %761 = vmatpush1.bf16.msra.mxu0 0
        %762 = vmatprep.subr.bf16.mxu0 0
        %763 = vmatpush1.bf16.msra.mxu0 0
        %764 = vmatprep.subr.bf16.mxu0 0
        %765 = vmatpush1.bf16.msra.mxu0 0
        %766 = vmatprep.subr.bf16.mxu0 0
        %767 = vmatpush1.bf16.msra.mxu0 0
        %768 = vmatprep.subr.bf16.mxu0 0
        %769 = vmatpush1.bf16.msra.mxu0 0
        %770 = vmatprep.subr.bf16.mxu0 0
        %771 = vmatpush1.bf16.msra.mxu0 0
        %772 = vmatprep.mubr.bf16.mxu0 0
        %773 = vmatmul.mubr.bf16.gmra.mrb[0].mxu0 %v672
        %v774 = vpop.f32.mrb[0].mxu0
        %v775 = vadd.f32 0.0, %v774
        %v776 = vpop.f32.mrb[0].mxu0
        %v777 = vpop.f32.mrb[0].mxu0
        %v778 = vadd.f32 0.0, %v777
        %v779 = vpop.f32.mrb[0].mxu0
        %780 = vmatprep.mubr.bf16.mxu0 0
        %781 = vmatmul.mubr.bf16.gmra.mrb[0].mxu0 %v673
        %v782 = vpop.f32.mrb[0].mxu0
        %v783 = vadd.f32 0.0, %v782
        %v784 = vpop.f32.mrb[0].mxu0
        %v785 = vpop.f32.mrb[0].mxu0
        %v786 = vadd.f32 0.0, %v785
        %v787 = vpop.f32.mrb[0].mxu0
        %788 = vmatprep.mubr.bf16.mxu0 0
        %789 = vmatmul.mubr.bf16.gmra.mrb[0].mxu0 %v674
        %v790 = vpop.f32.mrb[0].mxu0
        %v791 = vadd.f32 0.0, %v790
        %v792 = vpop.f32.mrb[0].mxu0
        %v793 = vpop.f32.mrb[0].mxu0
        %v794 = vadd.f32 0.0, %v793
        %v795 = vpop.f32.mrb[0].mxu0
        %796 = vmatprep.mubr.bf16.mxu0 0
        %797 = vmatmul.mubr.bf16.gmra.mrb[0].mxu0 %v675
        %v798 = vpop.f32.mrb[0].mxu0
        %v799 = vadd.f32 0.0, %v798
        %v800 = vpop.f32.mrb[0].mxu0
        %v801 = vpop.f32.mrb[0].mxu0
        %v802 = vadd.f32 0.0, %v801
        %v803 = vpop.f32.mrb[0].mxu0
        %804 = vdwg.mxu0
        %vm805 = vcmask 261120
        %v806 = vsel %vm805, %v775, 0.0
        %v807 = vsel %vm805, %v778, 0.0
        %v808 = vadd.f32 %v806, %v807
        %v809 = vsel %vm805, %v783, 0.0
        %v810 = vadd.f32 %v808, %v809
        %v811 = vsel %vm805, %v786, 0.0
        %v812 = vadd.f32 %v810, %v811
        %v813 = vsel %vm805, %v791, 0.0
        %v814 = vadd.f32 %v812, %v813
        %v815 = vsel %vm805, %v794, 0.0
        %v816 = vadd.f32 %v814, %v815
        %v817 = vsel %vm805, %v799, 0.0
        %v818 = vadd.f32 %v816, %v817
        %v819 = vsel %vm805, %v802, 0.0
        %v820 = vadd.f32 %v818, %v819
        %v821 = vrot.slane %v820, 4
        %v822 = vadd.f32 %v820, %v821
        %v823 = vrot.slane %v822, 2
        %v824 = vadd.f32 %v822, %v823
        %v825 = vrot.slane %v824, 1
        %v826 = vadd.f32 %v824, %v825
        %v827 = vmul.f32 %v775, %v775
        %v828 = vmul.f32 %v778, %v778
        %v829 = vmul.f32 %v783, %v783
        %v830 = vmul.f32 %v786, %v786
        %v831 = vmul.f32 %v791, %v791
        %v832 = vmul.f32 %v794, %v794
        %v833 = vmul.f32 %v799, %v799
        %v834 = vmul.f32 %v802, %v802
        %v835 = vsel %vm805, %v827, 0.0
        %v836 = vsel %vm805, %v828, 0.0
        %v837 = vadd.f32 %v835, %v836
        %v838 = vsel %vm805, %v829, 0.0
        %v839 = vadd.f32 %v837, %v838
        %v840 = vsel %vm805, %v830, 0.0
        %v841 = vadd.f32 %v839, %v840
        %v842 = vsel %vm805, %v831, 0.0
        %v843 = vadd.f32 %v841, %v842
        %v844 = vsel %vm805, %v832, 0.0
        %v845 = vadd.f32 %v843, %v844
        %v846 = vsel %vm805, %v833, 0.0
        %v847 = vadd.f32 %v845, %v846
        %v848 = vsel %vm805, %v834, 0.0
        %v849 = vadd.f32 %v847, %v848
        %v850 = vrot.slane %v849, 4
        %v851 = vadd.f32 %v849, %v850
        %v852 = vrot.slane %v851, 2
        %v853 = vadd.f32 %v851, %v852
        %v854 = vrot.slane %v853, 1
        %v855 = vadd.f32 %v853, %v854
        %vm856 = vcmask 1040384
        %v857 = vsel %vm856, %v826, %v855
        %v858 = vld [vmem:[#allocation20] sm:$0xff]
        %v859 = vld [vmem:[#allocation20 + $0x8] sm:$0xff]
        %v860 = vld [vmem:[#allocation20 + $0x10] sm:$0xff]
        %v861 = vld [vmem:[#allocation20 + $0x18] sm:$0xff]
        %v863 = vsel %vm805, %v857, 0
        %865 = vmatprep.subr.mxu0 0.0
        %866 = vmatpush1.msra.mxu0 %v858
        %867 = vmatprep.subr.mxu0 0.0
        %868 = vmatpush1.msra.mxu0 %v859
        %869 = vmatprep.subr.mxu0 0.0
        %870 = vmatpush1.msra.mxu0 %v860
        %871 = vmatprep.subr.mxu0 0.0
        %872 = vmatpush1.msra.mxu0 %v861
        %873 = vmatprep.subr.mxu0 0.0
        %874 = vmatpush1.msra.mxu0 0.0
        %875 = vmatprep.subr.mxu0 0.0
        %876 = vmatpush1.msra.mxu0 0.0
        %877 = vmatprep.subr.mxu0 0.0
        %878 = vmatpush1.msra.mxu0 0.0
        %879 = vmatprep.subr.mxu0 0.0
        %880 = vmatpush1.msra.mxu0 0.0
        %881 = vmatprep.subr.mxu0 0.0
        %882 = vmatpush1.msra.mxu0 0.0
        %883 = vmatprep.subr.mxu0 0.0
        %884 = vmatpush1.msra.mxu0 0.0
        %885 = vmatprep.subr.mxu0 0.0
        %886 = vmatpush1.msra.mxu0 0.0
        %887 = vmatprep.subr.mxu0 0.0
        %888 = vmatpush1.msra.mxu0 0.0
        %889 = vmatprep.subr.mxu0 0.0
        %890 = vmatpush1.msra.mxu0 0.0
        %891 = vmatprep.subr.mxu0 0.0
        %892 = vmatpush1.msra.mxu0 0.0
        %893 = vmatprep.subr.mxu0 0.0
        %894 = vmatpush1.msra.mxu0 0.0
        %895 = vmatprep.subr.mxu0 0.0
        %896 = vmatpush1.msra.mxu0 0.0
        %897 = vmatprep.subr.mxu0 0.0
        %898 = vmatpush1.msra.mxu0 0.0
        %899 = vmatprep.subr.mxu0 0.0
        %900 = vmatpush1.msra.mxu0 0.0
        %901 = vmatprep.subr.mxu0 0.0
        %902 = vmatpush1.msra.mxu0 0.0
        %903 = vmatprep.subr.mxu0 0.0
        %904 = vmatpush1.msra.mxu0 0.0
        %905 = vmatprep.subr.mxu0 0.0
        %906 = vmatpush1.msra.mxu0 0.0
        %907 = vmatprep.subr.mxu0 0.0
        %908 = vmatpush1.msra.mxu0 0.0
        %909 = vmatprep.subr.mxu0 0.0
        %910 = vmatpush1.msra.mxu0 0.0
        %911 = vmatprep.subr.mxu0 0.0
        %912 = vmatpush1.msra.mxu0 0.0
        %913 = vmatprep.subr.mxu0 0.0
        %914 = vmatpush1.msra.mxu0 0.0
        %915 = vmatprep.subr.mxu0 0.0
        %916 = vmatpush1.msra.mxu0 0.0
        %917 = vmatprep.subr.mxu0 0.0
        %918 = vmatpush1.msra.mxu0 0.0
        %919 = vmatprep.subr.mxu0 0.0
        %920 = vmatpush1.msra.mxu0 0.0
        %921 = vmatprep.subr.mxu0 0.0
        %922 = vmatpush1.msra.mxu0 0.0
        %923 = vmatprep.subr.mxu0 0.0
        %924 = vmatpush1.msra.mxu0 0.0
        %925 = vmatprep.subr.mxu0 0.0
        %926 = vmatpush1.msra.mxu0 0.0
        %927 = vmatprep.subr.mxu0 0.0
        %928 = vmatpush1.msra.mxu0 0.0
        %929 = vmatprep.mubr.f32.mxu0 0.0
        %930 = vmatmul.mubr.f32.gmra.mrb[0].mxu0 %v863
        %v931 = vpop.f32.mrb[0].mxu0
        %v932 = vadd.f32 0.0, %v931
        %v933 = vpop.f32.mrb[0].mxu0
        %934 = vdwg.mxu0
        %v935 = vmul.f32 %v932, 0.015625
        %v936 = vmul.f32 %v935, %v935
        %v938 = vrot.slane %v936, 7
        %v940 = vsub.f32 %v935, %v938
        %v941 = vadd.f32 %v940, 1e-05
        %v942 = vrsqrt.pop %v941
        %v944 = vrot.slane %v942, 1
        %v947 = vrot.slane %v935, 7
        %v949 = vsel %vm856, %v944, %v947
        %v950 = vld [vmem:[#allocation21] sm:$0xff]
        %v951 = vld [vmem:[#allocation21 + $0x8] sm:$0xff]
        %v952 = vld [vmem:[#allocation21 + $0x10] sm:$0xff]
        %v953 = vld [vmem:[#allocation21 + $0x18] sm:$0xff]
        %v955 = vsel %vm805, %v949, 0
        %957 = vmatprep.subr.mxu0 0.0
        %958 = vmatpush1.msra.mxu0 %v950
        %959 = vmatprep.subr.mxu0 0.0
        %960 = vmatpush1.msra.mxu0 %v951
        %961 = vmatprep.subr.mxu0 0.0
        %962 = vmatpush1.msra.mxu0 %v952
        %963 = vmatprep.subr.mxu0 0.0
        %964 = vmatpush1.msra.mxu0 %v953
        %965 = vmatprep.subr.mxu0 0.0
        %966 = vmatpush1.msra.mxu0 0.0
        %967 = vmatprep.subr.mxu0 0.0
        %968 = vmatpush1.msra.mxu0 0.0
        %969 = vmatprep.subr.mxu0 0.0
        %970 = vmatpush1.msra.mxu0 0.0
        %971 = vmatprep.subr.mxu0 0.0
        %972 = vmatpush1.msra.mxu0 0.0
        %973 = vmatprep.subr.mxu0 0.0
        %974 = vmatpush1.msra.mxu0 0.0
        %975 = vmatprep.subr.mxu0 0.0
        %976 = vmatpush1.msra.mxu0 0.0
        %977 = vmatprep.subr.mxu0 0.0
        %978 = vmatpush1.msra.mxu0 0.0
        %979 = vmatprep.subr.mxu0 0.0
        %980 = vmatpush1.msra.mxu0 0.0
        %981 = vmatprep.subr.mxu0 0.0
        %982 = vmatpush1.msra.mxu0 0.0
        %983 = vmatprep.subr.mxu0 0.0
        %984 = vmatpush1.msra.mxu0 0.0
        %985 = vmatprep.subr.mxu0 0.0
        %986 = vmatpush1.msra.mxu0 0.0
        %987 = vmatprep.subr.mxu0 0.0
        %988 = vmatpush1.msra.mxu0 0.0
        %989 = vmatprep.subr.mxu0 0.0
        %990 = vmatpush1.msra.mxu0 0.0
        %991 = vmatprep.subr.mxu0 0.0
        %992 = vmatpush1.msra.mxu0 0.0
        %993 = vmatprep.subr.mxu0 0.0
        %994 = vmatpush1.msra.mxu0 0.0
        %995 = vmatprep.subr.mxu0 0.0
        %996 = vmatpush1.msra.mxu0 0.0
        %997 = vmatprep.subr.mxu0 0.0
        %998 = vmatpush1.msra.mxu0 0.0
        %999 = vmatprep.subr.mxu0 0.0
        %1000 = vmatpush1.msra.mxu0 0.0
        %1001 = vmatprep.subr.mxu0 0.0
        %1002 = vmatpush1.msra.mxu0 0.0
        %1003 = vmatprep.subr.mxu0 0.0
        %1004 = vmatpush1.msra.mxu0 0.0
        %1005 = vmatprep.subr.mxu0 0.0
        %1006 = vmatpush1.msra.mxu0 0.0
        %1007 = vmatprep.subr.mxu0 0.0
        %1008 = vmatpush1.msra.mxu0 0.0
        %1009 = vmatprep.subr.mxu0 0.0
        %1010 = vmatpush1.msra.mxu0 0.0
        %1011 = vmatprep.subr.mxu0 0.0
        %1012 = vmatpush1.msra.mxu0 0.0
        %1013 = vmatprep.subr.mxu0 0.0
        %1014 = vmatpush1.msra.mxu0 0.0
        %1015 = vmatprep.subr.mxu0 0.0
        %1016 = vmatpush1.msra.mxu0 0.0
        %1017 = vmatprep.subr.mxu0 0.0
        %1018 = vmatpush1.msra.mxu0 0.0
        %1019 = vmatprep.subr.mxu0 0.0
        %1020 = vmatpush1.msra.mxu0 0.0
        %1021 = vmatprep.mubr.f32.mxu0 0.0
        %1022 = vmatmul.mubr.f32.gmra.mrb[0].mxu0 %v955
        %v1023 = vpop.f32.mrb[0].mxu0
        %v1024 = vadd.f32 0.0, %v1023
        %v1025 = vpop.f32.mrb[0].mxu0
        %1026 = vdwg.mxu0
        %v1027 = vld [vmem:[#allocation11] sm:$0x1]
        %v1028 = vmul.f32 %v1024, %v1027
        %v1029 = vld [vmem:[#allocation12] sm:$0x1]
        %v1031 = vrot.slane %v1028, 7
        %v1033 = vmul.f32 %v1024, %v1031
        %v1036 = vunpack.c.l.s4 1966171168
        %v1037 = vunpack.c.0.s8 %v1036
        %v1038 = vlaneseq
        %v1039 = vshrl.u32 %v1038, 7
        %v1040 = vsub.s32 %v1037, %v1039
        %v1041 = vrot.slane %v1033, %v1040
        %v1042 = vcombine.high %v1041, %v1041
        %v1044 = vunpack.c.l.s4 1966171168
        %v1045 = vunpack.c.0.s8 %v1044
        %v1046 = vlaneseq
        %v1047 = vshrl.u32 %v1046, 7
        %v1048 = vsub.s32 %v1045, %v1047
        %v1049 = vrot.slane %v1042, %v1048
        %v1051 = vsub.f32 %v1029, %v1049
        %v1052 = vlaneseq
        %v1053 = vshrl.u32 %v1052, 7
        %v1054 = vsub.s32 0, %v1053
        %v1055 = vrot.slane %v1028, %v1054
        %v1056 = vmul.f32 %v775, %v1055
        %v1057 = vmul.f32 %v778, %v1055
        %v1058 = vmul.f32 %v783, %v1055
        %v1059 = vmul.f32 %v786, %v1055
        %v1060 = vmul.f32 %v791, %v1055
        %v1061 = vmul.f32 %v794, %v1055
        %v1062 = vmul.f32 %v799, %v1055
        %v1063 = vmul.f32 %v802, %v1055
        %v1065 = vlaneseq
        %v1066 = vshrl.u32 %v1065, 7
        %v1067 = vsub.s32 0, %v1066
        %v1068 = vrot.slane %v1051, %v1067
        %v1070 = vadd.f32 %v1056, %v1068
        %v1071 = vadd.f32 %v1057, %v1068
        %v1072 = vadd.f32 %v1058, %v1068
        %v1073 = vadd.f32 %v1059, %v1068
        %v1074 = vadd.f32 %v1060, %v1068
        %v1075 = vadd.f32 %v1061, %v1068
        %v1076 = vadd.f32 %v1062, %v1068
        %v1077 = vadd.f32 %v1063, %v1068
        %v1078 = vmax.f32 %v1070, 0.0
        %v1079 = vmax.f32 %v1071, 0.0
        %v1080 = vmax.f32 %v1072, 0.0
        %v1081 = vmax.f32 %v1073, 0.0
        %v1082 = vmax.f32 %v1074, 0.0
        %v1083 = vmax.f32 %v1075, 0.0
        %v1084 = vmax.f32 %v1076, 0.0
        %v1085 = vmax.f32 %v1077, 0.0
        %1086 = vst.msk [vmem:[#allocation2] sm:$0xff] %vm805, 0.0
        %1087 = vst.msk [vmem:[#allocation2 + $0x8] sm:$0xff] %vm805, 0.0
        %1088 = vst.msk [vmem:[#allocation2 + $0x10] sm:$0xff] %vm805, 0.0
        %1089 = vst.msk [vmem:[#allocation2 + $0x18] sm:$0xff] %vm805, 0.0
        %1090 = vst.msk [vmem:[#allocation2 + $0x20] sm:$0xff] %vm805, 0.0
        %1091 = vst.msk [vmem:[#allocation2 + $0x28] sm:$0xff] %vm805, 0.0
        %1092 = vst.msk [vmem:[#allocation2 + $0x30] sm:$0xff] %vm805, 0.0
        %1093 = vst.msk [vmem:[#allocation2 + $0x38] sm:$0xff] %vm805, 0.0
        %1094 = vst.msk [vmem:[#allocation2 + $0x40] sm:$0xff] %vm805, 0.0
        %1095 = vst.msk [vmem:[#allocation2 + $0x48] sm:$0xff] %vm805, 0.0
        %1096 = vst.msk [vmem:[#allocation2 + $0x50] sm:$0xff] %vm805, 0.0
        %1097 = vst.msk [vmem:[#allocation2 + $0x58] sm:$0xff] %vm805, 0.0
        %1098 = vst.msk [vmem:[#allocation2 + $0x60] sm:$0xff] %vm805, 0.0
        %1099 = vst.msk [vmem:[#allocation2 + $0x68] sm:$0xff] %vm805, 0.0
        %1100 = vst.msk [vmem:[#allocation2 + $0x70] sm:$0xff] %vm805, 0.0
        %1101 = vst.msk [vmem:[#allocation2 + $0x78] sm:$0xff] %vm805, 0.0
        %1102 = vst.msk [vmem:[#allocation2 + $0x80] sm:$0xff] %vm805, 0.0
        %1103 = vst.msk [vmem:[#allocation2 + $0x88] sm:$0xff] %vm805, 0.0
        %1104 = vst.msk [vmem:[#allocation2 + $0x90] sm:$0xff] %vm805, 0.0
        %1105 = vst.msk [vmem:[#allocation2 + $0x98] sm:$0xff] %vm805, 0.0
        %1106 = vst.msk [vmem:[#allocation2 + $0xa0] sm:$0xff] %vm805, 0.0
        %1107 = vst.msk [vmem:[#allocation2 + $0x11] sm:$0xff] %vm805, %v1078
        %1108 = vst.msk [vmem:[#allocation2 + $0x21] sm:$0xff] %vm805, %v1079
        %1109 = vst.msk [vmem:[#allocation2 + $0x31] sm:$0xff] %vm805, %v1080
        %1110 = vst.msk [vmem:[#allocation2 + $0x41] sm:$0xff] %vm805, %v1081
        %1111 = vst.msk [vmem:[#allocation2 + $0x51] sm:$0xff] %vm805, %v1082
        %1112 = vst.msk [vmem:[#allocation2 + $0x61] sm:$0xff] %vm805, %v1083
        %1113 = vst.msk [vmem:[#allocation2 + $0x71] sm:$0xff] %vm805, %v1084
        %1114 = vst.msk [vmem:[#allocation2 + $0x81] sm:$0xff] %vm805, %v1085
        %v1115 = vld [vmem:[#allocation2] sm:$0xff]
        %v1116 = vld [vmem:[#allocation2 + $0x8] sm:$0xff]
        %v1117 = vld [vmem:[#allocation2 + $0x10] sm:$0xff]
        %v1118 = vld [vmem:[#allocation2 + $0x18] sm:$0xff]
        %v1119 = vld [vmem:[#allocation2 + $0x20] sm:$0xff]
        %v1120 = vld [vmem:[#allocation2 + $0x28] sm:$0xff]
        %v1121 = vld [vmem:[#allocation2 + $0x30] sm:$0xff]
        %v1122 = vld [vmem:[#allocation2 + $0x38] sm:$0xff]
        %v1123 = vld [vmem:[#allocation2 + $0x40] sm:$0xff]
        %v1124 = vld [vmem:[#allocation2 + $0x48] sm:$0xff]
        %v1125 = vld [vmem:[#allocation2 + $0x50] sm:$0xff]
        %v1126 = vld [vmem:[#allocation2 + $0x58] sm:$0xff]
        %v1127 = vld [vmem:[#allocation2 + $0x60] sm:$0xff]
        %v1128 = vld [vmem:[#allocation2 + $0x68] sm:$0xff]
        %v1129 = vld [vmem:[#allocation2 + $0x70] sm:$0xff]
        %v1130 = vld [vmem:[#allocation2 + $0x78] sm:$0xff]
        %v1131 = vpack.c.bf16 %v1116, %v1115
        %v1132 = vpack.c.bf16 %v1118, %v1117
        %v1133 = vpack.c.bf16 %v1120, %v1119
        %v1134 = vpack.c.bf16 %v1122, %v1121
        %v1135 = vpack.c.bf16 %v1124, %v1123
        %v1136 = vpack.c.bf16 %v1126, %v1125
        %v1137 = vpack.c.bf16 %v1128, %v1127
        %v1138 = vpack.c.bf16 %v1130, %v1129
        %v1139 = vld [vmem:[#allocation2 + $0x1] sm:$0xff]
        %v1140 = vld [vmem:[#allocation2 + $0x9] sm:$0xff]
        %v1141 = vld [vmem:[#allocation2 + $0x11] sm:$0xff]
        %v1142 = vld [vmem:[#allocation2 + $0x19] sm:$0xff]
        %v1143 = vld [vmem:[#allocation2 + $0x21] sm:$0xff]
        %v1144 = vld [vmem:[#allocation2 + $0x29] sm:$0xff]
        %v1145 = vld [vmem:[#allocation2 + $0x31] sm:$0xff]
        %v1146 = vld [vmem:[#allocation2 + $0x39] sm:$0xff]
        %v1147 = vld [vmem:[#allocation2 + $0x41] sm:$0xff]
        %v1148 = vld [vmem:[#allocation2 + $0x49] sm:$0xff]
        %v1149 = vld [vmem:[#allocation2 + $0x51] sm:$0xff]
        %v1150 = vld [vmem:[#allocation2 + $0x59] sm:$0xff]
        %v1151 = vld [vmem:[#allocation2 + $0x61] sm:$0xff]
        %v1152 = vld [vmem:[#allocation2 + $0x69] sm:$0xff]
        %v1153 = vld [vmem:[#allocation2 + $0x71] sm:$0xff]
        %v1154 = vld [vmem:[#allocation2 + $0x79] sm:$0xff]
        %v1155 = vpack.c.bf16 %v1140, %v1139
        %v1156 = vpack.c.bf16 %v1142, %v1141
        %v1157 = vpack.c.bf16 %v1144, %v1143
        %v1158 = vpack.c.bf16 %v1146, %v1145
        %v1159 = vpack.c.bf16 %v1148, %v1147
        %v1160 = vpack.c.bf16 %v1150, %v1149
        %v1161 = vpack.c.bf16 %v1152, %v1151
        %v1162 = vpack.c.bf16 %v1154, %v1153
        %v1163 = vld [vmem:[#allocation2 + $0x2] sm:$0xff]
        %v1164 = vld [vmem:[#allocation2 + $0xa] sm:$0xff]
        %v1165 = vld [vmem:[#allocation2 + $0x12] sm:$0xff]
        %v1166 = vld [vmem:[#allocation2 + $0x1a] sm:$0xff]
        %v1167 = vld [vmem:[#allocation2 + $0x22] sm:$0xff]
        %v1168 = vld [vmem:[#allocation2 + $0x2a] sm:$0xff]
        %v1169 = vld [vmem:[#allocation2 + $0x32] sm:$0xff]
        %v1170 = vld [vmem:[#allocation2 + $0x3a] sm:$0xff]
        %v1171 = vld [vmem:[#allocation2 + $0x42] sm:$0xff]
        %v1172 = vld [vmem:[#allocation2 + $0x4a] sm:$0xff]
        %v1173 = vld [vmem:[#allocation2 + $0x52] sm:$0xff]
        %v1174 = vld [vmem:[#allocation2 + $0x5a] sm:$0xff]
        %v1175 = vld [vmem:[#allocation2 + $0x62] sm:$0xff]
        %v1176 = vld [vmem:[#allocation2 + $0x6a] sm:$0xff]
        %v1177 = vld [vmem:[#allocation2 + $0x72] sm:$0xff]
        %v1178 = vld [vmem:[#allocation2 + $0x7a] sm:$0xff]
        %v1179 = vpack.c.bf16 %v1164, %v1163
        %v1180 = vpack.c.bf16 %v1166, %v1165
        %v1181 = vpack.c.bf16 %v1168, %v1167
        %v1182 = vpack.c.bf16 %v1170, %v1169
        %v1183 = vpack.c.bf16 %v1172, %v1171
        %v1184 = vpack.c.bf16 %v1174, %v1173
        %v1185 = vpack.c.bf16 %v1176, %v1175
        %v1186 = vpack.c.bf16 %v1178, %v1177
        %1195 = vrot.lane.b32.xlu0 %v1155, 32
        %v1196 = vpop.permute.xlu0 %1195
        %1197 = vrot.lane.b32.xlu0 %v1156, 32
        %v1198 = vpop.permute.xlu0 %1197
        %1199 = vrot.lane.b32.xlu0 %v1157, 32
        %v1200 = vpop.permute.xlu0 %1199
        %1201 = vrot.lane.b32.xlu0 %v1158, 32
        %v1202 = vpop.permute.xlu0 %1201
        %1203 = vrot.lane.b32.xlu0 %v1159, 32
        %v1204 = vpop.permute.xlu0 %1203
        %1205 = vrot.lane.b32.xlu0 %v1160, 32
        %v1206 = vpop.permute.xlu0 %1205
        %1207 = vrot.lane.b32.xlu0 %v1161, 32
        %v1208 = vpop.permute.xlu0 %1207
        %1209 = vrot.lane.b32.xlu0 %v1162, 32
        %v1210 = vpop.permute.xlu0 %1209
        %1219 = vrot.lane.b32.xlu0 %v1179, 64
        %v1220 = vpop.permute.xlu0 %1219
        %1221 = vrot.lane.b32.xlu0 %v1180, 64
        %v1222 = vpop.permute.xlu0 %1221
        %1223 = vrot.lane.b32.xlu0 %v1181, 64
        %v1224 = vpop.permute.xlu0 %1223
        %1225 = vrot.lane.b32.xlu0 %v1182, 64
        %v1226 = vpop.permute.xlu0 %1225
        %1227 = vrot.lane.b32.xlu0 %v1183, 64
        %v1228 = vpop.permute.xlu0 %1227
        %1229 = vrot.lane.b32.xlu0 %v1184, 64
        %v1230 = vpop.permute.xlu0 %1229
        %1231 = vrot.lane.b32.xlu0 %v1185, 64
        %v1232 = vpop.permute.xlu0 %1231
        %1233 = vrot.lane.b32.xlu0 %v1186, 64
        %v1234 = vpop.permute.xlu0 %1233
        %v1237 = vsel %vm805, %v1131, %v1196
        %v1240 = vsel %vm805, %v1132, %v1198
        %v1243 = vsel %vm805, %v1133, %v1200
        %v1246 = vsel %vm805, %v1134, %v1202
        %v1249 = vsel %vm805, %v1135, %v1204
        %v1252 = vsel %vm805, %v1136, %v1206
        %v1255 = vsel %vm805, %v1137, %v1208
        %v1258 = vsel %vm805, %v1138, %v1210
        %vm1259 = vcmask 523264
        %v1261 = vsel %vm1259, %v1237, %v1220
        %v1263 = vsel %vm1259, %v1240, %v1222
        %v1265 = vsel %vm1259, %v1243, %v1224
        %v1267 = vsel %vm1259, %v1246, %v1226
        %v1269 = vsel %vm1259, %v1249, %v1228
        %v1271 = vsel %vm1259, %v1252, %v1230
        %v1273 = vsel %vm1259, %v1255, %v1232
        %v1275 = vsel %vm1259, %v1258, %v1234
        %v1276 = vld [vmem:[#allocation8] sm:$0xf]
        %v1277 = vld [vmem:[#allocation8 + $0x4] sm:$0xf]
        %v1278 = vld [vmem:[#allocation8 + $0x8] sm:$0xf]
        %v1279 = vld [vmem:[#allocation8 + $0xc] sm:$0xf]
        %v1280 = vld [vmem:[#allocation8 + $0x10] sm:$0xf]
        %v1281 = vld [vmem:[#allocation8 + $0x14] sm:$0xf]
        %v1282 = vld [vmem:[#allocation8 + $0x18] sm:$0xf]
        %v1283 = vld [vmem:[#allocation8 + $0x1c] sm:$0xf]
        %v1284 = vld [vmem:[#allocation8 + $0x20] sm:$0xf]
        %v1285 = vld [vmem:[#allocation8 + $0x24] sm:$0xf]
        %v1286 = vld [vmem:[#allocation8 + $0x28] sm:$0xf]
        %v1287 = vld [vmem:[#allocation8 + $0x2c] sm:$0xf]
        %v1288 = vld [vmem:[#allocation2 + $0x80] sm:$0xff]
        %v1289 = vld [vmem:[#allocation2 + $0x88] sm:$0xff]
        %v1290 = vpack.c.bf16 %v1289, %v1288
        %v1291 = vld [vmem:[#allocation2 + $0x81] sm:$0xff]
        %v1292 = vld [vmem:[#allocation2 + $0x89] sm:$0xff]
        %v1293 = vpack.c.bf16 %v1292, %v1291
        %v1294 = vld [vmem:[#allocation2 + $0x82] sm:$0xff]
        %v1295 = vld [vmem:[#allocation2 + $0x8a] sm:$0xff]
        %v1296 = vpack.c.bf16 %v1295, %v1294
        %1298 = vrot.lane.b32.xlu0 %v1293, 32
        %v1299 = vpop.permute.xlu0 %1298
        %1301 = vrot.lane.b32.xlu0 %v1296, 64
        %v1302 = vpop.permute.xlu0 %1301
        %v1305 = vsel %vm805, %v1290, %v1299
        %v1307 = vsel %vm1259, %v1305, %v1302
        %s1308 = scalar_lea.vmem [#allocation8], 48
        %v1309 = vld [vmem:[%s1308] sm:$0xf]
        %v1310 = vld [vmem:[%s1308 + $0x4] sm:$0xf]
        %v1311 = vld [vmem:[%s1308 + $0x8] sm:$0xf]
        %v1312 = vld [vmem:[%s1308 + $0xc] sm:$0xf]
        %v1313 = vld [vmem:[%s1308 + $0x10] sm:$0xf]
        %v1314 = vld [vmem:[%s1308 + $0x14] sm:$0xf]
        %v1315 = vld [vmem:[%s1308 + $0x18] sm:$0xf]
        %v1316 = vld [vmem:[%s1308 + $0x1c] sm:$0xf]
        %v1317 = vld [vmem:[%s1308 + $0x20] sm:$0xf]
        %v1318 = vld [vmem:[%s1308 + $0x24] sm:$0xf]
        %v1319 = vld [vmem:[%s1308 + $0x28] sm:$0xf]
        %v1320 = vld [vmem:[%s1308 + $0x2c] sm:$0xf]
        %v1333 = vunpack.c.l.b16 %v1309
        %v1334 = vunpack.c.l.b16 %v1310
        %v1335 = vunpack.c.l.b16 %v1311
        %v1336 = vunpack.c.l.b16 %v1312
        %v1337 = vunpack.c.l.b16 %v1313
        %v1338 = vunpack.c.l.b16 %v1314
        %v1339 = vunpack.c.l.b16 %v1315
        %v1340 = vunpack.c.l.b16 %v1316
        %v1341 = vunpack.c.l.b16 %v1317
        %v1342 = vunpack.c.l.b16 %v1318
        %v1343 = vunpack.c.l.b16 %v1319
        %v1344 = vunpack.c.l.b16 %v1320
        %v1345 = vpack.c.b16 %v1334, %v1333
        %v1346 = vpack.c.b16 %v1336, %v1335
        %v1347 = vpack.c.b16 %v1338, %v1337
        %v1348 = vpack.c.b16 %v1340, %v1339
        %v1349 = vpack.c.b16 %v1342, %v1341
        %v1350 = vpack.c.b16 %v1344, %v1343
        %vm1357 = vcmask 785408
        %v1358 = vsel %vm1357, %v1263, 0
        %v1360 = vsel %vm1357, %v1265, 0
        %v1362 = vsel %vm1357, %v1267, 0
        %v1364 = vsel %vm1357, %v1269, 0
        %v1366 = vsel %vm1357, %v1271, 0
        %v1368 = vsel %vm1357, %v1273, 0
        %v1370 = vsel %vm1357, %v1275, 0
        %v1372 = vsel %vm1357, %v1307, 0
        %1374 = vmatprep.subr.bf16.mxu0 0
        %1375 = vmatpush1.bf16.msra.mxu0 %v1345
        %1376 = vmatprep.subr.bf16.mxu0 0
        %1377 = vmatpush1.bf16.msra.mxu0 %v1346
        %1378 = vmatprep.subr.bf16.mxu0 0
        %1379 = vmatpush1.bf16.msra.mxu0 %v1347
        %1380 = vmatprep.subr.bf16.mxu0 0
        %1381 = vmatpush1.bf16.msra.mxu0 %v1348
        %1382 = vmatprep.subr.bf16.mxu0 0
        %1383 = vmatpush1.bf16.msra.mxu0 %v1349
        %1384 = vmatprep.subr.bf16.mxu0 0
        %1385 = vmatpush1.bf16.msra.mxu0 %v1350
        %1386 = vmatprep.subr.bf16.mxu0 0
        %1387 = vmatpush1.bf16.msra.mxu0 0
        %1388 = vmatprep.subr.bf16.mxu0 0
        %1389 = vmatpush1.bf16.msra.mxu0 0
        %1390 = vmatprep.subr.bf16.mxu0 0
        %1391 = vmatpush1.bf16.msra.mxu0 0
        %1392 = vmatprep.subr.bf16.mxu0 0
        %1393 = vmatpush1.bf16.msra.mxu0 0
        %1394 = vmatprep.subr.bf16.mxu0 0
        %1395 = vmatpush1.bf16.msra.mxu0 0
        %1396 = vmatprep.subr.bf16.mxu0 0
        %1397 = vmatpush1.bf16.msra.mxu0 0
        %1398 = vmatprep.subr.bf16.mxu0 0
        %1399 = vmatpush1.bf16.msra.mxu0 0
        %1400 = vmatprep.subr.bf16.mxu0 0
        %1401 = vmatpush1.bf16.msra.mxu0 0
        %1402 = vmatprep.subr.bf16.mxu0 0
        %1403 = vmatpush1.bf16.msra.mxu0 0
        %1404 = vmatprep.subr.bf16.mxu0 0
        %1405 = vmatpush1.bf16.msra.mxu0 0
        %1406 = vmatprep.mubr.bf16.mxu0 0
        %1407 = vmatmul.mubr.bf16.gmra.mrb[0].mxu0 %v1358
        %v1408 = vpop.f32.mrb[0].mxu0
        %v1409 = vadd.f32 0.0, %v1408
        %v1410 = vpop.f32.mrb[0].mxu0
        %v1411 = vpop.f32.mrb[0].mxu0
        %v1412 = vpop.f32.mrb[0].mxu0
        %1413 = vmatprep.mubr.bf16.mxu0 0
        %1414 = vmatmul.mubr.bf16.gmra.mrb[0].mxu0 %v1360
        %v1415 = vpop.f32.mrb[0].mxu0
        %v1416 = vadd.f32 0.0, %v1415
        %v1417 = vpop.f32.mrb[0].mxu0
        %v1418 = vpop.f32.mrb[0].mxu0
        %v1419 = vpop.f32.mrb[0].mxu0
        %1420 = vmatprep.mubr.bf16.mxu0 0
        %1421 = vmatmul.mubr.bf16.gmra.mrb[0].mxu0 %v1362
        %v1422 = vpop.f32.mrb[0].mxu0
        %v1423 = vadd.f32 0.0, %v1422
        %v1424 = vpop.f32.mrb[0].mxu0
        %v1425 = vpop.f32.mrb[0].mxu0
        %v1426 = vpop.f32.mrb[0].mxu0
        %1427 = vmatprep.mubr.bf16.mxu0 0
        %1428 = vmatmul.mubr.bf16.gmra.mrb[0].mxu0 %v1364
        %v1429 = vpop.f32.mrb[0].mxu0
        %v1430 = vadd.f32 0.0, %v1429
        %v1431 = vpop.f32.mrb[0].mxu0
        %v1432 = vpop.f32.mrb[0].mxu0
        %v1433 = vpop.f32.mrb[0].mxu0
        %1434 = vmatprep.mubr.bf16.mxu0 0
        %1435 = vmatmul.mubr.bf16.gmra.mrb[0].mxu0 %v1366
        %v1436 = vpop.f32.mrb[0].mxu0
        %v1437 = vadd.f32 0.0, %v1436
        %v1438 = vpop.f32.mrb[0].mxu0
        %v1439 = vpop.f32.mrb[0].mxu0
        %v1440 = vpop.f32.mrb[0].mxu0
        %1441 = vmatprep.mubr.bf16.mxu0 0
        %1442 = vmatmul.mubr.bf16.gmra.mrb[0].mxu0 %v1368
        %v1443 = vpop.f32.mrb[0].mxu0
        %v1444 = vadd.f32 0.0, %v1443
        %v1445 = vpop.f32.mrb[0].mxu0
        %v1446 = vpop.f32.mrb[0].mxu0
        %v1447 = vpop.f32.mrb[0].mxu0
        %1448 = vmatprep.mubr.bf16.mxu0 0
        %1449 = vmatmul.mubr.bf16.gmra.mrb[0].mxu0 %v1370
        %v1450 = vpop.f32.mrb[0].mxu0
        %v1451 = vadd.f32 0.0, %v1450
        %v1452 = vpop.f32.mrb[0].mxu0
        %v1453 = vpop.f32.mrb[0].mxu0
        %v1454 = vpop.f32.mrb[0].mxu0
        %1455 = vmatprep.mubr.bf16.mxu0 0
        %1456 = vmatmul.mubr.bf16.gmra.mrb[0].mxu0 %v1372
        %v1457 = vpop.f32.mrb[0].mxu0
        %v1458 = vadd.f32 0.0, %v1457
        %v1459 = vpop.f32.mrb[0].mxu0
        %v1460 = vpop.f32.mrb[0].mxu0
        %v1461 = vpop.f32.mrb[0].mxu0
        %1462 = vdwg.mxu0
        %v1475 = vunpack.c.l.b16 %v1276
        %v1476 = vunpack.c.l.b16 %v1277
        %v1477 = vunpack.c.l.b16 %v1278
        %v1478 = vunpack.c.l.b16 %v1279
        %v1479 = vunpack.c.l.b16 %v1280
        %v1480 = vunpack.c.l.b16 %v1281
        %v1481 = vunpack.c.l.b16 %v1282
        %v1482 = vunpack.c.l.b16 %v1283
        %v1483 = vunpack.c.l.b16 %v1284
        %v1484 = vunpack.c.l.b16 %v1285
        %v1485 = vunpack.c.l.b16 %v1286
        %v1486 = vunpack.c.l.b16 %v1287
        %v1487 = vpack.c.b16 %v1476, %v1475
        %v1488 = vpack.c.b16 %v1478, %v1477
        %v1489 = vpack.c.b16 %v1480, %v1479
        %v1490 = vpack.c.b16 %v1482, %v1481
        %v1491 = vpack.c.b16 %v1484, %v1483
        %v1492 = vpack.c.b16 %v1486, %v1485
        %v1499 = vsel %vm1357, %v1261, 0
        %1501 = vmatprep.subr.bf16.mxu0 0
        %1502 = vmatpush1.bf16.msra.mxu0 %v1487
        %1503 = vmatprep.subr.bf16.mxu0 0
        %1504 = vmatpush1.bf16.msra.mxu0 %v1488
        %1505 = vmatprep.subr.bf16.mxu0 0
        %1506 = vmatpush1.bf16.msra.mxu0 %v1489
        %1507 = vmatprep.subr.bf16.mxu0 0
        %1508 = vmatpush1.bf16.msra.mxu0 %v1490
        %1509 = vmatprep.subr.bf16.mxu0 0
        %1510 = vmatpush1.bf16.msra.mxu0 %v1491
        %1511 = vmatprep.subr.bf16.mxu0 0
        %1512 = vmatpush1.bf16.msra.mxu0 %v1492
        %1513 = vmatprep.subr.bf16.mxu0 0
        %1514 = vmatpush1.bf16.msra.mxu0 0
        %1515 = vmatprep.subr.bf16.mxu0 0
        %1516 = vmatpush1.bf16.msra.mxu0 0
        %1517 = vmatprep.subr.bf16.mxu0 0
        %1518 = vmatpush1.bf16.msra.mxu0 0
        %1519 = vmatprep.subr.bf16.mxu0 0
        %1520 = vmatpush1.bf16.msra.mxu0 0
        %1521 = vmatprep.subr.bf16.mxu0 0
        %1522 = vmatpush1.bf16.msra.mxu0 0
        %1523 = vmatprep.subr.bf16.mxu0 0
        %1524 = vmatpush1.bf16.msra.mxu0 0
        %1525 = vmatprep.subr.bf16.mxu0 0
        %1526 = vmatpush1.bf16.msra.mxu0 0
        %1527 = vmatprep.subr.bf16.mxu0 0
        %1528 = vmatpush1.bf16.msra.mxu0 0
        %1529 = vmatprep.subr.bf16.mxu0 0
        %1530 = vmatpush1.bf16.msra.mxu0 0
        %1531 = vmatprep.subr.bf16.mxu0 0
        %1532 = vmatpush1.bf16.msra.mxu0 0
        %1533 = vmatprep.mubr.bf16.mxu0 0
        %1534 = vmatmul.mubr.bf16.gmra.mrb[0].mxu0 %v1499
        %v1535 = vpop.f32.mrb[0].mxu0
        %v1536 = vadd.f32 %v1409, %v1535
        %v1537 = vpop.f32.mrb[0].mxu0
        %v1538 = vpop.f32.mrb[0].mxu0
        %v1539 = vpop.f32.mrb[0].mxu0
        %1540 = vmatprep.mubr.bf16.mxu0 0
        %1541 = vmatmul.mubr.bf16.gmra.mrb[0].mxu0 %v1358
        %v1542 = vpop.f32.mrb[0].mxu0
        %v1543 = vadd.f32 %v1416, %v1542
        %v1544 = vpop.f32.mrb[0].mxu0
        %v1545 = vpop.f32.mrb[0].mxu0
        %v1546 = vpop.f32.mrb[0].mxu0
        %1547 = vmatprep.mubr.bf16.mxu0 0
        %1548 = vmatmul.mubr.bf16.gmra.mrb[0].mxu0 %v1360
        %v1549 = vpop.f32.mrb[0].mxu0
        %v1550 = vadd.f32 %v1423, %v1549
        %v1551 = vpop.f32.mrb[0].mxu0
        %v1552 = vpop.f32.mrb[0].mxu0
        %v1553 = vpop.f32.mrb[0].mxu0
        %1554 = vmatprep.mubr.bf16.mxu0 0
        %1555 = vmatmul.mubr.bf16.gmra.mrb[0].mxu0 %v1362
        %v1556 = vpop.f32.mrb[0].mxu0
        %v1557 = vadd.f32 %v1430, %v1556
        %v1558 = vpop.f32.mrb[0].mxu0
        %v1559 = vpop.f32.mrb[0].mxu0
        %v1560 = vpop.f32.mrb[0].mxu0
        %1561 = vmatprep.mubr.bf16.mxu0 0
        %1562 = vmatmul.mubr.bf16.gmra.mrb[0].mxu0 %v1364
        %v1563 = vpop.f32.mrb[0].mxu0
        %v1564 = vadd.f32 %v1437, %v1563
        %v1565 = vpop.f32.mrb[0].mxu0
        %v1566 = vpop.f32.mrb[0].mxu0
        %v1567 = vpop.f32.mrb[0].mxu0
        %1568 = vmatprep.mubr.bf16.mxu0 0
        %1569 = vmatmul.mubr.bf16.gmra.mrb[0].mxu0 %v1366
        %v1570 = vpop.f32.mrb[0].mxu0
        %v1571 = vadd.f32 %v1444, %v1570
        %v1572 = vpop.f32.mrb[0].mxu0
        %v1573 = vpop.f32.mrb[0].mxu0
        %v1574 = vpop.f32.mrb[0].mxu0
        %1575 = vmatprep.mubr.bf16.mxu0 0
        %1576 = vmatmul.mubr.bf16.gmra.mrb[0].mxu0 %v1368
        %v1577 = vpop.f32.mrb[0].mxu0
        %v1578 = vadd.f32 %v1451, %v1577
        %v1579 = vpop.f32.mrb[0].mxu0
        %v1580 = vpop.f32.mrb[0].mxu0
        %v1581 = vpop.f32.mrb[0].mxu0
        %1582 = vmatprep.mubr.bf16.mxu0 0
        %1583 = vmatmul.mubr.bf16.gmra.mrb[0].mxu0 %v1370
        %v1584 = vpop.f32.mrb[0].mxu0
        %v1585 = vadd.f32 %v1458, %v1584
        %v1586 = vpop.f32.mrb[0].mxu0
        %v1587 = vpop.f32.mrb[0].mxu0
        %v1588 = vpop.f32.mrb[0].mxu0
        %1589 = vdwg.mxu0
        %v1590 = vld [vmem:[#allocation2 + $0x20] sm:$0xff]
        %v1591 = vld [vmem:[#allocation2 + $0x28] sm:$0xff]
        %v1592 = vld [vmem:[#allocation2 + $0x30] sm:$0xff]
        %v1593 = vld [vmem:[#allocation2 + $0x38] sm:$0xff]
        %v1594 = vld [vmem:[#allocation2 + $0x40] sm:$0xff]
        %v1595 = vld [vmem:[#allocation2 + $0x48] sm:$0xff]
        %v1596 = vld [vmem:[#allocation2 + $0x50] sm:$0xff]
        %v1597 = vld [vmem:[#allocation2 + $0x58] sm:$0xff]
        %v1598 = vld [vmem:[#allocation2 + $0x60] sm:$0xff]
        %v1599 = vld [vmem:[#allocation2 + $0x68] sm:$0xff]
        %v1600 = vld [vmem:[#allocation2 + $0x70] sm:$0xff]
        %v1601 = vld [vmem:[#allocation2 + $0x78] sm:$0xff]
        %v1602 = vld [vmem:[#allocation2 + $0x80] sm:$0xff]
        %v1603 = vld [vmem:[#allocation2 + $0x88] sm:$0xff]
        %v1604 = vld [vmem:[#allocation2 + $0x90] sm:$0xff]
        %v1605 = vld [vmem:[#allocation2 + $0x98] sm:$0xff]
        %v1606 = vpack.c.bf16 %v1591, %v1590
        %v1607 = vpack.c.bf16 %v1593, %v1592
        %v1608 = vpack.c.bf16 %v1595, %v1594
        %v1609 = vpack.c.bf16 %v1597, %v1596
        %v1610 = vpack.c.bf16 %v1599, %v1598
        %v1611 = vpack.c.bf16 %v1601, %v1600
        %v1612 = vpack.c.bf16 %v1603, %v1602
        %v1613 = vpack.c.bf16 %v1605, %v1604
        %v1614 = vld [vmem:[#allocation2 + $0x21] sm:$0xff]
        %v1615 = vld [vmem:[#allocation2 + $0x29] sm:$0xff]
        %v1616 = vld [vmem:[#allocation2 + $0x31] sm:$0xff]
        %v1617 = vld [vmem:[#allocation2 + $0x39] sm:$0xff]
        %v1618 = vld [vmem:[#allocation2 + $0x41] sm:$0xff]
        %v1619 = vld [vmem:[#allocation2 + $0x49] sm:$0xff]
        %v1620 = vld [vmem:[#allocation2 + $0x51] sm:$0xff]
        %v1621 = vld [vmem:[#allocation2 + $0x59] sm:$0xff]
        %v1622 = vld [vmem:[#allocation2 + $0x61] sm:$0xff]
        %v1623 = vld [vmem:[#allocation2 + $0x69] sm:$0xff]
        %v1624 = vld [vmem:[#allocation2 + $0x71] sm:$0xff]
        %v1625 = vld [vmem:[#allocation2 + $0x79] sm:$0xff]
        %v1626 = vld [vmem:[#allocation2 + $0x81] sm:$0xff]
        %v1627 = vld [vmem:[#allocation2 + $0x89] sm:$0xff]
        %v1628 = vld [vmem:[#allocation2 + $0x91] sm:$0xff]
        %v1629 = vld [vmem:[#allocation2 + $0x99] sm:$0xff]
        %v1630 = vpack.c.bf16 %v1615, %v1614
        %v1631 = vpack.c.bf16 %v1617, %v1616
        %v1632 = vpack.c.bf16 %v1619, %v1618
        %v1633 = vpack.c.bf16 %v1621, %v1620
        %v1634 = vpack.c.bf16 %v1623, %v1622
        %v1635 = vpack.c.bf16 %v1625, %v1624
        %v1636 = vpack.c.bf16 %v1627, %v1626
        %v1637 = vpack.c.bf16 %v1629, %v1628
        %v1638 = vld [vmem:[#allocation2 + $0x22] sm:$0xff]
        %v1639 = vld [vmem:[#allocation2 + $0x2a] sm:$0xff]
        %v1640 = vld [vmem:[#allocation2 + $0x32] sm:$0xff]
        %v1641 = vld [vmem:[#allocation2 + $0x3a] sm:$0xff]
        %v1642 = vld [vmem:[#allocation2 + $0x42] sm:$0xff]
        %v1643 = vld [vmem:[#allocation2 + $0x4a] sm:$0xff]
        %v1644 = vld [vmem:[#allocation2 + $0x52] sm:$0xff]
        %v1645 = vld [vmem:[#allocation2 + $0x5a] sm:$0xff]
        %v1646 = vld [vmem:[#allocation2 + $0x62] sm:$0xff]
        %v1647 = vld [vmem:[#allocation2 + $0x6a] sm:$0xff]
        %v1648 = vld [vmem:[#allocation2 + $0x72] sm:$0xff]
        %v1649 = vld [vmem:[#allocation2 + $0x7a] sm:$0xff]
        %v1650 = vld [vmem:[#allocation2 + $0x82] sm:$0xff]
        %v1651 = vld [vmem:[#allocation2 + $0x8a] sm:$0xff]
        %v1652 = vld [vmem:[#allocation2 + $0x92] sm:$0xff]
        %v1653 = vld [vmem:[#allocation2 + $0x9a] sm:$0xff]
        %v1654 = vpack.c.bf16 %v1639, %v1638
        %v1655 = vpack.c.bf16 %v1641, %v1640
        %v1656 = vpack.c.bf16 %v1643, %v1642
        %v1657 = vpack.c.bf16 %v1645, %v1644
        %v1658 = vpack.c.bf16 %v1647, %v1646
        %v1659 = vpack.c.bf16 %v1649, %v1648
        %v1660 = vpack.c.bf16 %v1651, %v1650
        %v1661 = vpack.c.bf16 %v1653, %v1652
        %1670 = vrot.lane.b32.xlu0 %v1630, 32
        %v1671 = vpop.permute.xlu0 %1670
        %1672 = vrot.lane.b32.xlu0 %v1631, 32
        %v1673 = vpop.permute.xlu0 %1672
        %1674 = vrot.lane.b32.xlu0 %v1632, 32
        %v1675 = vpop.permute.xlu0 %1674
        %1676 = vrot.lane.b32.xlu0 %v1633, 32
        %v1677 = vpop.permute.xlu0 %1676
        %1678 = vrot.lane.b32.xlu0 %v1634, 32
        %v1679 = vpop.permute.xlu0 %1678
        %1680 = vrot.lane.b32.xlu0 %v1635, 32
        %v1681 = vpop.permute.xlu0 %1680
        %1682 = vrot.lane.b32.xlu0 %v1636, 32
        %v1683 = vpop.permute.xlu0 %1682
        %1684 = vrot.lane.b32.xlu0 %v1637, 32
        %v1685 = vpop.permute.xlu0 %1684
        %1694 = vrot.lane.b32.xlu0 %v1654, 64
        %v1695 = vpop.permute.xlu0 %1694
        %1696 = vrot.lane.b32.xlu0 %v1655, 64
        %v1697 = vpop.permute.xlu0 %1696
        %1698 = vrot.lane.b32.xlu0 %v1656, 64
        %v1699 = vpop.permute.xlu0 %1698
        %1700 = vrot.lane.b32.xlu0 %v1657, 64
        %v1701 = vpop.permute.xlu0 %1700
        %1702 = vrot.lane.b32.xlu0 %v1658, 64
        %v1703 = vpop.permute.xlu0 %1702
        %1704 = vrot.lane.b32.xlu0 %v1659, 64
        %v1705 = vpop.permute.xlu0 %1704
        %1706 = vrot.lane.b32.xlu0 %v1660, 64
        %v1707 = vpop.permute.xlu0 %1706
        %1708 = vrot.lane.b32.xlu0 %v1661, 64
        %v1709 = vpop.permute.xlu0 %1708
        %v1712 = vsel %vm805, %v1606, %v1671
        %v1715 = vsel %vm805, %v1607, %v1673
        %v1718 = vsel %vm805, %v1608, %v1675
        %v1721 = vsel %vm805, %v1609, %v1677
        %v1724 = vsel %vm805, %v1610, %v1679
        %v1727 = vsel %vm805, %v1611, %v1681
        %v1730 = vsel %vm805, %v1612, %v1683
        %v1733 = vsel %vm805, %v1613, %v1685
        %v1735 = vsel %vm1259, %v1712, %v1695
        %v1737 = vsel %vm1259, %v1715, %v1697
        %v1739 = vsel %vm1259, %v1718, %v1699
        %v1741 = vsel %vm1259, %v1721, %v1701
        %v1743 = vsel %vm1259, %v1724, %v1703
        %v1745 = vsel %vm1259, %v1727, %v1705
        %v1747 = vsel %vm1259, %v1730, %v1707
        %v1749 = vsel %vm1259, %v1733, %v1709
        %s1750 = scalar_lea.vmem [#allocation8], 96
        %v1751 = vld [vmem:[%s1750] sm:$0xf]
        %v1752 = vld [vmem:[%s1750 + $0x4] sm:$0xf]
        %v1753 = vld [vmem:[%s1750 + $0x8] sm:$0xf]
        %v1754 = vld [vmem:[%s1750 + $0xc] sm:$0xf]
        %v1755 = vld [vmem:[%s1750 + $0x10] sm:$0xf]
        %v1756 = vld [vmem:[%s1750 + $0x14] sm:$0xf]
        %v1757 = vld [vmem:[%s1750 + $0x18] sm:$0xf]
        %v1758 = vld [vmem:[%s1750 + $0x1c] sm:$0xf]
        %v1759 = vld [vmem:[%s1750 + $0x20] sm:$0xf]
        %v1760 = vld [vmem:[%s1750 + $0x24] sm:$0xf]
        %v1761 = vld [vmem:[%s1750 + $0x28] sm:$0xf]
        %v1762 = vld [vmem:[%s1750 + $0x2c] sm:$0xf]
        %v1775 = vunpack.c.l.b16 %v1751
        %v1776 = vunpack.c.l.b16 %v1752
        %v1777 = vunpack.c.l.b16 %v1753
        %v1778 = vunpack.c.l.b16 %v1754
        %v1779 = vunpack.c.l.b16 %v1755
        %v1780 = vunpack.c.l.b16 %v1756
        %v1781 = vunpack.c.l.b16 %v1757
        %v1782 = vunpack.c.l.b16 %v1758
        %v1783 = vunpack.c.l.b16 %v1759
        %v1784 = vunpack.c.l.b16 %v1760
        %v1785 = vunpack.c.l.b16 %v1761
        %v1786 = vunpack.c.l.b16 %v1762
        %v1787 = vpack.c.b16 %v1776, %v1775
        %v1788 = vpack.c.b16 %v1778, %v1777
        %v1789 = vpack.c.b16 %v1780, %v1779
        %v1790 = vpack.c.b16 %v1782, %v1781
        %v1791 = vpack.c.b16 %v1784, %v1783
        %v1792 = vpack.c.b16 %v1786, %v1785
        %v1799 = vsel %vm1357, %v1735, 0
        %v1801 = vsel %vm1357, %v1737, 0
        %v1803 = vsel %vm1357, %v1739, 0
        %v1805 = vsel %vm1357, %v1741, 0
        %v1807 = vsel %vm1357, %v1743, 0
        %v1809 = vsel %vm1357, %v1745, 0
        %v1811 = vsel %vm1357, %v1747, 0
        %v1813 = vsel %vm1357, %v1749, 0
        %1815 = vmatprep.subr.bf16.mxu0 0
        %1816 = vmatpush1.bf16.msra.mxu0 %v1787
        %1817 = vmatprep.subr.bf16.mxu0 0
        %1818 = vmatpush1.bf16.msra.mxu0 %v1788
        %1819 = vmatprep.subr.bf16.mxu0 0
        %1820 = vmatpush1.bf16.msra.mxu0 %v1789
        %1821 = vmatprep.subr.bf16.mxu0 0
        %1822 = vmatpush1.bf16.msra.mxu0 %v1790
        %1823 = vmatprep.subr.bf16.mxu0 0
        %1824 = vmatpush1.bf16.msra.mxu0 %v1791
        %1825 = vmatprep.subr.bf16.mxu0 0
        %1826 = vmatpush1.bf16.msra.mxu0 %v1792
        %1827 = vmatprep.subr.bf16.mxu0 0
        %1828 = vmatpush1.bf16.msra.mxu0 0
        %1829 = vmatprep.subr.bf16.mxu0 0
        %1830 = vmatpush1.bf16.msra.mxu0 0
        %1831 = vmatprep.subr.bf16.mxu0 0
        %1832 = vmatpush1.bf16.msra.mxu0 0
        %1833 = vmatprep.subr.bf16.mxu0 0
        %1834 = vmatpush1.bf16.msra.mxu0 0
        %1835 = vmatprep.subr.bf16.mxu0 0
        %1836 = vmatpush1.bf16.msra.mxu0 0
        %1837 = vmatprep.subr.bf16.mxu0 0
        %1838 = vmatpush1.bf16.msra.mxu0 0
        %1839 = vmatprep.subr.bf16.mxu0 0
        %1840 = vmatpush1.bf16.msra.mxu0 0
        %1841 = vmatprep.subr.bf16.mxu0 0
        %1842 = vmatpush1.bf16.msra.mxu0 0
        %1843 = vmatprep.subr.bf16.mxu0 0
        %1844 = vmatpush1.bf16.msra.mxu0 0
        %1845 = vmatprep.subr.bf16.mxu0 0
        %1846 = vmatpush1.bf16.msra.mxu0 0
        %1847 = vmatprep.mubr.bf16.mxu0 0
        %1848 = vmatmul.mubr.bf16.gmra.mrb[0].mxu0 %v1799
        %v1849 = vpop.f32.mrb[0].mxu0
        %v1850 = vadd.f32 0.0, %v1849
        %v1851 = vpop.f32.mrb[0].mxu0
        %v1852 = vpop.f32.mrb[0].mxu0
        %v1853 = vpop.f32.mrb[0].mxu0
        %1854 = vmatprep.mubr.bf16.mxu0 0
        %1855 = vmatmul.mubr.bf16.gmra.mrb[0].mxu0 %v1801
        %v1856 = vpop.f32.mrb[0].mxu0
        %v1857 = vadd.f32 0.0, %v1856
        %v1858 = vpop.f32.mrb[0].mxu0
        %v1859 = vpop.f32.mrb[0].mxu0
        %v1860 = vpop.f32.mrb[0].mxu0
        %1861 = vmatprep.mubr.bf16.mxu0 0
        %1862 = vmatmul.mubr.bf16.gmra.mrb[0].mxu0 %v1803
        %v1863 = vpop.f32.mrb[0].mxu0
        %v1864 = vadd.f32 0.0, %v1863
        %v1865 = vpop.f32.mrb[0].mxu0
        %v1866 = vpop.f32.mrb[0].mxu0
        %v1867 = vpop.f32.mrb[0].mxu0
        %1868 = vmatprep.mubr.bf16.mxu0 0
        %1869 = vmatmul.mubr.bf16.gmra.mrb[0].mxu0 %v1805
        %v1870 = vpop.f32.mrb[0].mxu0
        %v1871 = vadd.f32 0.0, %v1870
        %v1872 = vpop.f32.mrb[0].mxu0
        %v1873 = vpop.f32.mrb[0].mxu0
        %v1874 = vpop.f32.mrb[0].mxu0
        %1875 = vmatprep.mubr.bf16.mxu0 0
        %1876 = vmatmul.mubr.bf16.gmra.mrb[0].mxu0 %v1807
        %v1877 = vpop.f32.mrb[0].mxu0
        %v1878 = vadd.f32 0.0, %v1877
        %v1879 = vpop.f32.mrb[0].mxu0
        %v1880 = vpop.f32.mrb[0].mxu0
        %v1881 = vpop.f32.mrb[0].mxu0
        %1882 = vmatprep.mubr.bf16.mxu0 0
        %1883 = vmatmul.mubr.bf16.gmra.mrb[0].mxu0 %v1809
        %v1884 = vpop.f32.mrb[0].mxu0
        %v1885 = vadd.f32 0.0, %v1884
        %v1886 = vpop.f32.mrb[0].mxu0
        %v1887 = vpop.f32.mrb[0].mxu0
        %v1888 = vpop.f32.mrb[0].mxu0
        %1889 = vmatprep.mubr.bf16.mxu0 0
        %1890 = vmatmul.mubr.bf16.gmra.mrb[0].mxu0 %v1811
        %v1891 = vpop.f32.mrb[0].mxu0
        %v1892 = vadd.f32 0.0, %v1891
        %v1893 = vpop.f32.mrb[0].mxu0
        %v1894 = vpop.f32.mrb[0].mxu0
        %v1895 = vpop.f32.mrb[0].mxu0
        %1896 = vmatprep.mubr.bf16.mxu0 0
        %1897 = vmatmul.mubr.bf16.gmra.mrb[0].mxu0 %v1813
        %v1898 = vpop.f32.mrb[0].mxu0
        %v1899 = vadd.f32 0.0, %v1898
        %v1900 = vpop.f32.mrb[0].mxu0
        %v1901 = vpop.f32.mrb[0].mxu0
        %v1902 = vpop.f32.mrb[0].mxu0
        %1903 = vdwg.mxu0
        %v1904 = vadd.f32 %v1536, %v1850
        %v1905 = vadd.f32 %v1543, %v1857
        %v1906 = vadd.f32 %v1550, %v1864
        %v1907 = vadd.f32 %v1557, %v1871
        %v1908 = vadd.f32 %v1564, %v1878
        %v1909 = vadd.f32 %v1571, %v1885
        %v1910 = vadd.f32 %v1578, %v1892
        %v1911 = vadd.f32 %v1585, %v1899
        %v1912 = vsel %vm805, %v1904, 0.0
        %v1913 = vsel %vm805, %v1905, 0.0
        %v1914 = vadd.f32 %v1912, %v1913
        %v1915 = vsel %vm805, %v1906, 0.0
        %v1916 = vadd.f32 %v1914, %v1915
        %v1917 = vsel %vm805, %v1907, 0.0
        %v1918 = vadd.f32 %v1916, %v1917
        %v1919 = vsel %vm805, %v1908, 0.0
        %v1920 = vadd.f32 %v1918, %v1919
        %v1921 = vsel %vm805, %v1909, 0.0
        %v1922 = vadd.f32 %v1920, %v1921
        %v1923 = vsel %vm805, %v1910, 0.0
        %v1924 = vadd.f32 %v1922, %v1923
        %v1925 = vsel %vm805, %v1911, 0.0
        %v1926 = vadd.f32 %v1924, %v1925
        %v1927 = vrot.slane %v1926, 4
        %v1928 = vadd.f32 %v1926, %v1927
        %v1929 = vrot.slane %v1928, 2
        %v1930 = vadd.f32 %v1928, %v1929
        %v1931 = vrot.slane %v1930, 1
        %v1932 = vadd.f32 %v1930, %v1931
        %v1933 = vmul.f32 %v1904, %v1904
        %v1934 = vmul.f32 %v1905, %v1905
        %v1935 = vmul.f32 %v1906, %v1906
        %v1936 = vmul.f32 %v1907, %v1907
        %v1937 = vmul.f32 %v1908, %v1908
        %v1938 = vmul.f32 %v1909, %v1909
        %v1939 = vmul.f32 %v1910, %v1910
        %v1940 = vmul.f32 %v1911, %v1911
        %v1941 = vsel %vm805, %v1933, 0.0
        %v1942 = vsel %vm805, %v1934, 0.0
        %v1943 = vadd.f32 %v1941, %v1942
        %v1944 = vsel %vm805, %v1935, 0.0
        %v1945 = vadd.f32 %v1943, %v1944
        %v1946 = vsel %vm805, %v1936, 0.0
        %v1947 = vadd.f32 %v1945, %v1946
        %v1948 = vsel %vm805, %v1937, 0.0
        %v1949 = vadd.f32 %v1947, %v1948
        %v1950 = vsel %vm805, %v1938, 0.0
        %v1951 = vadd.f32 %v1949, %v1950
        %v1952 = vsel %vm805, %v1939, 0.0
        %v1953 = vadd.f32 %v1951, %v1952
        %v1954 = vsel %vm805, %v1940, 0.0
        %v1955 = vadd.f32 %v1953, %v1954
        %v1956 = vrot.slane %v1955, 4
        %v1957 = vadd.f32 %v1955, %v1956
        %v1958 = vrot.slane %v1957, 2
        %v1959 = vadd.f32 %v1957, %v1958
        %v1960 = vrot.slane %v1959, 1
        %v1961 = vadd.f32 %v1959, %v1960
        %v1962 = vsel %vm856, %v1932, %v1961
        %v1963 = vld [vmem:[#allocation20] sm:$0xff]
        %v1964 = vld [vmem:[#allocation20 + $0x8] sm:$0xff]
        %v1965 = vld [vmem:[#allocation20 + $0x10] sm:$0xff]
        %v1966 = vld [vmem:[#allocation20 + $0x18] sm:$0xff]
        %v1968 = vsel %vm805, %v1962, 0
        %1970 = vmatprep.subr.mxu0 0.0
        %1971 = vmatpush1.msra.mxu0 %v1963
        %1972 = vmatprep.subr.mxu0 0.0
        %1973 = vmatpush1.msra.mxu0 %v1964
        %1974 = vmatprep.subr.mxu0 0.0
        %1975 = vmatpush1.msra.mxu0 %v1965
        %1976 = vmatprep.subr.mxu0 0.0
        %1977 = vmatpush1.msra.mxu0 %v1966
        %1978 = vmatprep.subr.mxu0 0.0
        %1979 = vmatpush1.msra.mxu0 0.0
        %1980 = vmatprep.subr.mxu0 0.0
        %1981 = vmatpush1.msra.mxu0 0.0
        %1982 = vmatprep.subr.mxu0 0.0
        %1983 = vmatpush1.msra.mxu0 0.0
        %1984 = vmatprep.subr.mxu0 0.0
        %1985 = vmatpush1.msra.mxu0 0.0
        %1986 = vmatprep.subr.mxu0 0.0
        %1987 = vmatpush1.msra.mxu0 0.0
        %1988 = vmatprep.subr.mxu0 0.0
        %1989 = vmatpush1.msra.mxu0 0.0
        %1990 = vmatprep.subr.mxu0 0.0
        %1991 = vmatpush1.msra.mxu0 0.0
        %1992 = vmatprep.subr.mxu0 0.0
        %1993 = vmatpush1.msra.mxu0 0.0
        %1994 = vmatprep.subr.mxu0 0.0
        %1995 = vmatpush1.msra.mxu0 0.0
        %1996 = vmatprep.subr.mxu0 0.0
        %1997 = vmatpush1.msra.mxu0 0.0
        %1998 = vmatprep.subr.mxu0 0.0
        %1999 = vmatpush1.msra.mxu0 0.0
        %2000 = vmatprep.subr.mxu0 0.0
        %2001 = vmatpush1.msra.mxu0 0.0
        %2002 = vmatprep.subr.mxu0 0.0
        %2003 = vmatpush1.msra.mxu0 0.0
        %2004 = vmatprep.subr.mxu0 0.0
        %2005 = vmatpush1.msra.mxu0 0.0
        %2006 = vmatprep.subr.mxu0 0.0
        %2007 = vmatpush1.msra.mxu0 0.0
        %2008 = vmatprep.subr.mxu0 0.0
        %2009 = vmatpush1.msra.mxu0 0.0
        %2010 = vmatprep.subr.mxu0 0.0
        %2011 = vmatpush1.msra.mxu0 0.0
        %2012 = vmatprep.subr.mxu0 0.0
        %2013 = vmatpush1.msra.mxu0 0.0
        %2014 = vmatprep.subr.mxu0 0.0
        %2015 = vmatpush1.msra.mxu0 0.0
        %2016 = vmatprep.subr.mxu0 0.0
        %2017 = vmatpush1.msra.mxu0 0.0
        %2018 = vmatprep.subr.mxu0 0.0
        %2019 = vmatpush1.msra.mxu0 0.0
        %2020 = vmatprep.subr.mxu0 0.0
        %2021 = vmatpush1.msra.mxu0 0.0
        %2022 = vmatprep.subr.mxu0 0.0
        %2023 = vmatpush1.msra.mxu0 0.0
        %2024 = vmatprep.subr.mxu0 0.0
        %2025 = vmatpush1.msra.mxu0 0.0
        %2026 = vmatprep.subr.mxu0 0.0
        %2027 = vmatpush1.msra.mxu0 0.0
        %2028 = vmatprep.subr.mxu0 0.0
        %2029 = vmatpush1.msra.mxu0 0.0
        %2030 = vmatprep.subr.mxu0 0.0
        %2031 = vmatpush1.msra.mxu0 0.0
        %2032 = vmatprep.subr.mxu0 0.0
        %2033 = vmatpush1.msra.mxu0 0.0
        %2034 = vmatprep.mubr.f32.mxu0 0.0
        %2035 = vmatmul.mubr.f32.gmra.mrb[0].mxu0 %v1968
        %v2036 = vpop.f32.mrb[0].mxu0
        %v2037 = vadd.f32 0.0, %v2036
        %v2038 = vpop.f32.mrb[0].mxu0
        %2039 = vdwg.mxu0
        %v2040 = vmul.f32 %v2037, 0.015625
        %v2041 = vmul.f32 %v2040, %v2040
        %v2043 = vrot.slane %v2041, 7
        %v2045 = vsub.f32 %v2040, %v2043
        %v2046 = vadd.f32 %v2045, 1e-05
        %v2047 = vrsqrt.pop %v2046
        %v2049 = vrot.slane %v2047, 1
        %v2052 = vrot.slane %v2040, 7
        %v2054 = vsel %vm856, %v2049, %v2052
        %v2055 = vld [vmem:[#allocation21] sm:$0xff]
        %v2056 = vld [vmem:[#allocation21 + $0x8] sm:$0xff]
        %v2057 = vld [vmem:[#allocation21 + $0x10] sm:$0xff]
        %v2058 = vld [vmem:[#allocation21 + $0x18] sm:$0xff]
        %v2060 = vsel %vm805, %v2054, 0
        %2062 = vmatprep.subr.mxu0 0.0
        %2063 = vmatpush1.msra.mxu0 %v2055
        %2064 = vmatprep.subr.mxu0 0.0
        %2065 = vmatpush1.msra.mxu0 %v2056
        %2066 = vmatprep.subr.mxu0 0.0
        %2067 = vmatpush1.msra.mxu0 %v2057
        %2068 = vmatprep.subr.mxu0 0.0
        %2069 = vmatpush1.msra.mxu0 %v2058
        %2070 = vmatprep.subr.mxu0 0.0
        %2071 = vmatpush1.msra.mxu0 0.0
        %2072 = vmatprep.subr.mxu0 0.0
        %2073 = vmatpush1.msra.mxu0 0.0
        %2074 = vmatprep.subr.mxu0 0.0
        %2075 = vmatpush1.msra.mxu0 0.0
        %2076 = vmatprep.subr.mxu0 0.0
        %2077 = vmatpush1.msra.mxu0 0.0
        %2078 = vmatprep.subr.mxu0 0.0
        %2079 = vmatpush1.msra.mxu0 0.0
        %2080 = vmatprep.subr.mxu0 0.0
        %2081 = vmatpush1.msra.mxu0 0.0
        %2082 = vmatprep.subr.mxu0 0.0
        %2083 = vmatpush1.msra.mxu0 0.0
        %2084 = vmatprep.subr.mxu0 0.0
        %2085 = vmatpush1.msra.mxu0 0.0
        %2086 = vmatprep.subr.mxu0 0.0
        %2087 = vmatpush1.msra.mxu0 0.0
        %2088 = vmatprep.subr.mxu0 0.0
        %2089 = vmatpush1.msra.mxu0 0.0
        %2090 = vmatprep.subr.mxu0 0.0
        %2091 = vmatpush1.msra.mxu0 0.0
        %2092 = vmatprep.subr.mxu0 0.0
        %2093 = vmatpush1.msra.mxu0 0.0
        %2094 = vmatprep.subr.mxu0 0.0
        %2095 = vmatpush1.msra.mxu0 0.0
        %2096 = vmatprep.subr.mxu0 0.0
        %2097 = vmatpush1.msra.mxu0 0.0
        %2098 = vmatprep.subr.mxu0 0.0
        %2099 = vmatpush1.msra.mxu0 0.0
        %2100 = vmatprep.subr.mxu0 0.0
        %2101 = vmatpush1.msra.mxu0 0.0
        %2102 = vmatprep.subr.mxu0 0.0
        %2103 = vmatpush1.msra.mxu0 0.0
        %2104 = vmatprep.subr.mxu0 0.0
        %2105 = vmatpush1.msra.mxu0 0.0
        %2106 = vmatprep.subr.mxu0 0.0
        %2107 = vmatpush1.msra.mxu0 0.0
        %2108 = vmatprep.subr.mxu0 0.0
        %2109 = vmatpush1.msra.mxu0 0.0
        %2110 = vmatprep.subr.mxu0 0.0
        %2111 = vmatpush1.msra.mxu0 0.0
        %2112 = vmatprep.subr.mxu0 0.0
        %2113 = vmatpush1.msra.mxu0 0.0
        %2114 = vmatprep.subr.mxu0 0.0
        %2115 = vmatpush1.msra.mxu0 0.0
        %2116 = vmatprep.subr.mxu0 0.0
        %2117 = vmatpush1.msra.mxu0 0.0
        %2118 = vmatprep.subr.mxu0 0.0
        %2119 = vmatpush1.msra.mxu0 0.0
        %2120 = vmatprep.subr.mxu0 0.0
        %2121 = vmatpush1.msra.mxu0 0.0
        %2122 = vmatprep.subr.mxu0 0.0
        %2123 = vmatpush1.msra.mxu0 0.0
        %2124 = vmatprep.subr.mxu0 0.0
        %2125 = vmatpush1.msra.mxu0 0.0
        %2126 = vmatprep.mubr.f32.mxu0 0.0
        %2127 = vmatmul.mubr.f32.gmra.mrb[0].mxu0 %v2060
        %v2128 = vpop.f32.mrb[0].mxu0
        %v2129 = vadd.f32 0.0, %v2128
        %v2130 = vpop.f32.mrb[0].mxu0
        %2131 = vdwg.mxu0
        %v2132 = vld [vmem:[#allocation14] sm:$0x1]
        %v2133 = vmul.f32 %v2129, %v2132
        %v2134 = vld [vmem:[#allocation15] sm:$0x1]
        %v2136 = vrot.slane %v2133, 7
        %v2138 = vmul.f32 %v2129, %v2136
        %v2141 = vunpack.c.l.s4 1966171168
        %v2142 = vunpack.c.0.s8 %v2141
        %v2143 = vlaneseq
        %v2144 = vshrl.u32 %v2143, 7
        %v2145 = vsub.s32 %v2142, %v2144
        %v2146 = vrot.slane %v2138, %v2145
        %v2147 = vcombine.high %v2146, %v2146
        %v2149 = vunpack.c.l.s4 1966171168
        %v2150 = vunpack.c.0.s8 %v2149
        %v2151 = vlaneseq
        %v2152 = vshrl.u32 %v2151, 7
        %v2153 = vsub.s32 %v2150, %v2152
        %v2154 = vrot.slane %v2147, %v2153
        %v2156 = vsub.f32 %v2134, %v2154
        %v2157 = vlaneseq
        %v2158 = vshrl.u32 %v2157, 7
        %v2159 = vsub.s32 0, %v2158
        %v2160 = vrot.slane %v2133, %v2159
        %v2161 = vmul.f32 %v1904, %v2160
        %v2162 = vmul.f32 %v1905, %v2160
        %v2163 = vmul.f32 %v1906, %v2160
        %v2164 = vmul.f32 %v1907, %v2160
        %v2165 = vmul.f32 %v1908, %v2160
        %v2166 = vmul.f32 %v1909, %v2160
        %v2167 = vmul.f32 %v1910, %v2160
        %v2168 = vmul.f32 %v1911, %v2160
        %v2170 = vlaneseq
        %v2171 = vshrl.u32 %v2170, 7
        %v2172 = vsub.s32 0, %v2171
        %v2173 = vrot.slane %v2156, %v2172
        %v2175 = vadd.f32 %v2161, %v2173
        %v2176 = vadd.f32 %v2162, %v2173
        %v2177 = vadd.f32 %v2163, %v2173
        %v2178 = vadd.f32 %v2164, %v2173
        %v2179 = vadd.f32 %v2165, %v2173
        %v2180 = vadd.f32 %v2166, %v2173
        %v2181 = vadd.f32 %v2167, %v2173
        %v2182 = vadd.f32 %v2168, %v2173
        %v2183 = vmax.f32 %v2175, 0.0
        %v2184 = vmax.f32 %v2176, 0.0
        %v2185 = vmax.f32 %v2177, 0.0
        %v2186 = vmax.f32 %v2178, 0.0
        %v2187 = vmax.f32 %v2179, 0.0
        %v2188 = vmax.f32 %v2180, 0.0
        %v2189 = vmax.f32 %v2181, 0.0
        %v2190 = vmax.f32 %v2182, 0.0
        %v2191 = vpack.c.bf16 %v2184, %v2183
        %v2192 = vpack.c.bf16 %v2186, %v2185
        %v2193 = vpack.c.bf16 %v2188, %v2187
        %v2194 = vpack.c.bf16 %v2190, %v2189
        %v2195 = vld [vmem:[#allocation9] sm:$0xf]
        %v2196 = vld [vmem:[#allocation9 + $0x4] sm:$0xf]
        %v2197 = vld [vmem:[#allocation9 + $0x8] sm:$0xf]
        %v2198 = vld [vmem:[#allocation9 + $0xc] sm:$0xf]
        %v2203 = vunpack.c.l.b16 %v2195
        %v2204 = vunpack.c.l.b16 %v2196
        %v2205 = vunpack.c.l.b16 %v2197
        %v2206 = vunpack.c.l.b16 %v2198
        %v2207 = vpack.c.b16 %v2204, %v2203
        %v2208 = vpack.c.b16 %v2206, %v2205
        %v2212 = vsel %vm805, %v2191, 0
        %v2215 = vsel %vm805, %v2192, 0
        %v2218 = vsel %vm805, %v2193, 0
        %v2221 = vsel %vm805, %v2194, 0
        %2223 = vmatprep.subr.bf16.mxu0 0
        %2224 = vmatpush1.bf16.msra.mxu0 %v2207
        %2225 = vmatprep.subr.bf16.mxu0 0
        %2226 = vmatpush1.bf16.msra.mxu0 %v2208
        %2227 = vmatprep.subr.bf16.mxu0 0
        %2228 = vmatpush1.bf16.msra.mxu0 0
        %2229 = vmatprep.subr.bf16.mxu0 0
        %2230 = vmatpush1.bf16.msra.mxu0 0
        %2231 = vmatprep.subr.bf16.mxu0 0
        %2232 = vmatpush1.bf16.msra.mxu0 0
        %2233 = vmatprep.subr.bf16.mxu0 0
        %2234 = vmatpush1.bf16.msra.mxu0 0
        %2235 = vmatprep.subr.bf16.mxu0 0
        %2236 = vmatpush1.bf16.msra.mxu0 0
        %2237 = vmatprep.subr.bf16.mxu0 0
        %2238 = vmatpush1.bf16.msra.mxu0 0
        %2239 = vmatprep.subr.bf16.mxu0 0
        %2240 = vmatpush1.bf16.msra.mxu0 0
        %2241 = vmatprep.subr.bf16.mxu0 0
        %2242 = vmatpush1.bf16.msra.mxu0 0
        %2243 = vmatprep.subr.bf16.mxu0 0
        %2244 = vmatpush1.bf16.msra.mxu0 0
        %2245 = vmatprep.subr.bf16.mxu0 0
        %2246 = vmatpush1.bf16.msra.mxu0 0
        %2247 = vmatprep.subr.bf16.mxu0 0
        %2248 = vmatpush1.bf16.msra.mxu0 0
        %2249 = vmatprep.subr.bf16.mxu0 0
        %2250 = vmatpush1.bf16.msra.mxu0 0
        %2251 = vmatprep.subr.bf16.mxu0 0
        %2252 = vmatpush1.bf16.msra.mxu0 0
        %2253 = vmatprep.subr.bf16.mxu0 0
        %2254 = vmatpush1.bf16.msra.mxu0 0
        %2255 = vmatprep.mubr.bf16.mxu0 0
        %2256 = vmatmul.mubr.bf16.gmra.mrb[0].mxu0 %v2212
        %v2257 = vpop.f32.mrb[0].mxu0
        %v2258 = vadd.f32 0.0, %v2257
        %v2259 = vpop.f32.mrb[0].mxu0
        %v2260 = vpop.f32.mrb[0].mxu0
        %v2261 = vadd.f32 0.0, %v2260
        %v2262 = vpop.f32.mrb[0].mxu0
        %2263 = vmatprep.mubr.bf16.mxu0 0
        %2264 = vmatmul.mubr.bf16.gmra.mrb[0].mxu0 %v2215
        %v2265 = vpop.f32.mrb[0].mxu0
        %v2266 = vadd.f32 0.0, %v2265
        %v2267 = vpop.f32.mrb[0].mxu0
        %v2268 = vpop.f32.mrb[0].mxu0
        %v2269 = vadd.f32 0.0, %v2268
        %v2270 = vpop.f32.mrb[0].mxu0
        %2271 = vmatprep.mubr.bf16.mxu0 0
        %2272 = vmatmul.mubr.bf16.gmra.mrb[0].mxu0 %v2218
        %v2273 = vpop.f32.mrb[0].mxu0
        %v2274 = vadd.f32 0.0, %v2273
        %v2275 = vpop.f32.mrb[0].mxu0
        %v2276 = vpop.f32.mrb[0].mxu0
        %v2277 = vadd.f32 0.0, %v2276
        %v2278 = vpop.f32.mrb[0].mxu0
        %2279 = vmatprep.mubr.bf16.mxu0 0
        %2280 = vmatmul.mubr.bf16.gmra.mrb[0].mxu0 %v2221
        %v2281 = vpop.f32.mrb[0].mxu0
        %v2282 = vadd.f32 0.0, %v2281
        %v2283 = vpop.f32.mrb[0].mxu0
        %v2284 = vpop.f32.mrb[0].mxu0
        %v2285 = vadd.f32 0.0, %v2284
        %v2286 = vpop.f32.mrb[0].mxu0
        %2287 = vdwg.mxu0
        %v2288 = vadd.f32 %v2258, %v2261
        %v2289 = vadd.f32 %v2288, %v2266
        %v2290 = vadd.f32 %v2289, %v2269
        %v2291 = vadd.f32 %v2290, %v2274
        %v2292 = vadd.f32 %v2291, %v2277
        %v2293 = vadd.f32 %v2292, %v2282
        %v2294 = vadd.f32 %v2293, %v2285
        %v2295 = vrot.slane %v2294, 4
        %v2296 = vadd.f32 %v2294, %v2295
        %v2297 = vrot.slane %v2296, 2
        %v2298 = vadd.f32 %v2296, %v2297
        %v2299 = vrot.slane %v2298, 1
        %v2300 = vadd.f32 %v2298, %v2299
        %v2301 = vmul.f32 %v2258, %v2258
        %v2302 = vmul.f32 %v2261, %v2261
        %v2303 = vmul.f32 %v2266, %v2266
        %v2304 = vmul.f32 %v2269, %v2269
        %v2305 = vmul.f32 %v2274, %v2274
        %v2306 = vmul.f32 %v2277, %v2277
        %v2307 = vmul.f32 %v2282, %v2282
        %v2308 = vmul.f32 %v2285, %v2285
        %v2309 = vadd.f32 %v2301, %v2302
        %v2310 = vadd.f32 %v2309, %v2303
        %v2311 = vadd.f32 %v2310, %v2304
        %v2312 = vadd.f32 %v2311, %v2305
        %v2313 = vadd.f32 %v2312, %v2306
        %v2314 = vadd.f32 %v2313, %v2307
        %v2315 = vadd.f32 %v2314, %v2308
        %v2316 = vrot.slane %v2315, 4
        %v2317 = vadd.f32 %v2315, %v2316
        %v2318 = vrot.slane %v2317, 2
        %v2319 = vadd.f32 %v2317, %v2318
        %v2320 = vrot.slane %v2319, 1
        %v2321 = vadd.f32 %v2319, %v2320
        %v2322 = vsel %vm856, %v2300, %v2321
        %v2323 = vld [vmem:[#allocation23] sm:$0xff]
        %v2324 = vld [vmem:[#allocation23 + $0x8] sm:$0xff]
        %v2325 = vld [vmem:[#allocation23 + $0x10] sm:$0xff]
        %v2326 = vld [vmem:[#allocation23 + $0x18] sm:$0xff]
        %v2327 = vld [vmem:[#allocation23 + $0x20] sm:$0xff]
        %v2328 = vld [vmem:[#allocation23 + $0x28] sm:$0xff]
        %v2329 = vld [vmem:[#allocation23 + $0x30] sm:$0xff]
        %v2330 = vld [vmem:[#allocation23 + $0x38] sm:$0xff]
        %v2331 = vld [vmem:[#allocation23 + $0x40] sm:$0xff]
        %v2332 = vld [vmem:[#allocation23 + $0x48] sm:$0xff]
        %v2333 = vld [vmem:[#allocation23 + $0x50] sm:$0xff]
        %v2334 = vld [vmem:[#allocation23 + $0x58] sm:$0xff]
        %v2335 = vld [vmem:[#allocation23 + $0x60] sm:$0xff]
        %v2336 = vld [vmem:[#allocation23 + $0x68] sm:$0xff]
        %v2337 = vld [vmem:[#allocation23 + $0x70] sm:$0xff]
        %v2338 = vld [vmem:[#allocation23 + $0x78] sm:$0xff]
        %2339 = vmatprep.subr.mxu0 0.0
        %2340 = vmatpush1.msra.mxu0 %v2323
        %2341 = vmatprep.subr.mxu0 0.0
        %2342 = vmatpush1.msra.mxu0 %v2324
        %2343 = vmatprep.subr.mxu0 0.0
        %2344 = vmatpush1.msra.mxu0 %v2325
        %2345 = vmatprep.subr.mxu0 0.0
        %2346 = vmatpush1.msra.mxu0 %v2326
        %2347 = vmatprep.subr.mxu0 0.0
        %2348 = vmatpush1.msra.mxu0 %v2327
        %2349 = vmatprep.subr.mxu0 0.0
        %2350 = vmatpush1.msra.mxu0 %v2328
        %2351 = vmatprep.subr.mxu0 0.0
        %2352 = vmatpush1.msra.mxu0 %v2329
        %2353 = vmatprep.subr.mxu0 0.0
        %2354 = vmatpush1.msra.mxu0 %v2330
        %2355 = vmatprep.subr.mxu0 0.0
        %2356 = vmatpush1.msra.mxu0 %v2331
        %2357 = vmatprep.subr.mxu0 0.0
        %2358 = vmatpush1.msra.mxu0 %v2332
        %2359 = vmatprep.subr.mxu0 0.0
        %2360 = vmatpush1.msra.mxu0 %v2333
        %2361 = vmatprep.subr.mxu0 0.0
        %2362 = vmatpush1.msra.mxu0 %v2334
        %2363 = vmatprep.subr.mxu0 0.0
        %2364 = vmatpush1.msra.mxu0 %v2335
        %2365 = vmatprep.subr.mxu0 0.0
        %2366 = vmatpush1.msra.mxu0 %v2336
        %2367 = vmatprep.subr.mxu0 0.0
        %2368 = vmatpush1.msra.mxu0 %v2337
        %2369 = vmatprep.subr.mxu0 0.0
        %2370 = vmatpush1.msra.mxu0 %v2338
        %2371 = vmatprep.subr.mxu0 0.0
        %2372 = vmatpush1.msra.mxu0 0.0
        %2373 = vmatprep.subr.mxu0 0.0
        %2374 = vmatpush1.msra.mxu0 0.0
        %2375 = vmatprep.subr.mxu0 0.0
        %2376 = vmatpush1.msra.mxu0 0.0
        %2377 = vmatprep.subr.mxu0 0.0
        %2378 = vmatpush1.msra.mxu0 0.0
        %2379 = vmatprep.subr.mxu0 0.0
        %2380 = vmatpush1.msra.mxu0 0.0
        %2381 = vmatprep.subr.mxu0 0.0
        %2382 = vmatpush1.msra.mxu0 0.0
        %2383 = vmatprep.subr.mxu0 0.0
        %2384 = vmatpush1.msra.mxu0 0.0
        %2385 = vmatprep.subr.mxu0 0.0
        %2386 = vmatpush1.msra.mxu0 0.0
        %2387 = vmatprep.subr.mxu0 0.0
        %2388 = vmatpush1.msra.mxu0 0.0
        %2389 = vmatprep.subr.mxu0 0.0
        %2390 = vmatpush1.msra.mxu0 0.0
        %2391 = vmatprep.subr.mxu0 0.0
        %2392 = vmatpush1.msra.mxu0 0.0
        %2393 = vmatprep.subr.mxu0 0.0
        %2394 = vmatpush1.msra.mxu0 0.0
        %2395 = vmatprep.subr.mxu0 0.0
        %2396 = vmatpush1.msra.mxu0 0.0
        %2397 = vmatprep.subr.mxu0 0.0
        %2398 = vmatpush1.msra.mxu0 0.0
        %2399 = vmatprep.subr.mxu0 0.0
        %2400 = vmatpush1.msra.mxu0 0.0
        %2401 = vmatprep.subr.mxu0 0.0
        %2402 = vmatpush1.msra.mxu0 0.0
        %2403 = vmatprep.mubr.f32.mxu0 0.0
        %2404 = vmatmul.mubr.f32.gmra.mrb[0].mxu0 %v2322
        %v2405 = vpop.f32.mrb[0].mxu0
        %v2406 = vadd.f32 0.0, %v2405
        %v2407 = vpop.f32.mrb[0].mxu0
        %2408 = vdwg.mxu0
        %v2409 = vmul.f32 %v2406, 0.00390625
        %v2410 = vmul.f32 %v2409, %v2409
        %v2412 = vrot.slane %v2410, 7
        %v2414 = vsub.f32 %v2409, %v2412
        %v2415 = vadd.f32 %v2414, 1e-05
        %v2416 = vrsqrt.pop %v2415
        %v2418 = vrot.slane %v2416, 1
        %v2421 = vrot.slane %v2409, 7
        %v2423 = vsel %vm856, %v2418, %v2421
        %v2424 = vld [vmem:[#allocation24] sm:$0xff]
        %v2425 = vld [vmem:[#allocation24 + $0x8] sm:$0xff]
        %v2426 = vld [vmem:[#allocation24 + $0x10] sm:$0xff]
        %v2427 = vld [vmem:[#allocation24 + $0x18] sm:$0xff]
        %v2429 = vsel %vm805, %v2423, 0
        %2431 = vmatprep.subr.mxu0 0.0
        %2432 = vmatpush1.msra.mxu0 %v2424
        %2433 = vmatprep.subr.mxu0 0.0
        %2434 = vmatpush1.msra.mxu0 %v2425
        %2435 = vmatprep.subr.mxu0 0.0
        %2436 = vmatpush1.msra.mxu0 %v2426
        %2437 = vmatprep.subr.mxu0 0.0
        %2438 = vmatpush1.msra.mxu0 %v2427
        %2439 = vmatprep.subr.mxu0 0.0
        %2440 = vmatpush1.msra.mxu0 0.0
        %2441 = vmatprep.subr.mxu0 0.0
        %2442 = vmatpush1.msra.mxu0 0.0
        %2443 = vmatprep.subr.mxu0 0.0
        %2444 = vmatpush1.msra.mxu0 0.0
        %2445 = vmatprep.subr.mxu0 0.0
        %2446 = vmatpush1.msra.mxu0 0.0
        %2447 = vmatprep.subr.mxu0 0.0
        %2448 = vmatpush1.msra.mxu0 0.0
        %2449 = vmatprep.subr.mxu0 0.0
        %2450 = vmatpush1.msra.mxu0 0.0
        %2451 = vmatprep.subr.mxu0 0.0
        %2452 = vmatpush1.msra.mxu0 0.0
        %2453 = vmatprep.subr.mxu0 0.0
        %2454 = vmatpush1.msra.mxu0 0.0
        %2455 = vmatprep.subr.mxu0 0.0
        %2456 = vmatpush1.msra.mxu0 0.0
        %2457 = vmatprep.subr.mxu0 0.0
        %2458 = vmatpush1.msra.mxu0 0.0
        %2459 = vmatprep.subr.mxu0 0.0
        %2460 = vmatpush1.msra.mxu0 0.0
        %2461 = vmatprep.subr.mxu0 0.0
        %2462 = vmatpush1.msra.mxu0 0.0
        %2463 = vmatprep.subr.mxu0 0.0
        %2464 = vmatpush1.msra.mxu0 0.0
        %2465 = vmatprep.subr.mxu0 0.0
        %2466 = vmatpush1.msra.mxu0 0.0
        %2467 = vmatprep.subr.mxu0 0.0
        %2468 = vmatpush1.msra.mxu0 0.0
        %2469 = vmatprep.subr.mxu0 0.0
        %2470 = vmatpush1.msra.mxu0 0.0
        %2471 = vmatprep.subr.mxu0 0.0
        %2472 = vmatpush1.msra.mxu0 0.0
        %2473 = vmatprep.subr.mxu0 0.0
        %2474 = vmatpush1.msra.mxu0 0.0
        %2475 = vmatprep.subr.mxu0 0.0
        %2476 = vmatpush1.msra.mxu0 0.0
        %2477 = vmatprep.subr.mxu0 0.0
        %2478 = vmatpush1.msra.mxu0 0.0
        %2479 = vmatprep.subr.mxu0 0.0
        %2480 = vmatpush1.msra.mxu0 0.0
        %2481 = vmatprep.subr.mxu0 0.0
        %2482 = vmatpush1.msra.mxu0 0.0
        %2483 = vmatprep.subr.mxu0 0.0
        %2484 = vmatpush1.msra.mxu0 0.0
        %2485 = vmatprep.subr.mxu0 0.0
        %2486 = vmatpush1.msra.mxu0 0.0
        %2487 = vmatprep.subr.mxu0 0.0
        %2488 = vmatpush1.msra.mxu0 0.0
        %2489 = vmatprep.subr.mxu0 0.0
        %2490 = vmatpush1.msra.mxu0 0.0
        %2491 = vmatprep.subr.mxu0 0.0
        %2492 = vmatpush1.msra.mxu0 0.0
        %2493 = vmatprep.subr.mxu0 0.0
        %2494 = vmatpush1.msra.mxu0 0.0
        %2495 = vmatprep.mubr.f32.mxu0 0.0
        %2496 = vmatmul.mubr.f32.gmra.mrb[0].mxu0 %v2429
        %v2497 = vpop.f32.mrb[0].mxu0
        %v2498 = vadd.f32 0.0, %v2497
        %v2499 = vpop.f32.mrb[0].mxu0
        %2500 = vdwg.mxu0
        %v2501 = vld [vmem:[#allocation17] sm:$0x1]
        %v2502 = vmul.f32 %v2498, %v2501
        %v2503 = vld [vmem:[#allocation18] sm:$0x1]
        %v2505 = vrot.slane %v2502, 7
        %v2507 = vmul.f32 %v2498, %v2505
        %v2510 = vunpack.c.l.s4 1966171168
        %v2511 = vunpack.c.0.s8 %v2510
        %v2512 = vlaneseq
        %v2513 = vshrl.u32 %v2512, 7
        %v2514 = vsub.s32 %v2511, %v2513
        %v2515 = vrot.slane %v2507, %v2514
        %v2516 = vcombine.high %v2515, %v2515
        %v2518 = vunpack.c.l.s4 1966171168
        %v2519 = vunpack.c.0.s8 %v2518
        %v2520 = vlaneseq
        %v2521 = vshrl.u32 %v2520, 7
        %v2522 = vsub.s32 %v2519, %v2521
        %v2523 = vrot.slane %v2516, %v2522
        %v2525 = vsub.f32 %v2503, %v2523
        %v2526 = vlaneseq
        %v2527 = vshrl.u32 %v2526, 7
        %v2528 = vsub.s32 0, %v2527
        %v2529 = vrot.slane %v2502, %v2528
        %v2530 = vmul.f32 %v2258, %v2529
        %v2531 = vmul.f32 %v2261, %v2529
        %v2532 = vmul.f32 %v2266, %v2529
        %v2533 = vmul.f32 %v2269, %v2529
        %v2534 = vmul.f32 %v2274, %v2529
        %v2535 = vmul.f32 %v2277, %v2529
        %v2536 = vmul.f32 %v2282, %v2529
        %v2537 = vmul.f32 %v2285, %v2529
        %v2539 = vlaneseq
        %v2540 = vshrl.u32 %v2539, 7
        %v2541 = vsub.s32 0, %v2540
        %v2542 = vrot.slane %v2525, %v2541
        %v2544 = vadd.f32 %v2530, %v2542
        %v2545 = vadd.f32 %v2531, %v2542
        %v2546 = vadd.f32 %v2532, %v2542
        %v2547 = vadd.f32 %v2533, %v2542
        %v2548 = vadd.f32 %v2534, %v2542
        %v2549 = vadd.f32 %v2535, %v2542
        %v2550 = vadd.f32 %v2536, %v2542
        %v2551 = vadd.f32 %v2537, %v2542
        %v2552 = vadd.f32 %v2544, %v664
        %v2553 = vadd.f32 %v2545, %v665
        %v2554 = vadd.f32 %v2546, %v666
        %v2555 = vadd.f32 %v2547, %v667
        %v2556 = vadd.f32 %v2548, %v668
        %v2557 = vadd.f32 %v2549, %v669
        %v2558 = vadd.f32 %v2550, %v670
        %v2559 = vadd.f32 %v2551, %v671
        %v2560 = vmax.f32 %v2552, 0.0
        %v2561 = vmax.f32 %v2553, 0.0
        %v2562 = vmax.f32 %v2554, 0.0
        %v2563 = vmax.f32 %v2555, 0.0
        %v2564 = vmax.f32 %v2556, 0.0
        %v2565 = vmax.f32 %v2557, 0.0
        %v2566 = vmax.f32 %v2558, 0.0
        %v2567 = vmax.f32 %v2559, 0.0
        %2568 = vst [vmem:[%s662] sm:$0xff] %v2560
        %2569 = vst [vmem:[%s662 + $0x8] sm:$0xff] %v2561
        %2570 = vst [vmem:[%s662 + $0x10] sm:$0xff] %v2562
        %2571 = vst [vmem:[%s662 + $0x18] sm:$0xff] %v2563
        %2572 = vst [vmem:[%s662 + $0x20] sm:$0xff] %v2564
        %2573 = vst [vmem:[%s662 + $0x28] sm:$0xff] %v2565
        %2574 = vst [vmem:[%s662 + $0x30] sm:$0xff] %v2566
        %2575 = vst [vmem:[%s662 + $0x38] sm:$0xff] %v2567
        %s2576 = sand.u32 %s345, 1
        %s2577 = scalar_lea.sflag [#allocation5], %s2576
        %s2578 = sand.u32 %s345, 1
        %s2579 = smul.addr %s2578, 64
        %s2580 = scalar_lea.vmem [#allocation26], %s2579
        // Predicated region
        $region133: #{tpu_custom_call.1} parent=75 // pred_check
          %p2581 = pneg %p355
        $region134: #{tpu_custom_call.1} parent=75 // pred_check_branch
          %2583 = sbr.rel (%p2581) target = $region136
        $region135: #{tpu_custom_call.1} parent=75 // pred_region
          %s2585 = ssub.s32 1024, 1024
          %2586 = vsyncadd %s2577, %s2585
          %s2587 = smul.addr %s38, 8
          %s2588 = smul.addr %s2587, 128
          %s2589 = scalar_lea.hbm %s14, %s2588
          %s2590 = sshll.u32 %s2580, 4
          %s2591 = int_to_ptr.vmem [resolvable:$true] %s2590
          %2596 = dma.vmem_to_hbm [thread:$0]  %s2591, 1024, %s2589, %s2577, 128, 128, 8
        $region136: #{tpu_custom_call.1} parent=75 // pred_fallthru
          _
      $region76: #{tpu_custom_call.1} parent=5 // pred_fallthru
        _
      %p2597 = scmp.le.s32.totalorder 2, %s33
      // Predicated region
      $region137: #{tpu_custom_call.1} parent=5 // pred_check
        %p2598 = pneg %p2597
      $region138: #{tpu_custom_call.1} parent=5 // pred_check_branch
        %2600 = sbr.rel (%p2598) target = $region140
      $region139: #{tpu_custom_call.1} parent=5 // pred_region
        %s2601 = ssub.s32 %s33, 2
        // Predicated region
        $region141: #{tpu_custom_call.1} parent=139 // pred_check
          %p2602 = pneg %p361
        $region142: #{tpu_custom_call.1} parent=139 // pred_check_branch
          %2604 = sbr.rel (%p2602) target = $region144
        $region143: #{tpu_custom_call.1} parent=139 // pred_region
          %s2605 = sand.u32 %s346, 1
          %s2606 = scalar_lea.sflag [#allocation5], %s2605
          %s2607 = sand.u32 %s346, 1
          %s2608 = smul.addr %s2607, 64
          %s2609 = scalar_lea.vmem [#allocation26], %s2608
          %2610 = dma.done %s2606, 1024
        $region144: #{tpu_custom_call.1} parent=139 // pred_fallthru
          _
      $region140: #{tpu_custom_call.1} parent=5 // pred_fallthru
        _
    $region6: #{tpu_custom_call.1} parent=1 // loop_footer
      %s37 = sadd.s32 1, %s33
    $region7: #{tpu_custom_call.1} parent=1 // loop_footer_branch
      %32 = sbr.rel target = $region3
    $region8: #{tpu_custom_call.1} parent=1 // loop_exit
      _
    %2611 = vsyncpa [#allocation4], 1
    %s2612 = scalar_lea.sflag [#allocation4], 1
    %2613 = vsyncpa %s2612, 1
    %2614 = vsyncpa [#allocation7], 1
    %2615 = vsyncpa [#allocation10], 1
    %2616 = vsyncpa [#allocation13], 1
    %2617 = vsyncpa [#allocation16], 1
    %2618 = vsyncpa [#allocation19], 1
    %2619 = vsyncpa [#allocation22], 1
    %2620 = vsyncpa [#allocation25], 1
    %2621 = vsyncpa [#allocation5], 1
    %s2622 = scalar_lea.sflag [#allocation5], 1
    %2623 = vsyncpa %s2622, 1

</llo_original>
